<compile_context>
chip_gen: v6e
topology: v6e:2x2x1
jax: 0.10.0
libtpu: 0.0.40
codegen_flags: <defaults>
</compile_context>

<pallas_src>
import functools

import jax
import jax.numpy as jnp
import numpy as np
from jax.experimental import pallas as pl
from jax.experimental.pallas import tpu as pltpu


def _round_up(x, m):
    return ((x + m - 1) // m) * m


def _dot(a, b):
    # Default TPU matmul precision (bf16 passes, f32 accumulation). For bit-level
    # parity with PyTorch fp32 matmuls use precision=jax.lax.Precision.HIGHEST.
    return jnp.dot(a, b, preferred_element_type=jnp.float32)


# ----------------------------------------------------------------------------
# Packed-slab geometry (all offsets sublane(8)-aligned, all widths lane(128)-aligned)
# ----------------------------------------------------------------------------
def make_geometry(n_states, n_actions, hidden_dim, gru_dim, time_step_features):
    P = _round_up(max(hidden_dim, gru_dim), 128)     # padded feature width / gate lane stride
    SA = n_states + n_actions
    SA_r = _round_up(SA, 8)
    IN_r = max(_round_up(time_step_features, 8), P)  # rows of the GRU input-projection block
    off_w1 = 0
    off_w2x = off_w1 + SA_r
    off_w2g = off_w2x + P
    off_fcw = off_w2g + P
    off_bias = off_fcw + P
    return dict(P=P, SA=SA, SA_r=SA_r, IN_r=IN_r,
                off_w1=off_w1, off_w2x=off_w2x, off_w2g=off_w2g,
                off_fcw=off_fcw, off_bias=off_bias,
                dense_rows=off_bias + 8, gru_rows=IN_r + P + 8)


# ----------------------------------------------------------------------------
# One-time parameter preparation: pack everything into two tile-padded slabs.
# ----------------------------------------------------------------------------
def prepare_params(params, geom, *, hidden_dim, gru_dim, gru_layers):
    g = geom
    P, H, HD = g["P"], gru_dim, hidden_dim

    # Dense slab: w1_T | w2x_T | w2g_T | fcw_T | bias rows (b1,b2,fcb,w3,b3)
    dense = np.zeros((g["dense_rows"], P), np.float32)
    dense[g["off_w1"]:g["off_w1"] + g["SA"], :HD] = np.asarray(params["w1"]).T
    dense[g["off_w2x"]:g["off_w2x"] + HD, :HD] = np.asarray(params["w2x"]).T
    dense[g["off_w2g"]:g["off_w2g"] + H, :HD] = np.asarray(params["w2g"]).T
    dense[g["off_fcw"]:g["off_fcw"] + H, :H] = np.asarray(params["fcw"]).T
    ob = g["off_bias"]
    dense[ob + 0, :HD] = np.asarray(params["b1"])[0]
    dense[ob + 1, :HD] = np.asarray(params["b2"])[0]
    dense[ob + 2, :H] = np.asarray(params["fcb"])[0]
    dense[ob + 3, :HD] = np.asarray(params["w3"])[0]
    dense[ob + 4, 0] = float(np.asarray(params["b3"])[0, 0])

    # GRU slab (one row-block per layer): Wih_T | Whh_T | [b_ih_folded; b_hh]
    # Each gate (r, z, n) is zero-padded to a 128-lane stride so the kernel
    # slices gates at vreg boundaries. The r/z parts of b_hh are folded into
    # b_ih (legal: only the n gate keeps b_hn inside r * (...)).
    gru = np.zeros((gru_layers, g["gru_rows"], 3 * P), np.float32)
    for l in range(gru_layers):
        wih, whh, bih, bhh = (np.asarray(a) for a in params[f"gru{l}"])
        in_dim = wih.shape[1]
        for gate in range(3):
            lanes = slice(gate * P, gate * P + H)
            rows = slice(gate * H, (gate + 1) * H)
            gru[l, 0:in_dim, lanes] = wih[rows, :].T
            gru[l, g["IN_r"]:g["IN_r"] + H, lanes] = whh[rows, :].T
            fold = bih[0, rows] + (bhh[0, rows] if gate < 2 else 0.0)
            gru[l, g["IN_r"] + P, lanes] = fold
            gru[l, g["IN_r"] + P + 1, lanes] = bhh[0, rows]
    return jnp.asarray(dense), jnp.asarray(gru)


# ----------------------------------------------------------------------------
# Pallas kernel
# ----------------------------------------------------------------------------
def critic_kernel(sa_ref, tseq_ref, gru_ref, dense_ref, out_ref,
                  xp_scratch, seq_scratch, *, gru_layers, P, IN_r,
                  off_w1, off_w2x, off_w2g, off_fcw, off_bias):
    B_pad, SA_r = sa_ref.shape
    TB = tseq_ref.shape[0]
    T = TB // B_pad

    # One aligned (8, P) load carrying all small row-vectors.
    bias = dense_ref[pl.ds(off_bias, 8), :]
    b1, b2, fcb, w3 = bias[0:1, :], bias[1:2, :], bias[2:3, :], bias[3:4, :]
    b3 = bias[4:5, 0:1]

    # linear1 + ReLU (padded lanes stay exactly zero: zero weights + zero bias)
    x = jnp.maximum(_dot(sa_ref[...], dense_ref[pl.ds(off_w1, SA_r), :]) + b1, 0.0)

    # GRU stack. Gate slices sit on 128-lane (vreg) boundaries; per-timestep
    # slices of xp_scratch / seq_scratch sit on 8-sublane boundaries, so the
    # sequential recurrence does plain vld/vst only.
    h = jnp.zeros((B_pad, P), jnp.float32)
    for l in range(gru_layers):
        in_rows = IN_r if l == 0 else P
        layer_in = tseq_ref[...] if l == 0 else seq_scratch[...]
        wih = gru_ref[l, pl.ds(0, in_rows), :]
        whh = gru_ref[l, pl.ds(IN_r, P), :]
        gbias = gru_ref[l, pl.ds(IN_r + P, 8), :]
        bih_fold = gbias[0:1, :]                                   # b_ih + (b_hr, b_hz, 0)
        bhh_n = jnp.broadcast_to(gbias[1:2, 2 * P:3 * P], (B_pad, P))  # hoisted broadcast

        # Time-parallel input projection for all T steps, kept in VMEM scratch.
        xp_scratch[...] = _dot(layer_in, wih) + bih_fold

        h = jnp.zeros((B_pad, P), jnp.float32)
        last = l == gru_layers - 1
        for t in range(T):
            xp = xp_scratch[pl.ds(t * B_pad, B_pad), :]            # aligned (8, 3P) load
            hp = _dot(h, whh)                                       # only op on critical path
            r = jax.nn.sigmoid(xp[:, 0:P] + hp[:, 0:P])
            z = jax.nn.sigmoid(xp[:, P:2 * P] + hp[:, P:2 * P])
            n = jnp.tanh(xp[:, 2 * P:3 * P] + r * (hp[:, 2 * P:3 * P] + bhh_n))
            h = (1.0 - z) * n + z * h
            if not last:
                seq_scratch[pl.ds(t * B_pad, B_pad), :] = h        # aligned (8, P) store

    # GRUNetwork.fc applied to out[:, -1, :]
    gru_out = _dot(h, dense_ref[pl.ds(off_fcw, P), :]) + fcb

    # linear2 on concat([x, gru_out]) == split matmul, then ReLU
    x2 = jnp.maximum(
        _dot(x, dense_ref[pl.ds(off_w2x, P), :])
        + _dot(gru_out, dense_ref[pl.ds(off_w2g, P), :]) + b2, 0.0)

    # linear3 (N = 1): VPU multiply + lane reduction instead of a degenerate MXU matmul.
    out = jnp.sum(x2 * w3, axis=-1, keepdims=True) + b3
    out_ref[...] = out.astype(out_ref.dtype)


# ----------------------------------------------------------------------------
# Jitted per-call wrapper (only activation glue + one pallas_call)
# ----------------------------------------------------------------------------
def make_critic_forward(geom, *, gru_layers):
    g = geom
    kernel = functools.partial(
        critic_kernel, gru_layers=gru_layers, P=g["P"], IN_r=g["IN_r"],
        off_w1=g["off_w1"], off_w2x=g["off_w2x"], off_w2g=g["off_w2g"],
        off_fcw=g["off_fcw"], off_bias=g["off_bias"])
    vspec = pl.BlockSpec(memory_space=pltpu.MemorySpace.VMEM)

    @jax.jit
    def forward(state, action, time_seq, dense_slab, gru_slab):
        B, T, F = time_seq.shape
        B_pad = _round_up(B, 8)
        P, IN_r, SA, SA_r = g["P"], g["IN_r"], g["SA"], g["SA_r"]

        sa = jnp.concatenate([state, action], axis=1).astype(jnp.float32)
        sa_pad = jnp.zeros((B_pad, SA_r), jnp.float32).at[:B, :SA].set(sa)

        # Time-major, batch padded to the sublane tile, features padded to the
        # lane-aligned GRU input width.
        tseq = jnp.transpose(time_seq.astype(jnp.float32), (1, 0, 2))   # (T, B, F)
        tseq_pad = jnp.zeros((T, B_pad, IN_r), jnp.float32).at[:, :B, :F].set(tseq)
        tseq_pad = tseq_pad.reshape(T * B_pad, IN_r)

        out = pl.pallas_call(
            kernel,
            out_shape=jax.ShapeDtypeStruct((B_pad, 1), jnp.float32),
            in_specs=[vspec] * 4,
            out_specs=vspec,
            scratch_shapes=[pltpu.VMEM((T * B_pad, 3 * P), jnp.float32),   # x_proj
                            pltpu.VMEM((T * B_pad, P), jnp.float32)],      # inter-layer seq
            # Explicit VMEM guard (residency here is < 2 MiB; keep the limit
            # modest so the same config is safe on v7x's 64 MiB VMEM).
            compiler_params=pltpu.CompilerParams(vmem_limit_bytes=32 * 1024 * 1024),
            # TODO(synk): for large batch on v7x add a leading batch grid axis
            # with dimension_semantics=("parallel",) to use both TensorCores.
        )(sa_pad, tseq_pad, gru_slab, dense_slab)
        return out[:B, :]

    return forward


# ----------------------------------------------------------------------------
# Deterministic parameter construction (PyTorch layout) + pure-JAX reference
# ----------------------------------------------------------------------------
def make_params(key, n_states, n_actions, hidden_dim, gru_dim, gru_layers,
                time_step_features, init_w=0.003):
    def uni(k, shape, bound):
        return jax.random.uniform(k, shape, jnp.float32, -bound, bound)

    keys = iter(jax.random.split(key, 64))
    p = {}

    k1 = 1.0 / np.sqrt(n_states + n_actions)
    p["w1"] = uni(next(keys), (hidden_dim, n_states + n_actions), k1)
    p["b1"] = uni(next(keys), (1, hidden_dim), k1)

    k2 = 1.0 / np.sqrt(hidden_dim + gru_dim)
    w2 = uni(next(keys), (hidden_dim, hidden_dim + gru_dim), k2)
    p["w2x"] = w2[:, :hidden_dim]
    p["w2g"] = w2[:, hidden_dim:]
    p["b2"] = uni(next(keys), (1, hidden_dim), k2)

    p["w3"] = uni(next(keys), (1, hidden_dim), init_w)
    p["b3"] = uni(next(keys), (1, 1), init_w)

    kg = 1.0 / np.sqrt(gru_dim)
    for l in range(gru_layers):
        in_dim = time_step_features if l == 0 else gru_dim
        wih = uni(next(keys), (3 * gru_dim, in_dim), kg)
        whh = uni(next(keys), (3 * gru_dim, gru_dim), kg)
        bih = uni(next(keys), (1, 3 * gru_dim), kg)
        bhh = uni(next(keys), (1, 3 * gru_dim), kg)
        p[f"gru{l}"] = (wih, whh, bih, bhh)

    kf = 1.0 / np.sqrt(gru_dim)
    p["fcw"] = uni(next(keys), (gru_dim, gru_dim), kf)
    p["fcb"] = uni(next(keys), (1, gru_dim), kf)
    return p


def critic_reference(state, action, time_seq, params, *, gru_layers, gru_dim):
    """Pure-JAX reference mirroring torch semantics (no Pallas, no padding)."""
    H = gru_dim
    B, T, F = time_seq.shape
    sa = jnp.concatenate([state, action], axis=1)
    x = jnp.maximum(_dot(sa, params["w1"].T) + params["b1"], 0.0)

    layer_in = jnp.transpose(time_seq, (1, 0, 2)).reshape(T * B, F)
    h = jnp.zeros((B, H), jnp.float32)
    for l in range(gru_layers):
        wih, whh, bih, bhh = params[f"gru{l}"]
        x_proj = _dot(layer_in, wih.T) + bih
        h = jnp.zeros((B, H), jnp.float32)
        outs = []
        for t in range(T):
            xp = x_proj[t * B:(t + 1) * B, :]
            hp = _dot(h, whh.T) + bhh
            r = jax.nn.sigmoid(xp[:, 0:H] + hp[:, 0:H])
            z = jax.nn.sigmoid(xp[:, H:2 * H] + hp[:, H:2 * H])
            n = jnp.tanh(xp[:, 2 * H:3 * H] + r * hp[:, 2 * H:3 * H])
            h = (1.0 - z) * n + z * h
            outs.append(h)
        layer_in = jnp.concatenate(outs, axis=0)

    gru_out = _dot(h, params["fcw"].T) + params["fcb"]
    x2 = jnp.maximum(
        _dot(x, params["w2x"].T) + _dot(gru_out, params["w2g"].T)
        + params["b2"], 0.0)
    return jnp.sum(x2 * params["w3"], axis=-1, keepdims=True) + params["b3"]


if __name__ == "__main__":
    B = 2
    n_states = 16
    n_actions = 4
    hidden_dim = 32
    gru_dim = 16
    gru_layers = 2
    time_step_features = 8
    T = 8

    root = jax.random.PRNGKey(0)
    k_s, k_a, k_t, k_p = jax.random.split(root, 4)

    state = jax.random.normal(k_s, (B, n_states), jnp.float32)
    action = jax.random.normal(k_a, (B, n_actions), jnp.float32)
    time_seq = jax.random.normal(k_t, (B, T, time_step_features), jnp.float32)

    params = make_params(k_p, n_states, n_actions, hidden_dim, gru_dim,
                         gru_layers, time_step_features)

    geom = make_geometry(n_states, n_actions, hidden_dim, gru_dim,
                         time_step_features)
    dense_slab, gru_slab = prepare_params(params, geom, hidden_dim=hidden_dim,
                                          gru_dim=gru_dim, gru_layers=gru_layers)
    forward = make_critic_forward(geom, gru_layers=gru_layers)

    out = forward(state, action, time_seq, dense_slab, gru_slab)
    out = jax.block_until_ready(out)

    ref = critic_reference(state, action, time_seq, params,
                           gru_layers=gru_layers, gru_dim=gru_dim)
    np.testing.assert_allclose(np.asarray(out), np.asarray(ref),
                               rtol=1e-5, atol=1e-5)
    assert out.shape == (B, 1)

    print("KERNEL_OK")
</pallas_src>

<mosaic_0001>
module attributes {stable_mosaic.version = 11 : i64} {
  func.func @critic_kernel(%arg0: memref<8x24xf32, #tpu.memory_space<vmem>>, %arg1: memref<64x128xf32, #tpu.memory_space<vmem>>, %arg2: memref<2x264x384xf32, #tpu.memory_space<vmem>>, %arg3: memref<416x128xf32, #tpu.memory_space<vmem>>, %arg4: memref<8x1xf32, #tpu.memory_space<vmem>>, %arg5: memref<64x384xf32, #tpu.memory_space<vmem>>, %arg6: memref<64x128xf32, #tpu.memory_space<vmem>>) attributes {dimension_semantics = [], scalar_prefetch = 0 : i64, scratch_operands = 2 : i64, tpu.core_type = #tpu.core_type<tc>} {
    %c408 = arith.constant 408 : index
    %c0 = arith.constant 0 : index
    %0 = vector.load %arg3[%c408, %c0] : memref<416x128xf32, #tpu.memory_space<vmem>>, vector<8x128xf32>
    %1 = vector.extract_strided_slice %0 {offsets = [0, 0], sizes = [1, 128], strides = [1, 1]} : vector<8x128xf32> to vector<1x128xf32>
    %2 = vector.extract_strided_slice %0 {offsets = [1, 0], sizes = [1, 128], strides = [1, 1]} : vector<8x128xf32> to vector<1x128xf32>
    %3 = vector.extract_strided_slice %0 {offsets = [2, 0], sizes = [1, 128], strides = [1, 1]} : vector<8x128xf32> to vector<1x128xf32>
    %4 = vector.extract_strided_slice %0 {offsets = [3, 0], sizes = [1, 128], strides = [1, 1]} : vector<8x128xf32> to vector<1x128xf32>
    %5 = vector.extract_strided_slice %0 {offsets = [4, 0], sizes = [1, 1], strides = [1, 1]} : vector<8x128xf32> to vector<1x1xf32>
    %c0_0 = arith.constant 0 : index
    %c0_1 = arith.constant 0 : index
    %6 = vector.load %arg0[%c0_0, %c0_1] : memref<8x24xf32, #tpu.memory_space<vmem>>, vector<8x24xf32>
    %c0_2 = arith.constant 0 : index
    %c0_3 = arith.constant 0 : index
    %7 = vector.load %arg3[%c0_2, %c0_3] : memref<416x128xf32, #tpu.memory_space<vmem>>, vector<24x128xf32>
    %cst = arith.constant dense<0.000000e+00> : vector<8x128xf32>
    %8 = tpu.matmul %6, %7, %cst {dimension_numbers = #tpu.dot_dimension_numbers<[1], [0], [0], [1], [0, 0, 1, 1], [], []>} : vector<8x24xf32>, vector<24x128xf32>, vector<8x128xf32> -> vector<8x128xf32>
    %9 = vector.broadcast %1 : vector<1x128xf32> to vector<8x128xf32>
    %10 = arith.addf %8, %9 : vector<8x128xf32>
    %cst_4 = arith.constant 0.000000e+00 : f32
    %11 = vector.broadcast %cst_4 : f32 to vector<8x128xf32>
    %12 = arith.maximumf %10, %11 : vector<8x128xf32>
    %c0_5 = arith.constant 0 : index
    %c0_6 = arith.constant 0 : index
    %13 = vector.load %arg1[%c0_5, %c0_6] : memref<64x128xf32, #tpu.memory_space<vmem>>, vector<64x128xf32>
    %c0_7 = arith.constant 0 : index
    %c0_8 = arith.constant 0 : index
    %c0_9 = arith.constant 0 : index
    %14 = vector.load %arg2[%c0_7, %c0_8, %c0_9] : memref<2x264x384xf32, #tpu.memory_space<vmem>>, vector<1x128x384xf32>
    %15 = vector.shape_cast %14 : vector<1x128x384xf32> to vector<128x384xf32>
    %c0_10 = arith.constant 0 : index
    %c128 = arith.constant 128 : index
    %c0_11 = arith.constant 0 : index
    %16 = vector.load %arg2[%c0_10, %c128, %c0_11] : memref<2x264x384xf32, #tpu.memory_space<vmem>>, vector<1x128x384xf32>
    %17 = vector.shape_cast %16 : vector<1x128x384xf32> to vector<128x384xf32>
    %c0_12 = arith.constant 0 : index
    %c256 = arith.constant 256 : index
    %c0_13 = arith.constant 0 : index
    %18 = vector.load %arg2[%c0_12, %c256, %c0_13] : memref<2x264x384xf32, #tpu.memory_space<vmem>>, vector<1x8x384xf32>
    %19 = vector.shape_cast %18 : vector<1x8x384xf32> to vector<8x384xf32>
    %20 = vector.extract_strided_slice %19 {offsets = [0, 0], sizes = [1, 384], strides = [1, 1]} : vector<8x384xf32> to vector<1x384xf32>
    %21 = vector.extract_strided_slice %19 {offsets = [1, 256], sizes = [1, 128], strides = [1, 1]} : vector<8x384xf32> to vector<1x128xf32>
    %22 = vector.shape_cast %21 : vector<1x128xf32> to vector<1x128xf32>
    %23 = vector.broadcast %22 : vector<1x128xf32> to vector<8x128xf32>
    %cst_14 = arith.constant dense<0.000000e+00> : vector<64x384xf32>
    %24 = tpu.matmul %13, %15, %cst_14 {dimension_numbers = #tpu.dot_dimension_numbers<[1], [0], [0], [1], [0, 0, 1, 1], [], []>} : vector<64x128xf32>, vector<128x384xf32>, vector<64x384xf32> -> vector<64x384xf32>
    %25 = vector.broadcast %20 : vector<1x384xf32> to vector<64x384xf32>
    %26 = arith.addf %24, %25 : vector<64x384xf32>
    %c0_15 = arith.constant 0 : index
    %c0_16 = arith.constant 0 : index
    %27 = vector.load %arg5[%c0_15, %c0_16] : memref<64x384xf32, #tpu.memory_space<vmem>>, vector<64x384xf32>
    tpu.vector_store %arg5[%c0_15, %c0_16], %26 {strides = array<i32>} : memref<64x384xf32, #tpu.memory_space<vmem>>, vector<64x384xf32>,
    %cst_17 = arith.constant 0.000000e+00 : f32
    %28 = vector.broadcast %cst_17 : f32 to vector<8x128xf32>
    %c0_18 = arith.constant 0 : index
    %c0_19 = arith.constant 0 : index
    %29 = vector.load %arg5[%c0_18, %c0_19] : memref<64x384xf32, #tpu.memory_space<vmem>>, vector<8x384xf32>
    %cst_20 = arith.constant dense<0.000000e+00> : vector<8x384xf32>
    %30 = tpu.matmul %28, %17, %cst_20 {dimension_numbers = #tpu.dot_dimension_numbers<[1], [0], [0], [1], [0, 0, 1, 1], [], []>} : vector<8x128xf32>, vector<128x384xf32>, vector<8x384xf32> -> vector<8x384xf32>
    %31 = vector.extract_strided_slice %29 {offsets = [0, 0], sizes = [8, 128], strides = [1, 1]} : vector<8x384xf32> to vector<8x128xf32>
    %32 = vector.extract_strided_slice %30 {offsets = [0, 0], sizes = [8, 128], strides = [1, 1]} : vector<8x384xf32> to vector<8x128xf32>
    %33 = arith.addf %31, %32 : vector<8x128xf32>
    %34 = arith.negf %33 : vector<8x128xf32>
    %35 = math.exp %34 : vector<8x128xf32>
    %cst_21 = arith.constant 1.000000e+00 : f32
    %36 = vector.broadcast %cst_21 : f32 to vector<8x128xf32>
    %37 = arith.addf %36, %35 : vector<8x128xf32>
    %38 = arith.divf %36, %37 : vector<8x128xf32>
    %39 = vector.extract_strided_slice %29 {offsets = [0, 128], sizes = [8, 128], strides = [1, 1]} : vector<8x384xf32> to vector<8x128xf32>
    %40 = vector.extract_strided_slice %30 {offsets = [0, 128], sizes = [8, 128], strides = [1, 1]} : vector<8x384xf32> to vector<8x128xf32>
    %41 = arith.addf %39, %40 : vector<8x128xf32>
    %42 = arith.negf %41 : vector<8x128xf32>
    %43 = math.exp %42 : vector<8x128xf32>
    %cst_22 = arith.constant 1.000000e+00 : f32
    %44 = vector.broadcast %cst_22 : f32 to vector<8x128xf32>
    %45 = arith.addf %44, %43 : vector<8x128xf32>
    %46 = arith.divf %44, %45 : vector<8x128xf32>
    %47 = vector.extract_strided_slice %29 {offsets = [0, 256], sizes = [8, 128], strides = [1, 1]} : vector<8x384xf32> to vector<8x128xf32>
    %48 = vector.extract_strided_slice %30 {offsets = [0, 256], sizes = [8, 128], strides = [1, 1]} : vector<8x384xf32> to vector<8x128xf32>
    %49 = arith.addf %48, %23 : vector<8x128xf32>
    %50 = arith.mulf %38, %49 : vector<8x128xf32>
    %51 = arith.addf %47, %50 : vector<8x128xf32>
    %52 = math.tanh %51 : vector<8x128xf32>
    %cst_23 = arith.constant 1.000000e+00 : f32
    %53 = vector.broadcast %cst_23 : f32 to vector<8x128xf32>
    %54 = arith.subf %53, %46 : vector<8x128xf32>
    %55 = arith.mulf %54, %52 : vector<8x128xf32>
    %56 = arith.mulf %46, %28 : vector<8x128xf32>
    %57 = arith.addf %55, %56 : vector<8x128xf32>
    %c0_24 = arith.constant 0 : index
    %c0_25 = arith.constant 0 : index
    %58 = vector.load %arg6[%c0_24, %c0_25] : memref<64x128xf32, #tpu.memory_space<vmem>>, vector<8x128xf32>
    tpu.vector_store %arg6[%c0_24, %c0_25], %57 {strides = array<i32>} : memref<64x128xf32, #tpu.memory_space<vmem>>, vector<8x128xf32>,
    %c8 = arith.constant 8 : index
    %c0_26 = arith.constant 0 : index
    %59 = vector.load %arg5[%c8, %c0_26] : memref<64x384xf32, #tpu.memory_space<vmem>>, vector<8x384xf32>
    %cst_27 = arith.constant dense<0.000000e+00> : vector<8x384xf32>
    %60 = tpu.matmul %57, %17, %cst_27 {dimension_numbers = #tpu.dot_dimension_numbers<[1], [0], [0], [1], [0, 0, 1, 1], [], []>} : vector<8x128xf32>, vector<128x384xf32>, vector<8x384xf32> -> vector<8x384xf32>
    %61 = vector.extract_strided_slice %59 {offsets = [0, 0], sizes = [8, 128], strides = [1, 1]} : vector<8x384xf32> to vector<8x128xf32>
    %62 = vector.extract_strided_slice %60 {offsets = [0, 0], sizes = [8, 128], strides = [1, 1]} : vector<8x384xf32> to vector<8x128xf32>
    %63 = arith.addf %61, %62 : vector<8x128xf32>
    %64 = arith.negf %63 : vector<8x128xf32>
    %65 = math.exp %64 : vector<8x128xf32>
    %cst_28 = arith.constant 1.000000e+00 : f32
    %66 = vector.broadcast %cst_28 : f32 to vector<8x128xf32>
    %67 = arith.addf %66, %65 : vector<8x128xf32>
    %68 = arith.divf %66, %67 : vector<8x128xf32>
    %69 = vector.extract_strided_slice %59 {offsets = [0, 128], sizes = [8, 128], strides = [1, 1]} : vector<8x384xf32> to vector<8x128xf32>
    %70 = vector.extract_strided_slice %60 {offsets = [0, 128], sizes = [8, 128], strides = [1, 1]} : vector<8x384xf32> to vector<8x128xf32>
    %71 = arith.addf %69, %70 : vector<8x128xf32>
    %72 = arith.negf %71 : vector<8x128xf32>
    %73 = math.exp %72 : vector<8x128xf32>
    %cst_29 = arith.constant 1.000000e+00 : f32
    %74 = vector.broadcast %cst_29 : f32 to vector<8x128xf32>
    %75 = arith.addf %74, %73 : vector<8x128xf32>
    %76 = arith.divf %74, %75 : vector<8x128xf32>
    %77 = vector.extract_strided_slice %59 {offsets = [0, 256], sizes = [8, 128], strides = [1, 1]} : vector<8x384xf32> to vector<8x128xf32>
    %78 = vector.extract_strided_slice %60 {offsets = [0, 256], sizes = [8, 128], strides = [1, 1]} : vector<8x384xf32> to vector<8x128xf32>
    %79 = arith.addf %78, %23 : vector<8x128xf32>
    %80 = arith.mulf %68, %79 : vector<8x128xf32>
    %81 = arith.addf %77, %80 : vector<8x128xf32>
    %82 = math.tanh %81 : vector<8x128xf32>
    %cst_30 = arith.constant 1.000000e+00 : f32
    %83 = vector.broadcast %cst_30 : f32 to vector<8x128xf32>
    %84 = arith.subf %83, %76 : vector<8x128xf32>
    %85 = arith.mulf %84, %82 : vector<8x128xf32>
    %86 = arith.mulf %76, %57 : vector<8x128xf32>
    %87 = arith.addf %85, %86 : vector<8x128xf32>
    %c8_31 = arith.constant 8 : index
    %c0_32 = arith.constant 0 : index
    %88 = vector.load %arg6[%c8_31, %c0_32] : memref<64x128xf32, #tpu.memory_space<vmem>>, vector<8x128xf32>
    tpu.vector_store %arg6[%c8_31, %c0_32], %87 {strides = array<i32>} : memref<64x128xf32, #tpu.memory_space<vmem>>, vector<8x128xf32>,
    %c16 = arith.constant 16 : index
    %c0_33 = arith.constant 0 : index
    %89 = vector.load %arg5[%c16, %c0_33] : memref<64x384xf32, #tpu.memory_space<vmem>>, vector<8x384xf32>
    %cst_34 = arith.constant dense<0.000000e+00> : vector<8x384xf32>
    %90 = tpu.matmul %87, %17, %cst_34 {dimension_numbers = #tpu.dot_dimension_numbers<[1], [0], [0], [1], [0, 0, 1, 1], [], []>} : vector<8x128xf32>, vector<128x384xf32>, vector<8x384xf32> -> vector<8x384xf32>
    %91 = vector.extract_strided_slice %89 {offsets = [0, 0], sizes = [8, 128], strides = [1, 1]} : vector<8x384xf32> to vector<8x128xf32>
    %92 = vector.extract_strided_slice %90 {offsets = [0, 0], sizes = [8, 128], strides = [1, 1]} : vector<8x384xf32> to vector<8x128xf32>
    %93 = arith.addf %91, %92 : vector<8x128xf32>
    %94 = arith.negf %93 : vector<8x128xf32>
    %95 = math.exp %94 : vector<8x128xf32>
    %cst_35 = arith.constant 1.000000e+00 : f32
    %96 = vector.broadcast %cst_35 : f32 to vector<8x128xf32>
    %97 = arith.addf %96, %95 : vector<8x128xf32>
    %98 = arith.divf %96, %97 : vector<8x128xf32>
    %99 = vector.extract_strided_slice %89 {offsets = [0, 128], sizes = [8, 128], strides = [1, 1]} : vector<8x384xf32> to vector<8x128xf32>
    %100 = vector.extract_strided_slice %90 {offsets = [0, 128], sizes = [8, 128], strides = [1, 1]} : vector<8x384xf32> to vector<8x128xf32>
    %101 = arith.addf %99, %100 : vector<8x128xf32>
    %102 = arith.negf %101 : vector<8x128xf32>
    %103 = math.exp %102 : vector<8x128xf32>
    %cst_36 = arith.constant 1.000000e+00 : f32
    %104 = vector.broadcast %cst_36 : f32 to vector<8x128xf32>
    %105 = arith.addf %104, %103 : vector<8x128xf32>
    %106 = arith.divf %104, %105 : vector<8x128xf32>
    %107 = vector.extract_strided_slice %89 {offsets = [0, 256], sizes = [8, 128], strides = [1, 1]} : vector<8x384xf32> to vector<8x128xf32>
    %108 = vector.extract_strided_slice %90 {offsets = [0, 256], sizes = [8, 128], strides = [1, 1]} : vector<8x384xf32> to vector<8x128xf32>
    %109 = arith.addf %108, %23 : vector<8x128xf32>
    %110 = arith.mulf %98, %109 : vector<8x128xf32>
    %111 = arith.addf %107, %110 : vector<8x128xf32>
    %112 = math.tanh %111 : vector<8x128xf32>
    %cst_37 = arith.constant 1.000000e+00 : f32
    %113 = vector.broadcast %cst_37 : f32 to vector<8x128xf32>
    %114 = arith.subf %113, %106 : vector<8x128xf32>
    %115 = arith.mulf %114, %112 : vector<8x128xf32>
    %116 = arith.mulf %106, %87 : vector<8x128xf32>
    %117 = arith.addf %115, %116 : vector<8x128xf32>
    %c16_38 = arith.constant 16 : index
    %c0_39 = arith.constant 0 : index
    %118 = vector.load %arg6[%c16_38, %c0_39] : memref<64x128xf32, #tpu.memory_space<vmem>>, vector<8x128xf32>
    tpu.vector_store %arg6[%c16_38, %c0_39], %117 {strides = array<i32>} : memref<64x128xf32, #tpu.memory_space<vmem>>, vector<8x128xf32>,
    %c24 = arith.constant 24 : index
    %c0_40 = arith.constant 0 : index
    %119 = vector.load %arg5[%c24, %c0_40] : memref<64x384xf32, #tpu.memory_space<vmem>>, vector<8x384xf32>
    %cst_41 = arith.constant dense<0.000000e+00> : vector<8x384xf32>
    %120 = tpu.matmul %117, %17, %cst_41 {dimension_numbers = #tpu.dot_dimension_numbers<[1], [0], [0], [1], [0, 0, 1, 1], [], []>} : vector<8x128xf32>, vector<128x384xf32>, vector<8x384xf32> -> vector<8x384xf32>
    %121 = vector.extract_strided_slice %119 {offsets = [0, 0], sizes = [8, 128], strides = [1, 1]} : vector<8x384xf32> to vector<8x128xf32>
    %122 = vector.extract_strided_slice %120 {offsets = [0, 0], sizes = [8, 128], strides = [1, 1]} : vector<8x384xf32> to vector<8x128xf32>
    %123 = arith.addf %121, %122 : vector<8x128xf32>
    %124 = arith.negf %123 : vector<8x128xf32>
    %125 = math.exp %124 : vector<8x128xf32>
    %cst_42 = arith.constant 1.000000e+00 : f32
    %126 = vector.broadcast %cst_42 : f32 to vector<8x128xf32>
    %127 = arith.addf %126, %125 : vector<8x128xf32>
    %128 = arith.divf %126, %127 : vector<8x128xf32>
    %129 = vector.extract_strided_slice %119 {offsets = [0, 128], sizes = [8, 128], strides = [1, 1]} : vector<8x384xf32> to vector<8x128xf32>
    %130 = vector.extract_strided_slice %120 {offsets = [0, 128], sizes = [8, 128], strides = [1, 1]} : vector<8x384xf32> to vector<8x128xf32>
    %131 = arith.addf %129, %130 : vector<8x128xf32>
    %132 = arith.negf %131 : vector<8x128xf32>
    %133 = math.exp %132 : vector<8x128xf32>
    %cst_43 = arith.constant 1.000000e+00 : f32
    %134 = vector.broadcast %cst_43 : f32 to vector<8x128xf32>
    %135 = arith.addf %134, %133 : vector<8x128xf32>
    %136 = arith.divf %134, %135 : vector<8x128xf32>
    %137 = vector.extract_strided_slice %119 {offsets = [0, 256], sizes = [8, 128], strides = [1, 1]} : vector<8x384xf32> to vector<8x128xf32>
    %138 = vector.extract_strided_slice %120 {offsets = [0, 256], sizes = [8, 128], strides = [1, 1]} : vector<8x384xf32> to vector<8x128xf32>
    %139 = arith.addf %138, %23 : vector<8x128xf32>
    %140 = arith.mulf %128, %139 : vector<8x128xf32>
    %141 = arith.addf %137, %140 : vector<8x128xf32>
    %142 = math.tanh %141 : vector<8x128xf32>
    %cst_44 = arith.constant 1.000000e+00 : f32
    %143 = vector.broadcast %cst_44 : f32 to vector<8x128xf32>
    %144 = arith.subf %143, %136 : vector<8x128xf32>
    %145 = arith.mulf %144, %142 : vector<8x128xf32>
    %146 = arith.mulf %136, %117 : vector<8x128xf32>
    %147 = arith.addf %145, %146 : vector<8x128xf32>
    %c24_45 = arith.constant 24 : index
    %c0_46 = arith.constant 0 : index
    %148 = vector.load %arg6[%c24_45, %c0_46] : memref<64x128xf32, #tpu.memory_space<vmem>>, vector<8x128xf32>
    tpu.vector_store %arg6[%c24_45, %c0_46], %147 {strides = array<i32>} : memref<64x128xf32, #tpu.memory_space<vmem>>, vector<8x128xf32>,
    %c32 = arith.constant 32 : index
    %c0_47 = arith.constant 0 : index
    %149 = vector.load %arg5[%c32, %c0_47] : memref<64x384xf32, #tpu.memory_space<vmem>>, vector<8x384xf32>
    %cst_48 = arith.constant dense<0.000000e+00> : vector<8x384xf32>
    %150 = tpu.matmul %147, %17, %cst_48 {dimension_numbers = #tpu.dot_dimension_numbers<[1], [0], [0], [1], [0, 0, 1, 1], [], []>} : vector<8x128xf32>, vector<128x384xf32>, vector<8x384xf32> -> vector<8x384xf32>
    %151 = vector.extract_strided_slice %149 {offsets = [0, 0], sizes = [8, 128], strides = [1, 1]} : vector<8x384xf32> to vector<8x128xf32>
    %152 = vector.extract_strided_slice %150 {offsets = [0, 0], sizes = [8, 128], strides = [1, 1]} : vector<8x384xf32> to vector<8x128xf32>
    %153 = arith.addf %151, %152 : vector<8x128xf32>
    %154 = arith.negf %153 : vector<8x128xf32>
    %155 = math.exp %154 : vector<8x128xf32>
    %cst_49 = arith.constant 1.000000e+00 : f32
    %156 = vector.broadcast %cst_49 : f32 to vector<8x128xf32>
    %157 = arith.addf %156, %155 : vector<8x128xf32>
    %158 = arith.divf %156, %157 : vector<8x128xf32>
    %159 = vector.extract_strided_slice %149 {offsets = [0, 128], sizes = [8, 128], strides = [1, 1]} : vector<8x384xf32> to vector<8x128xf32>
    %160 = vector.extract_strided_slice %150 {offsets = [0, 128], sizes = [8, 128], strides = [1, 1]} : vector<8x384xf32> to vector<8x128xf32>
    %161 = arith.addf %159, %160 : vector<8x128xf32>
    %162 = arith.negf %161 : vector<8x128xf32>
    %163 = math.exp %162 : vector<8x128xf32>
    %cst_50 = arith.constant 1.000000e+00 : f32
    %164 = vector.broadcast %cst_50 : f32 to vector<8x128xf32>
    %165 = arith.addf %164, %163 : vector<8x128xf32>
    %166 = arith.divf %164, %165 : vector<8x128xf32>
    %167 = vector.extract_strided_slice %149 {offsets = [0, 256], sizes = [8, 128], strides = [1, 1]} : vector<8x384xf32> to vector<8x128xf32>
    %168 = vector.extract_strided_slice %150 {offsets = [0, 256], sizes = [8, 128], strides = [1, 1]} : vector<8x384xf32> to vector<8x128xf32>
    %169 = arith.addf %168, %23 : vector<8x128xf32>
    %170 = arith.mulf %158, %169 : vector<8x128xf32>
    %171 = arith.addf %167, %170 : vector<8x128xf32>
    %172 = math.tanh %171 : vector<8x128xf32>
    %cst_51 = arith.constant 1.000000e+00 : f32
    %173 = vector.broadcast %cst_51 : f32 to vector<8x128xf32>
    %174 = arith.subf %173, %166 : vector<8x128xf32>
    %175 = arith.mulf %174, %172 : vector<8x128xf32>
    %176 = arith.mulf %166, %147 : vector<8x128xf32>
    %177 = arith.addf %175, %176 : vector<8x128xf32>
    %c32_52 = arith.constant 32 : index
    %c0_53 = arith.constant 0 : index
    %178 = vector.load %arg6[%c32_52, %c0_53] : memref<64x128xf32, #tpu.memory_space<vmem>>, vector<8x128xf32>
    tpu.vector_store %arg6[%c32_52, %c0_53], %177 {strides = array<i32>} : memref<64x128xf32, #tpu.memory_space<vmem>>, vector<8x128xf32>,
    %c40 = arith.constant 40 : index
    %c0_54 = arith.constant 0 : index
    %179 = vector.load %arg5[%c40, %c0_54] : memref<64x384xf32, #tpu.memory_space<vmem>>, vector<8x384xf32>
    %cst_55 = arith.constant dense<0.000000e+00> : vector<8x384xf32>
    %180 = tpu.matmul %177, %17, %cst_55 {dimension_numbers = #tpu.dot_dimension_numbers<[1], [0], [0], [1], [0, 0, 1, 1], [], []>} : vector<8x128xf32>, vector<128x384xf32>, vector<8x384xf32> -> vector<8x384xf32>
    %181 = vector.extract_strided_slice %179 {offsets = [0, 0], sizes = [8, 128], strides = [1, 1]} : vector<8x384xf32> to vector<8x128xf32>
    %182 = vector.extract_strided_slice %180 {offsets = [0, 0], sizes = [8, 128], strides = [1, 1]} : vector<8x384xf32> to vector<8x128xf32>
    %183 = arith.addf %181, %182 : vector<8x128xf32>
    %184 = arith.negf %183 : vector<8x128xf32>
    %185 = math.exp %184 : vector<8x128xf32>
    %cst_56 = arith.constant 1.000000e+00 : f32
    %186 = vector.broadcast %cst_56 : f32 to vector<8x128xf32>
    %187 = arith.addf %186, %185 : vector<8x128xf32>
    %188 = arith.divf %186, %187 : vector<8x128xf32>
    %189 = vector.extract_strided_slice %179 {offsets = [0, 128], sizes = [8, 128], strides = [1, 1]} : vector<8x384xf32> to vector<8x128xf32>
    %190 = vector.extract_strided_slice %180 {offsets = [0, 128], sizes = [8, 128], strides = [1, 1]} : vector<8x384xf32> to vector<8x128xf32>
    %191 = arith.addf %189, %190 : vector<8x128xf32>
    %192 = arith.negf %191 : vector<8x128xf32>
    %193 = math.exp %192 : vector<8x128xf32>
    %cst_57 = arith.constant 1.000000e+00 : f32
    %194 = vector.broadcast %cst_57 : f32 to vector<8x128xf32>
    %195 = arith.addf %194, %193 : vector<8x128xf32>
    %196 = arith.divf %194, %195 : vector<8x128xf32>
    %197 = vector.extract_strided_slice %179 {offsets = [0, 256], sizes = [8, 128], strides = [1, 1]} : vector<8x384xf32> to vector<8x128xf32>
    %198 = vector.extract_strided_slice %180 {offsets = [0, 256], sizes = [8, 128], strides = [1, 1]} : vector<8x384xf32> to vector<8x128xf32>
    %199 = arith.addf %198, %23 : vector<8x128xf32>
    %200 = arith.mulf %188, %199 : vector<8x128xf32>
    %201 = arith.addf %197, %200 : vector<8x128xf32>
    %202 = math.tanh %201 : vector<8x128xf32>
    %cst_58 = arith.constant 1.000000e+00 : f32
    %203 = vector.broadcast %cst_58 : f32 to vector<8x128xf32>
    %204 = arith.subf %203, %196 : vector<8x128xf32>
    %205 = arith.mulf %204, %202 : vector<8x128xf32>
    %206 = arith.mulf %196, %177 : vector<8x128xf32>
    %207 = arith.addf %205, %206 : vector<8x128xf32>
    %c40_59 = arith.constant 40 : index
    %c0_60 = arith.constant 0 : index
    %208 = vector.load %arg6[%c40_59, %c0_60] : memref<64x128xf32, #tpu.memory_space<vmem>>, vector<8x128xf32>
    tpu.vector_store %arg6[%c40_59, %c0_60], %207 {strides = array<i32>} : memref<64x128xf32, #tpu.memory_space<vmem>>, vector<8x128xf32>,
    %c48 = arith.constant 48 : index
    %c0_61 = arith.constant 0 : index
    %209 = vector.load %arg5[%c48, %c0_61] : memref<64x384xf32, #tpu.memory_space<vmem>>, vector<8x384xf32>
    %cst_62 = arith.constant dense<0.000000e+00> : vector<8x384xf32>
    %210 = tpu.matmul %207, %17, %cst_62 {dimension_numbers = #tpu.dot_dimension_numbers<[1], [0], [0], [1], [0, 0, 1, 1], [], []>} : vector<8x128xf32>, vector<128x384xf32>, vector<8x384xf32> -> vector<8x384xf32>
    %211 = vector.extract_strided_slice %209 {offsets = [0, 0], sizes = [8, 128], strides = [1, 1]} : vector<8x384xf32> to vector<8x128xf32>
    %212 = vector.extract_strided_slice %210 {offsets = [0, 0], sizes = [8, 128], strides = [1, 1]} : vector<8x384xf32> to vector<8x128xf32>
    %213 = arith.addf %211, %212 : vector<8x128xf32>
    %214 = arith.negf %213 : vector<8x128xf32>
    %215 = math.exp %214 : vector<8x128xf32>
    %cst_63 = arith.constant 1.000000e+00 : f32
    %216 = vector.broadcast %cst_63 : f32 to vector<8x128xf32>
    %217 = arith.addf %216, %215 : vector<8x128xf32>
    %218 = arith.divf %216, %217 : vector<8x128xf32>
    %219 = vector.extract_strided_slice %209 {offsets = [0, 128], sizes = [8, 128], strides = [1, 1]} : vector<8x384xf32> to vector<8x128xf32>
    %220 = vector.extract_strided_slice %210 {offsets = [0, 128], sizes = [8, 128], strides = [1, 1]} : vector<8x384xf32> to vector<8x128xf32>
    %221 = arith.addf %219, %220 : vector<8x128xf32>
    %222 = arith.negf %221 : vector<8x128xf32>
    %223 = math.exp %222 : vector<8x128xf32>
    %cst_64 = arith.constant 1.000000e+00 : f32
    %224 = vector.broadcast %cst_64 : f32 to vector<8x128xf32>
    %225 = arith.addf %224, %223 : vector<8x128xf32>
    %226 = arith.divf %224, %225 : vector<8x128xf32>
    %227 = vector.extract_strided_slice %209 {offsets = [0, 256], sizes = [8, 128], strides = [1, 1]} : vector<8x384xf32> to vector<8x128xf32>
    %228 = vector.extract_strided_slice %210 {offsets = [0, 256], sizes = [8, 128], strides = [1, 1]} : vector<8x384xf32> to vector<8x128xf32>
    %229 = arith.addf %228, %23 : vector<8x128xf32>
    %230 = arith.mulf %218, %229 : vector<8x128xf32>
    %231 = arith.addf %227, %230 : vector<8x128xf32>
    %232 = math.tanh %231 : vector<8x128xf32>
    %cst_65 = arith.constant 1.000000e+00 : f32
    %233 = vector.broadcast %cst_65 : f32 to vector<8x128xf32>
    %234 = arith.subf %233, %226 : vector<8x128xf32>
    %235 = arith.mulf %234, %232 : vector<8x128xf32>
    %236 = arith.mulf %226, %207 : vector<8x128xf32>
    %237 = arith.addf %235, %236 : vector<8x128xf32>
    %c48_66 = arith.constant 48 : index
    %c0_67 = arith.constant 0 : index
    %238 = vector.load %arg6[%c48_66, %c0_67] : memref<64x128xf32, #tpu.memory_space<vmem>>, vector<8x128xf32>
    tpu.vector_store %arg6[%c48_66, %c0_67], %237 {strides = array<i32>} : memref<64x128xf32, #tpu.memory_space<vmem>>, vector<8x128xf32>,
    %c56 = arith.constant 56 : index
    %c0_68 = arith.constant 0 : index
    %239 = vector.load %arg5[%c56, %c0_68] : memref<64x384xf32, #tpu.memory_space<vmem>>, vector<8x384xf32>
    %cst_69 = arith.constant dense<0.000000e+00> : vector<8x384xf32>
    %240 = tpu.matmul %237, %17, %cst_69 {dimension_numbers = #tpu.dot_dimension_numbers<[1], [0], [0], [1], [0, 0, 1, 1], [], []>} : vector<8x128xf32>, vector<128x384xf32>, vector<8x384xf32> -> vector<8x384xf32>
    %241 = vector.extract_strided_slice %239 {offsets = [0, 0], sizes = [8, 128], strides = [1, 1]} : vector<8x384xf32> to vector<8x128xf32>
    %242 = vector.extract_strided_slice %240 {offsets = [0, 0], sizes = [8, 128], strides = [1, 1]} : vector<8x384xf32> to vector<8x128xf32>
    %243 = arith.addf %241, %242 : vector<8x128xf32>
    %244 = arith.negf %243 : vector<8x128xf32>
    %245 = math.exp %244 : vector<8x128xf32>
    %cst_70 = arith.constant 1.000000e+00 : f32
    %246 = vector.broadcast %cst_70 : f32 to vector<8x128xf32>
    %247 = arith.addf %246, %245 : vector<8x128xf32>
    %248 = arith.divf %246, %247 : vector<8x128xf32>
    %249 = vector.extract_strided_slice %239 {offsets = [0, 128], sizes = [8, 128], strides = [1, 1]} : vector<8x384xf32> to vector<8x128xf32>
    %250 = vector.extract_strided_slice %240 {offsets = [0, 128], sizes = [8, 128], strides = [1, 1]} : vector<8x384xf32> to vector<8x128xf32>
    %251 = arith.addf %249, %250 : vector<8x128xf32>
    %252 = arith.negf %251 : vector<8x128xf32>
    %253 = math.exp %252 : vector<8x128xf32>
    %cst_71 = arith.constant 1.000000e+00 : f32
    %254 = vector.broadcast %cst_71 : f32 to vector<8x128xf32>
    %255 = arith.addf %254, %253 : vector<8x128xf32>
    %256 = arith.divf %254, %255 : vector<8x128xf32>
    %257 = vector.extract_strided_slice %239 {offsets = [0, 256], sizes = [8, 128], strides = [1, 1]} : vector<8x384xf32> to vector<8x128xf32>
    %258 = vector.extract_strided_slice %240 {offsets = [0, 256], sizes = [8, 128], strides = [1, 1]} : vector<8x384xf32> to vector<8x128xf32>
    %259 = arith.addf %258, %23 : vector<8x128xf32>
    %260 = arith.mulf %248, %259 : vector<8x128xf32>
    %261 = arith.addf %257, %260 : vector<8x128xf32>
    %262 = math.tanh %261 : vector<8x128xf32>
    %cst_72 = arith.constant 1.000000e+00 : f32
    %263 = vector.broadcast %cst_72 : f32 to vector<8x128xf32>
    %264 = arith.subf %263, %256 : vector<8x128xf32>
    %265 = arith.mulf %264, %262 : vector<8x128xf32>
    %266 = arith.mulf %256, %237 : vector<8x128xf32>
    %267 = arith.addf %265, %266 : vector<8x128xf32>
    %c56_73 = arith.constant 56 : index
    %c0_74 = arith.constant 0 : index
    %268 = vector.load %arg6[%c56_73, %c0_74] : memref<64x128xf32, #tpu.memory_space<vmem>>, vector<8x128xf32>
    tpu.vector_store %arg6[%c56_73, %c0_74], %267 {strides = array<i32>} : memref<64x128xf32, #tpu.memory_space<vmem>>, vector<8x128xf32>,
    %c0_75 = arith.constant 0 : index
    %c0_76 = arith.constant 0 : index
    %269 = vector.load %arg6[%c0_75, %c0_76] : memref<64x128xf32, #tpu.memory_space<vmem>>, vector<64x128xf32>
    %c1 = arith.constant 1 : index
    %c0_77 = arith.constant 0 : index
    %c0_78 = arith.constant 0 : index
    %270 = vector.load %arg2[%c1, %c0_77, %c0_78] : memref<2x264x384xf32, #tpu.memory_space<vmem>>, vector<1x128x384xf32>
    %271 = vector.shape_cast %270 : vector<1x128x384xf32> to vector<128x384xf32>
    %c1_79 = arith.constant 1 : index
    %c128_80 = arith.constant 128 : index
    %c0_81 = arith.constant 0 : index
    %272 = vector.load %arg2[%c1_79, %c128_80, %c0_81] : memref<2x264x384xf32, #tpu.memory_space<vmem>>, vector<1x128x384xf32>
    %273 = vector.shape_cast %272 : vector<1x128x384xf32> to vector<128x384xf32>
    %c1_82 = arith.constant 1 : index
    %c256_83 = arith.constant 256 : index
    %c0_84 = arith.constant 0 : index
    %274 = vector.load %arg2[%c1_82, %c256_83, %c0_84] : memref<2x264x384xf32, #tpu.memory_space<vmem>>, vector<1x8x384xf32>
    %275 = vector.shape_cast %274 : vector<1x8x384xf32> to vector<8x384xf32>
    %276 = vector.extract_strided_slice %275 {offsets = [0, 0], sizes = [1, 384], strides = [1, 1]} : vector<8x384xf32> to vector<1x384xf32>
    %277 = vector.extract_strided_slice %275 {offsets = [1, 256], sizes = [1, 128], strides = [1, 1]} : vector<8x384xf32> to vector<1x128xf32>
    %278 = vector.shape_cast %277 : vector<1x128xf32> to vector<1x128xf32>
    %279 = vector.broadcast %278 : vector<1x128xf32> to vector<8x128xf32>
    %cst_85 = arith.constant dense<0.000000e+00> : vector<64x384xf32>
    %280 = tpu.matmul %269, %271, %cst_85 {dimension_numbers = #tpu.dot_dimension_numbers<[1], [0], [0], [1], [0, 0, 1, 1], [], []>} : vector<64x128xf32>, vector<128x384xf32>, vector<64x384xf32> -> vector<64x384xf32>
    %281 = vector.broadcast %276 : vector<1x384xf32> to vector<64x384xf32>
    %282 = arith.addf %280, %281 : vector<64x384xf32>
    %c0_86 = arith.constant 0 : index
    %c0_87 = arith.constant 0 : index
    %283 = vector.load %arg5[%c0_86, %c0_87] : memref<64x384xf32, #tpu.memory_space<vmem>>, vector<64x384xf32>
    tpu.vector_store %arg5[%c0_86, %c0_87], %282 {strides = array<i32>} : memref<64x384xf32, #tpu.memory_space<vmem>>, vector<64x384xf32>,
    %cst_88 = arith.constant 0.000000e+00 : f32
    %284 = vector.broadcast %cst_88 : f32 to vector<8x128xf32>
    %c0_89 = arith.constant 0 : index
    %c0_90 = arith.constant 0 : index
    %285 = vector.load %arg5[%c0_89, %c0_90] : memref<64x384xf32, #tpu.memory_space<vmem>>, vector<8x384xf32>
    %cst_91 = arith.constant dense<0.000000e+00> : vector<8x384xf32>
    %286 = tpu.matmul %284, %273, %cst_91 {dimension_numbers = #tpu.dot_dimension_numbers<[1], [0], [0], [1], [0, 0, 1, 1], [], []>} : vector<8x128xf32>, vector<128x384xf32>, vector<8x384xf32> -> vector<8x384xf32>
    %287 = vector.extract_strided_slice %285 {offsets = [0, 0], sizes = [8, 128], strides = [1, 1]} : vector<8x384xf32> to vector<8x128xf32>
    %288 = vector.extract_strided_slice %286 {offsets = [0, 0], sizes = [8, 128], strides = [1, 1]} : vector<8x384xf32> to vector<8x128xf32>
    %289 = arith.addf %287, %288 : vector<8x128xf32>
    %290 = arith.negf %289 : vector<8x128xf32>
    %291 = math.exp %290 : vector<8x128xf32>
    %cst_92 = arith.constant 1.000000e+00 : f32
    %292 = vector.broadcast %cst_92 : f32 to vector<8x128xf32>
    %293 = arith.addf %292, %291 : vector<8x128xf32>
    %294 = arith.divf %292, %293 : vector<8x128xf32>
    %295 = vector.extract_strided_slice %285 {offsets = [0, 128], sizes = [8, 128], strides = [1, 1]} : vector<8x384xf32> to vector<8x128xf32>
    %296 = vector.extract_strided_slice %286 {offsets = [0, 128], sizes = [8, 128], strides = [1, 1]} : vector<8x384xf32> to vector<8x128xf32>
    %297 = arith.addf %295, %296 : vector<8x128xf32>
    %298 = arith.negf %297 : vector<8x128xf32>
    %299 = math.exp %298 : vector<8x128xf32>
    %cst_93 = arith.constant 1.000000e+00 : f32
    %300 = vector.broadcast %cst_93 : f32 to vector<8x128xf32>
    %301 = arith.addf %300, %299 : vector<8x128xf32>
    %302 = arith.divf %300, %301 : vector<8x128xf32>
    %303 = vector.extract_strided_slice %285 {offsets = [0, 256], sizes = [8, 128], strides = [1, 1]} : vector<8x384xf32> to vector<8x128xf32>
    %304 = vector.extract_strided_slice %286 {offsets = [0, 256], sizes = [8, 128], strides = [1, 1]} : vector<8x384xf32> to vector<8x128xf32>
    %305 = arith.addf %304, %279 : vector<8x128xf32>
    %306 = arith.mulf %294, %305 : vector<8x128xf32>
    %307 = arith.addf %303, %306 : vector<8x128xf32>
    %308 = math.tanh %307 : vector<8x128xf32>
    %cst_94 = arith.constant 1.000000e+00 : f32
    %309 = vector.broadcast %cst_94 : f32 to vector<8x128xf32>
    %310 = arith.subf %309, %302 : vector<8x128xf32>
    %311 = arith.mulf %310, %308 : vector<8x128xf32>
    %312 = arith.mulf %302, %284 : vector<8x128xf32>
    %313 = arith.addf %311, %312 : vector<8x128xf32>
    %c8_95 = arith.constant 8 : index
    %c0_96 = arith.constant 0 : index
    %314 = vector.load %arg5[%c8_95, %c0_96] : memref<64x384xf32, #tpu.memory_space<vmem>>, vector<8x384xf32>
    %cst_97 = arith.constant dense<0.000000e+00> : vector<8x384xf32>
    %315 = tpu.matmul %313, %273, %cst_97 {dimension_numbers = #tpu.dot_dimension_numbers<[1], [0], [0], [1], [0, 0, 1, 1], [], []>} : vector<8x128xf32>, vector<128x384xf32>, vector<8x384xf32> -> vector<8x384xf32>
    %316 = vector.extract_strided_slice %314 {offsets = [0, 0], sizes = [8, 128], strides = [1, 1]} : vector<8x384xf32> to vector<8x128xf32>
    %317 = vector.extract_strided_slice %315 {offsets = [0, 0], sizes = [8, 128], strides = [1, 1]} : vector<8x384xf32> to vector<8x128xf32>
    %318 = arith.addf %316, %317 : vector<8x128xf32>
    %319 = arith.negf %318 : vector<8x128xf32>
    %320 = math.exp %319 : vector<8x128xf32>
    %cst_98 = arith.constant 1.000000e+00 : f32
    %321 = vector.broadcast %cst_98 : f32 to vector<8x128xf32>
    %322 = arith.addf %321, %320 : vector<8x128xf32>
    %323 = arith.divf %321, %322 : vector<8x128xf32>
    %324 = vector.extract_strided_slice %314 {offsets = [0, 128], sizes = [8, 128], strides = [1, 1]} : vector<8x384xf32> to vector<8x128xf32>
    %325 = vector.extract_strided_slice %315 {offsets = [0, 128], sizes = [8, 128], strides = [1, 1]} : vector<8x384xf32> to vector<8x128xf32>
    %326 = arith.addf %324, %325 : vector<8x128xf32>
    %327 = arith.negf %326 : vector<8x128xf32>
    %328 = math.exp %327 : vector<8x128xf32>
    %cst_99 = arith.constant 1.000000e+00 : f32
    %329 = vector.broadcast %cst_99 : f32 to vector<8x128xf32>
    %330 = arith.addf %329, %328 : vector<8x128xf32>
    %331 = arith.divf %329, %330 : vector<8x128xf32>
    %332 = vector.extract_strided_slice %314 {offsets = [0, 256], sizes = [8, 128], strides = [1, 1]} : vector<8x384xf32> to vector<8x128xf32>
    %333 = vector.extract_strided_slice %315 {offsets = [0, 256], sizes = [8, 128], strides = [1, 1]} : vector<8x384xf32> to vector<8x128xf32>
    %334 = arith.addf %333, %279 : vector<8x128xf32>
    %335 = arith.mulf %323, %334 : vector<8x128xf32>
    %336 = arith.addf %332, %335 : vector<8x128xf32>
    %337 = math.tanh %336 : vector<8x128xf32>
    %cst_100 = arith.constant 1.000000e+00 : f32
    %338 = vector.broadcast %cst_100 : f32 to vector<8x128xf32>
    %339 = arith.subf %338, %331 : vector<8x128xf32>
    %340 = arith.mulf %339, %337 : vector<8x128xf32>
    %341 = arith.mulf %331, %313 : vector<8x128xf32>
    %342 = arith.addf %340, %341 : vector<8x128xf32>
    %c16_101 = arith.constant 16 : index
    %c0_102 = arith.constant 0 : index
    %343 = vector.load %arg5[%c16_101, %c0_102] : memref<64x384xf32, #tpu.memory_space<vmem>>, vector<8x384xf32>
    %cst_103 = arith.constant dense<0.000000e+00> : vector<8x384xf32>
    %344 = tpu.matmul %342, %273, %cst_103 {dimension_numbers = #tpu.dot_dimension_numbers<[1], [0], [0], [1], [0, 0, 1, 1], [], []>} : vector<8x128xf32>, vector<128x384xf32>, vector<8x384xf32> -> vector<8x384xf32>
    %345 = vector.extract_strided_slice %343 {offsets = [0, 0], sizes = [8, 128], strides = [1, 1]} : vector<8x384xf32> to vector<8x128xf32>
    %346 = vector.extract_strided_slice %344 {offsets = [0, 0], sizes = [8, 128], strides = [1, 1]} : vector<8x384xf32> to vector<8x128xf32>
    %347 = arith.addf %345, %346 : vector<8x128xf32>
    %348 = arith.negf %347 : vector<8x128xf32>
    %349 = math.exp %348 : vector<8x128xf32>
    %cst_104 = arith.constant 1.000000e+00 : f32
    %350 = vector.broadcast %cst_104 : f32 to vector<8x128xf32>
    %351 = arith.addf %350, %349 : vector<8x128xf32>
    %352 = arith.divf %350, %351 : vector<8x128xf32>
    %353 = vector.extract_strided_slice %343 {offsets = [0, 128], sizes = [8, 128], strides = [1, 1]} : vector<8x384xf32> to vector<8x128xf32>
    %354 = vector.extract_strided_slice %344 {offsets = [0, 128], sizes = [8, 128], strides = [1, 1]} : vector<8x384xf32> to vector<8x128xf32>
    %355 = arith.addf %353, %354 : vector<8x128xf32>
    %356 = arith.negf %355 : vector<8x128xf32>
    %357 = math.exp %356 : vector<8x128xf32>
    %cst_105 = arith.constant 1.000000e+00 : f32
    %358 = vector.broadcast %cst_105 : f32 to vector<8x128xf32>
    %359 = arith.addf %358, %357 : vector<8x128xf32>
    %360 = arith.divf %358, %359 : vector<8x128xf32>
    %361 = vector.extract_strided_slice %343 {offsets = [0, 256], sizes = [8, 128], strides = [1, 1]} : vector<8x384xf32> to vector<8x128xf32>
    %362 = vector.extract_strided_slice %344 {offsets = [0, 256], sizes = [8, 128], strides = [1, 1]} : vector<8x384xf32> to vector<8x128xf32>
    %363 = arith.addf %362, %279 : vector<8x128xf32>
    %364 = arith.mulf %352, %363 : vector<8x128xf32>
    %365 = arith.addf %361, %364 : vector<8x128xf32>
    %366 = math.tanh %365 : vector<8x128xf32>
    %cst_106 = arith.constant 1.000000e+00 : f32
    %367 = vector.broadcast %cst_106 : f32 to vector<8x128xf32>
    %368 = arith.subf %367, %360 : vector<8x128xf32>
    %369 = arith.mulf %368, %366 : vector<8x128xf32>
    %370 = arith.mulf %360, %342 : vector<8x128xf32>
    %371 = arith.addf %369, %370 : vector<8x128xf32>
    %c24_107 = arith.constant 24 : index
    %c0_108 = arith.constant 0 : index
    %372 = vector.load %arg5[%c24_107, %c0_108] : memref<64x384xf32, #tpu.memory_space<vmem>>, vector<8x384xf32>
    %cst_109 = arith.constant dense<0.000000e+00> : vector<8x384xf32>
    %373 = tpu.matmul %371, %273, %cst_109 {dimension_numbers = #tpu.dot_dimension_numbers<[1], [0], [0], [1], [0, 0, 1, 1], [], []>} : vector<8x128xf32>, vector<128x384xf32>, vector<8x384xf32> -> vector<8x384xf32>
    %374 = vector.extract_strided_slice %372 {offsets = [0, 0], sizes = [8, 128], strides = [1, 1]} : vector<8x384xf32> to vector<8x128xf32>
    %375 = vector.extract_strided_slice %373 {offsets = [0, 0], sizes = [8, 128], strides = [1, 1]} : vector<8x384xf32> to vector<8x128xf32>
    %376 = arith.addf %374, %375 : vector<8x128xf32>
    %377 = arith.negf %376 : vector<8x128xf32>
    %378 = math.exp %377 : vector<8x128xf32>
    %cst_110 = arith.constant 1.000000e+00 : f32
    %379 = vector.broadcast %cst_110 : f32 to vector<8x128xf32>
    %380 = arith.addf %379, %378 : vector<8x128xf32>
    %381 = arith.divf %379, %380 : vector<8x128xf32>
    %382 = vector.extract_strided_slice %372 {offsets = [0, 128], sizes = [8, 128], strides = [1, 1]} : vector<8x384xf32> to vector<8x128xf32>
    %383 = vector.extract_strided_slice %373 {offsets = [0, 128], sizes = [8, 128], strides = [1, 1]} : vector<8x384xf32> to vector<8x128xf32>
    %384 = arith.addf %382, %383 : vector<8x128xf32>
    %385 = arith.negf %384 : vector<8x128xf32>
    %386 = math.exp %385 : vector<8x128xf32>
    %cst_111 = arith.constant 1.000000e+00 : f32
    %387 = vector.broadcast %cst_111 : f32 to vector<8x128xf32>
    %388 = arith.addf %387, %386 : vector<8x128xf32>
    %389 = arith.divf %387, %388 : vector<8x128xf32>
    %390 = vector.extract_strided_slice %372 {offsets = [0, 256], sizes = [8, 128], strides = [1, 1]} : vector<8x384xf32> to vector<8x128xf32>
    %391 = vector.extract_strided_slice %373 {offsets = [0, 256], sizes = [8, 128], strides = [1, 1]} : vector<8x384xf32> to vector<8x128xf32>
    %392 = arith.addf %391, %279 : vector<8x128xf32>
    %393 = arith.mulf %381, %392 : vector<8x128xf32>
    %394 = arith.addf %390, %393 : vector<8x128xf32>
    %395 = math.tanh %394 : vector<8x128xf32>
    %cst_112 = arith.constant 1.000000e+00 : f32
    %396 = vector.broadcast %cst_112 : f32 to vector<8x128xf32>
    %397 = arith.subf %396, %389 : vector<8x128xf32>
    %398 = arith.mulf %397, %395 : vector<8x128xf32>
    %399 = arith.mulf %389, %371 : vector<8x128xf32>
    %400 = arith.addf %398, %399 : vector<8x128xf32>
    %c32_113 = arith.constant 32 : index
    %c0_114 = arith.constant 0 : index
    %401 = vector.load %arg5[%c32_113, %c0_114] : memref<64x384xf32, #tpu.memory_space<vmem>>, vector<8x384xf32>
    %cst_115 = arith.constant dense<0.000000e+00> : vector<8x384xf32>
    %402 = tpu.matmul %400, %273, %cst_115 {dimension_numbers = #tpu.dot_dimension_numbers<[1], [0], [0], [1], [0, 0, 1, 1], [], []>} : vector<8x128xf32>, vector<128x384xf32>, vector<8x384xf32> -> vector<8x384xf32>
    %403 = vector.extract_strided_slice %401 {offsets = [0, 0], sizes = [8, 128], strides = [1, 1]} : vector<8x384xf32> to vector<8x128xf32>
    %404 = vector.extract_strided_slice %402 {offsets = [0, 0], sizes = [8, 128], strides = [1, 1]} : vector<8x384xf32> to vector<8x128xf32>
    %405 = arith.addf %403, %404 : vector<8x128xf32>
    %406 = arith.negf %405 : vector<8x128xf32>
    %407 = math.exp %406 : vector<8x128xf32>
    %cst_116 = arith.constant 1.000000e+00 : f32
    %408 = vector.broadcast %cst_116 : f32 to vector<8x128xf32>
    %409 = arith.addf %408, %407 : vector<8x128xf32>
    %410 = arith.divf %408, %409 : vector<8x128xf32>
    %411 = vector.extract_strided_slice %401 {offsets = [0, 128], sizes = [8, 128], strides = [1, 1]} : vector<8x384xf32> to vector<8x128xf32>
    %412 = vector.extract_strided_slice %402 {offsets = [0, 128], sizes = [8, 128], strides = [1, 1]} : vector<8x384xf32> to vector<8x128xf32>
    %413 = arith.addf %411, %412 : vector<8x128xf32>
    %414 = arith.negf %413 : vector<8x128xf32>
    %415 = math.exp %414 : vector<8x128xf32>
    %cst_117 = arith.constant 1.000000e+00 : f32
    %416 = vector.broadcast %cst_117 : f32 to vector<8x128xf32>
    %417 = arith.addf %416, %415 : vector<8x128xf32>
    %418 = arith.divf %416, %417 : vector<8x128xf32>
    %419 = vector.extract_strided_slice %401 {offsets = [0, 256], sizes = [8, 128], strides = [1, 1]} : vector<8x384xf32> to vector<8x128xf32>
    %420 = vector.extract_strided_slice %402 {offsets = [0, 256], sizes = [8, 128], strides = [1, 1]} : vector<8x384xf32> to vector<8x128xf32>
    %421 = arith.addf %420, %279 : vector<8x128xf32>
    %422 = arith.mulf %410, %421 : vector<8x128xf32>
    %423 = arith.addf %419, %422 : vector<8x128xf32>
    %424 = math.tanh %423 : vector<8x128xf32>
    %cst_118 = arith.constant 1.000000e+00 : f32
    %425 = vector.broadcast %cst_118 : f32 to vector<8x128xf32>
    %426 = arith.subf %425, %418 : vector<8x128xf32>
    %427 = arith.mulf %426, %424 : vector<8x128xf32>
    %428 = arith.mulf %418, %400 : vector<8x128xf32>
    %429 = arith.addf %427, %428 : vector<8x128xf32>
    %c40_119 = arith.constant 40 : index
    %c0_120 = arith.constant 0 : index
    %430 = vector.load %arg5[%c40_119, %c0_120] : memref<64x384xf32, #tpu.memory_space<vmem>>, vector<8x384xf32>
    %cst_121 = arith.constant dense<0.000000e+00> : vector<8x384xf32>
    %431 = tpu.matmul %429, %273, %cst_121 {dimension_numbers = #tpu.dot_dimension_numbers<[1], [0], [0], [1], [0, 0, 1, 1], [], []>} : vector<8x128xf32>, vector<128x384xf32>, vector<8x384xf32> -> vector<8x384xf32>
    %432 = vector.extract_strided_slice %430 {offsets = [0, 0], sizes = [8, 128], strides = [1, 1]} : vector<8x384xf32> to vector<8x128xf32>
    %433 = vector.extract_strided_slice %431 {offsets = [0, 0], sizes = [8, 128], strides = [1, 1]} : vector<8x384xf32> to vector<8x128xf32>
    %434 = arith.addf %432, %433 : vector<8x128xf32>
    %435 = arith.negf %434 : vector<8x128xf32>
    %436 = math.exp %435 : vector<8x128xf32>
    %cst_122 = arith.constant 1.000000e+00 : f32
    %437 = vector.broadcast %cst_122 : f32 to vector<8x128xf32>
    %438 = arith.addf %437, %436 : vector<8x128xf32>
    %439 = arith.divf %437, %438 : vector<8x128xf32>
    %440 = vector.extract_strided_slice %430 {offsets = [0, 128], sizes = [8, 128], strides = [1, 1]} : vector<8x384xf32> to vector<8x128xf32>
    %441 = vector.extract_strided_slice %431 {offsets = [0, 128], sizes = [8, 128], strides = [1, 1]} : vector<8x384xf32> to vector<8x128xf32>
    %442 = arith.addf %440, %441 : vector<8x128xf32>
    %443 = arith.negf %442 : vector<8x128xf32>
    %444 = math.exp %443 : vector<8x128xf32>
    %cst_123 = arith.constant 1.000000e+00 : f32
    %445 = vector.broadcast %cst_123 : f32 to vector<8x128xf32>
    %446 = arith.addf %445, %444 : vector<8x128xf32>
    %447 = arith.divf %445, %446 : vector<8x128xf32>
    %448 = vector.extract_strided_slice %430 {offsets = [0, 256], sizes = [8, 128], strides = [1, 1]} : vector<8x384xf32> to vector<8x128xf32>
    %449 = vector.extract_strided_slice %431 {offsets = [0, 256], sizes = [8, 128], strides = [1, 1]} : vector<8x384xf32> to vector<8x128xf32>
    %450 = arith.addf %449, %279 : vector<8x128xf32>
    %451 = arith.mulf %439, %450 : vector<8x128xf32>
    %452 = arith.addf %448, %451 : vector<8x128xf32>
    %453 = math.tanh %452 : vector<8x128xf32>
    %cst_124 = arith.constant 1.000000e+00 : f32
    %454 = vector.broadcast %cst_124 : f32 to vector<8x128xf32>
    %455 = arith.subf %454, %447 : vector<8x128xf32>
    %456 = arith.mulf %455, %453 : vector<8x128xf32>
    %457 = arith.mulf %447, %429 : vector<8x128xf32>
    %458 = arith.addf %456, %457 : vector<8x128xf32>
    %c48_125 = arith.constant 48 : index
    %c0_126 = arith.constant 0 : index
    %459 = vector.load %arg5[%c48_125, %c0_126] : memref<64x384xf32, #tpu.memory_space<vmem>>, vector<8x384xf32>
    %cst_127 = arith.constant dense<0.000000e+00> : vector<8x384xf32>
    %460 = tpu.matmul %458, %273, %cst_127 {dimension_numbers = #tpu.dot_dimension_numbers<[1], [0], [0], [1], [0, 0, 1, 1], [], []>} : vector<8x128xf32>, vector<128x384xf32>, vector<8x384xf32> -> vector<8x384xf32>
    %461 = vector.extract_strided_slice %459 {offsets = [0, 0], sizes = [8, 128], strides = [1, 1]} : vector<8x384xf32> to vector<8x128xf32>
    %462 = vector.extract_strided_slice %460 {offsets = [0, 0], sizes = [8, 128], strides = [1, 1]} : vector<8x384xf32> to vector<8x128xf32>
    %463 = arith.addf %461, %462 : vector<8x128xf32>
    %464 = arith.negf %463 : vector<8x128xf32>
    %465 = math.exp %464 : vector<8x128xf32>
    %cst_128 = arith.constant 1.000000e+00 : f32
    %466 = vector.broadcast %cst_128 : f32 to vector<8x128xf32>
    %467 = arith.addf %466, %465 : vector<8x128xf32>
    %468 = arith.divf %466, %467 : vector<8x128xf32>
    %469 = vector.extract_strided_slice %459 {offsets = [0, 128], sizes = [8, 128], strides = [1, 1]} : vector<8x384xf32> to vector<8x128xf32>
    %470 = vector.extract_strided_slice %460 {offsets = [0, 128], sizes = [8, 128], strides = [1, 1]} : vector<8x384xf32> to vector<8x128xf32>
    %471 = arith.addf %469, %470 : vector<8x128xf32>
    %472 = arith.negf %471 : vector<8x128xf32>
    %473 = math.exp %472 : vector<8x128xf32>
    %cst_129 = arith.constant 1.000000e+00 : f32
    %474 = vector.broadcast %cst_129 : f32 to vector<8x128xf32>
    %475 = arith.addf %474, %473 : vector<8x128xf32>
    %476 = arith.divf %474, %475 : vector<8x128xf32>
    %477 = vector.extract_strided_slice %459 {offsets = [0, 256], sizes = [8, 128], strides = [1, 1]} : vector<8x384xf32> to vector<8x128xf32>
    %478 = vector.extract_strided_slice %460 {offsets = [0, 256], sizes = [8, 128], strides = [1, 1]} : vector<8x384xf32> to vector<8x128xf32>
    %479 = arith.addf %478, %279 : vector<8x128xf32>
    %480 = arith.mulf %468, %479 : vector<8x128xf32>
    %481 = arith.addf %477, %480 : vector<8x128xf32>
    %482 = math.tanh %481 : vector<8x128xf32>
    %cst_130 = arith.constant 1.000000e+00 : f32
    %483 = vector.broadcast %cst_130 : f32 to vector<8x128xf32>
    %484 = arith.subf %483, %476 : vector<8x128xf32>
    %485 = arith.mulf %484, %482 : vector<8x128xf32>
    %486 = arith.mulf %476, %458 : vector<8x128xf32>
    %487 = arith.addf %485, %486 : vector<8x128xf32>
    %c56_131 = arith.constant 56 : index
    %c0_132 = arith.constant 0 : index
    %488 = vector.load %arg5[%c56_131, %c0_132] : memref<64x384xf32, #tpu.memory_space<vmem>>, vector<8x384xf32>
    %cst_133 = arith.constant dense<0.000000e+00> : vector<8x384xf32>
    %489 = tpu.matmul %487, %273, %cst_133 {dimension_numbers = #tpu.dot_dimension_numbers<[1], [0], [0], [1], [0, 0, 1, 1], [], []>} : vector<8x128xf32>, vector<128x384xf32>, vector<8x384xf32> -> vector<8x384xf32>
    %490 = vector.extract_strided_slice %488 {offsets = [0, 0], sizes = [8, 128], strides = [1, 1]} : vector<8x384xf32> to vector<8x128xf32>
    %491 = vector.extract_strided_slice %489 {offsets = [0, 0], sizes = [8, 128], strides = [1, 1]} : vector<8x384xf32> to vector<8x128xf32>
    %492 = arith.addf %490, %491 : vector<8x128xf32>
    %493 = arith.negf %492 : vector<8x128xf32>
    %494 = math.exp %493 : vector<8x128xf32>
    %cst_134 = arith.constant 1.000000e+00 : f32
    %495 = vector.broadcast %cst_134 : f32 to vector<8x128xf32>
    %496 = arith.addf %495, %494 : vector<8x128xf32>
    %497 = arith.divf %495, %496 : vector<8x128xf32>
    %498 = vector.extract_strided_slice %488 {offsets = [0, 128], sizes = [8, 128], strides = [1, 1]} : vector<8x384xf32> to vector<8x128xf32>
    %499 = vector.extract_strided_slice %489 {offsets = [0, 128], sizes = [8, 128], strides = [1, 1]} : vector<8x384xf32> to vector<8x128xf32>
    %500 = arith.addf %498, %499 : vector<8x128xf32>
    %501 = arith.negf %500 : vector<8x128xf32>
    %502 = math.exp %501 : vector<8x128xf32>
    %cst_135 = arith.constant 1.000000e+00 : f32
    %503 = vector.broadcast %cst_135 : f32 to vector<8x128xf32>
    %504 = arith.addf %503, %502 : vector<8x128xf32>
    %505 = arith.divf %503, %504 : vector<8x128xf32>
    %506 = vector.extract_strided_slice %488 {offsets = [0, 256], sizes = [8, 128], strides = [1, 1]} : vector<8x384xf32> to vector<8x128xf32>
    %507 = vector.extract_strided_slice %489 {offsets = [0, 256], sizes = [8, 128], strides = [1, 1]} : vector<8x384xf32> to vector<8x128xf32>
    %508 = arith.addf %507, %279 : vector<8x128xf32>
    %509 = arith.mulf %497, %508 : vector<8x128xf32>
    %510 = arith.addf %506, %509 : vector<8x128xf32>
    %511 = math.tanh %510 : vector<8x128xf32>
    %cst_136 = arith.constant 1.000000e+00 : f32
    %512 = vector.broadcast %cst_136 : f32 to vector<8x128xf32>
    %513 = arith.subf %512, %505 : vector<8x128xf32>
    %514 = arith.mulf %513, %511 : vector<8x128xf32>
    %515 = arith.mulf %505, %487 : vector<8x128xf32>
    %516 = arith.addf %514, %515 : vector<8x128xf32>
    %c280 = arith.constant 280 : index
    %c0_137 = arith.constant 0 : index
    %517 = vector.load %arg3[%c280, %c0_137] : memref<416x128xf32, #tpu.memory_space<vmem>>, vector<128x128xf32>
    %cst_138 = arith.constant dense<0.000000e+00> : vector<8x128xf32>
    %518 = tpu.matmul %516, %517, %cst_138 {dimension_numbers = #tpu.dot_dimension_numbers<[1], [0], [0], [1], [0, 0, 1, 1], [], []>} : vector<8x128xf32>, vector<128x128xf32>, vector<8x128xf32> -> vector<8x128xf32>
    %519 = vector.broadcast %3 : vector<1x128xf32> to vector<8x128xf32>
    %520 = arith.addf %518, %519 : vector<8x128xf32>
    %c24_139 = arith.constant 24 : index
    %c0_140 = arith.constant 0 : index
    %521 = vector.load %arg3[%c24_139, %c0_140] : memref<416x128xf32, #tpu.memory_space<vmem>>, vector<128x128xf32>
    %cst_141 = arith.constant dense<0.000000e+00> : vector<8x128xf32>
    %522 = tpu.matmul %12, %521, %cst_141 {dimension_numbers = #tpu.dot_dimension_numbers<[1], [0], [0], [1], [0, 0, 1, 1], [], []>} : vector<8x128xf32>, vector<128x128xf32>, vector<8x128xf32> -> vector<8x128xf32>
    %c152 = arith.constant 152 : index
    %c0_142 = arith.constant 0 : index
    %523 = vector.load %arg3[%c152, %c0_142] : memref<416x128xf32, #tpu.memory_space<vmem>>, vector<128x128xf32>
    %cst_143 = arith.constant dense<0.000000e+00> : vector<8x128xf32>
    %524 = tpu.matmul %520, %523, %cst_143 {dimension_numbers = #tpu.dot_dimension_numbers<[1], [0], [0], [1], [0, 0, 1, 1], [], []>} : vector<8x128xf32>, vector<128x128xf32>, vector<8x128xf32> -> vector<8x128xf32>
    %525 = arith.addf %522, %524 : vector<8x128xf32>
    %526 = vector.broadcast %2 : vector<1x128xf32> to vector<8x128xf32>
    %527 = arith.addf %525, %526 : vector<8x128xf32>
    %cst_144 = arith.constant 0.000000e+00 : f32
    %528 = vector.broadcast %cst_144 : f32 to vector<8x128xf32>
    %529 = arith.maximumf %527, %528 : vector<8x128xf32>
    %530 = vector.broadcast %4 : vector<1x128xf32> to vector<8x128xf32>
    %531 = arith.mulf %529, %530 : vector<8x128xf32>
    %cst_145 = arith.constant dense<0.000000e+00> : vector<8xf32>
    %532 = vector.multi_reduction <add>, %531, %cst_145 [1] : vector<8x128xf32> to vector<8xf32>
    %533 = vector.shape_cast %532 : vector<8xf32> to vector<8x1xf32>
    %534 = vector.broadcast %5 : vector<1x1xf32> to vector<8x1xf32>
    %535 = arith.addf %533, %534 : vector<8x1xf32>
    %c0_146 = arith.constant 0 : index
    %c0_147 = arith.constant 0 : index
    %536 = vector.load %arg4[%c0_146, %c0_147] : memref<8x1xf32, #tpu.memory_space<vmem>>, vector<8x1xf32>
    tpu.vector_store %arg4[%c0_146, %c0_147], %535 {strides = array<i32>} : memref<8x1xf32, #tpu.memory_space<vmem>>, vector<8x1xf32>,
    return
  }
}

</mosaic_0001>

<llo_original>
// kernel: forward.1
$region0: #{forward.1}
  #allocation0 [shape = 'u32[]', space=smem, size = 0x4, offset = 0x4, fixed_abs, tag = 'smem constant byte address 0x4 - core index']
  #allocation1 [shape = 'u32[144,128]{1,0:T(1,128)}', space=vmem, size = 0x12000, scoped, tag = 'internal scratch']
  #allocation2 [shape = 'f32[64,384]{1,0:T(8,128)}', space=vmem, size = 0x18000, scoped, tag = 'scratch operand']
  #allocation3 [shape = 'f32[64,128]{1,0:T(8,128)}', space=vmem, size = 0x8000, scoped, tag = 'scratch operand']
  %s0 = inlined_call_operand.vmem [shape: f32[8,24], index: 0, kind: input, shape index: {}]
  %s1 = inlined_call_operand.vmem [shape: f32[64,128], index: 1, kind: input, shape index: {}]
  %s2 = inlined_call_operand.hbm [shape: f32[2,264,384], index: 2, kind: input, shape index: {}]
  %s3 = inlined_call_operand.hbm [shape: f32[416,128], index: 3, kind: input, shape index: {}]
  %s4 = inlined_call_operand.vmem [shape: f32[8,1], index: 4, kind: output, shape index: {}]
  %s5 = sld [smem:[#allocation0]]
  $region34: #{forward.1} parent=0
    _
  %s7 = ssub.s32 1, %s5
  %s8 = scalar_select 0, %s7, %s5
  $region1: #{forward.1} parent=0
    #allocation4 [shape = 'u8[811008]{0}', space=vmem, size = 0xc6000, scoped, tag = 'input window, operand 2, single buffered']
    #allocation5 [shape = 's32[1]{0}', space=sflag, size = 0x4, scoped, tag = 'scoped memory for forward.1']
    #allocation6 [shape = 'u8[212992]{0}', space=vmem, size = 0x34000, scoped, tag = 'input window, operand 3, single buffered']
    #allocation7 [shape = 's32[1]{0}', space=sflag, size = 0x4, scoped, tag = 'scoped memory for forward.1']
    %9 = vsyncpa [#allocation5], 0
    %10 = vsyncpa [#allocation7], 0
    // Predicated region
    $region2: #{forward.1} parent=1 // pred_check
      _
    $region3: #{forward.1} parent=1 // pred_check_branch
      %12 = sbr.rel (0) target = $region5
    $region4: #{forward.1} parent=1 // pred_region
      _
    $region5: #{forward.1} parent=1 // pred_fallthru
      _
    // Predicated region
    $region6: #{forward.1} parent=1 // pred_check
      _
    $region7: #{forward.1} parent=1 // pred_check_branch
      %14 = sbr.rel (0) target = $region9
    $region8: #{forward.1} parent=1 // pred_region
      _
    $region9: #{forward.1} parent=1 // pred_fallthru
      _
    // Predicated region
    $region10: #{forward.1} parent=1 // pred_check
      _
    $region11: #{forward.1} parent=1 // pred_check_branch
      %16 = sbr.rel (0) target = $region13
    $region12: #{forward.1} parent=1 // pred_region
      %s18 = ssub.s32 25344, 25344
      %19 = vsyncadd [#allocation5], %s18
      %s20 = sshll.u32 [#allocation4], 4
      %s21 = int_to_ptr.vmem [resolvable:$true] %s20
      %26 = dma.hbm_to_vmem [thread:$0]  %s2, 25344, %s21, [#allocation5], 384, 384, 24
    $region13: #{forward.1} parent=1 // pred_fallthru
      _
    // Predicated region
    $region14: #{forward.1} parent=1 // pred_check
      _
    $region15: #{forward.1} parent=1 // pred_check_branch
      %28 = sbr.rel (0) target = $region17
    $region16: #{forward.1} parent=1 // pred_region
      %s30 = ssub.s32 6656, 6656
      %31 = vsyncadd [#allocation7], %s30
      %s32 = sshll.u32 [#allocation6], 4
      %s33 = int_to_ptr.vmem [resolvable:$true] %s32
      %38 = dma.hbm_to_vmem [thread:$0]  %s3, 6656, %s33, [#allocation7], 128, 128, 8
    $region17: #{forward.1} parent=1 // pred_fallthru
      _
    // Predicated region
    $region18: #{forward.1} parent=1 // pred_check
      _
    $region19: #{forward.1} parent=1 // pred_check_branch
      %40 = sbr.rel (0) target = $region21
    $region20: #{forward.1} parent=1 // pred_region
      %41 = dma.done [#allocation5], 25344
    $region21: #{forward.1} parent=1 // pred_fallthru
      _
    // Predicated region
    $region22: #{forward.1} parent=1 // pred_check
      _
    $region23: #{forward.1} parent=1 // pred_check_branch
      %43 = sbr.rel (0) target = $region25
    $region24: #{forward.1} parent=1 // pred_region
      %44 = dma.done [#allocation7], 6656
    $region25: #{forward.1} parent=1 // pred_fallthru
      _
    %v45 = vld [vmem:[#allocation6 + $0x198] sm:$0xff]
    %v46 = vld [vmem:[%s0] sm:$0xff]
    %v47 = vld [vmem:[#allocation6] sm:$0xff]
    %v48 = vld [vmem:[#allocation6 + $0x8] sm:$0xff]
    %v49 = vld [vmem:[#allocation6 + $0x10] sm:$0xff]
    %v50 = vlaneseq
    %v51 = vshrl.u32 %v50, 7
    %v52 = vsub.s32 0, %v51
    %v53 = vrot.slane %v45, %v52
    %vm54 = vcmask 195584
    %v56 = vsel %vm54, %v46, 0
    %58 = vmatprep.subr.mxu0 0.0
    %59 = vmatpush1.msra.mxu0 0.0
    %60 = vmatprep.subr.mxu0 0.0
    %61 = vmatpush1.msra.mxu0 0.0
    %62 = vmatprep.subr.mxu0 0.0
    %63 = vmatpush1.msra.mxu0 0.0
    %64 = vmatprep.subr.mxu0 0.0
    %65 = vmatpush1.msra.mxu0 0.0
    %66 = vmatprep.subr.mxu0 0.0
    %67 = vmatpush1.msra.mxu0 0.0
    %68 = vmatprep.subr.mxu0 0.0
    %69 = vmatpush1.msra.mxu0 0.0
    %70 = vmatprep.subr.mxu0 0.0
    %71 = vmatpush1.msra.mxu0 0.0
    %72 = vmatprep.subr.mxu0 0.0
    %73 = vmatpush1.msra.mxu0 0.0
    %74 = vmatprep.subr.mxu0 0.0
    %75 = vmatpush1.msra.mxu0 0.0
    %76 = vmatprep.subr.mxu0 0.0
    %77 = vmatpush1.msra.mxu0 0.0
    %78 = vmatprep.subr.mxu0 0.0
    %79 = vmatpush1.msra.mxu0 0.0
    %80 = vmatprep.subr.mxu0 0.0
    %81 = vmatpush1.msra.mxu0 0.0
    %82 = vmatprep.subr.mxu0 0.0
    %83 = vmatpush1.msra.mxu0 0.0
    %84 = vmatprep.subr.mxu0 0.0
    %85 = vmatpush1.msra.mxu0 %v49
    %86 = vmatprep.subr.mxu0 0.0
    %87 = vmatpush1.msra.mxu0 %v48
    %88 = vmatprep.subr.mxu0 0.0
    %89 = vmatpush1.msra.mxu0 %v47
    %90 = vmatprep.subr.mxu0 0.0
    %91 = vmatpush2.msra.mxu0 0.0
    %92 = vmatprep.subr.mxu0 0.0
    %93 = vmatpush2.msra.mxu0 0.0
    %94 = vmatprep.subr.mxu0 0.0
    %95 = vmatpush2.msra.mxu0 0.0
    %96 = vmatprep.subr.mxu0 0.0
    %97 = vmatpush2.msra.mxu0 0.0
    %98 = vmatprep.subr.mxu0 0.0
    %99 = vmatpush2.msra.mxu0 0.0
    %100 = vmatprep.subr.mxu0 0.0
    %101 = vmatpush2.msra.mxu0 0.0
    %102 = vmatprep.subr.mxu0 0.0
    %103 = vmatpush2.msra.mxu0 0.0
    %104 = vmatprep.subr.mxu0 0.0
    %105 = vmatpush2.msra.mxu0 0.0
    %106 = vmatprep.subr.mxu0 0.0
    %107 = vmatpush2.msra.mxu0 0.0
    %108 = vmatprep.subr.mxu0 0.0
    %109 = vmatpush2.msra.mxu0 0.0
    %110 = vmatprep.subr.mxu0 0.0
    %111 = vmatpush2.msra.mxu0 0.0
    %112 = vmatprep.subr.mxu0 0.0
    %113 = vmatpush2.msra.mxu0 0.0
    %114 = vmatprep.subr.mxu0 0.0
    %115 = vmatpush2.msra.mxu0 0.0
    %116 = vmatprep.subr.mxu0 0.0
    %117 = vmatpush2.msra.mxu0 0.0
    %118 = vmatprep.subr.mxu0 0.0
    %119 = vmatpush2.msra.mxu0 0.0
    %120 = vmatprep.subr.mxu0 0.0
    %121 = vmatpush2.msra.mxu0 0.0
    %122 = vmatprep.mubr.f32.mxu0 0.0
    %123 = vmatmul.mubr.f32.gmra.mxu0 %v56
    %v124 = vpop.f32.mrf.mxu0
    %v125 = vadd.f32 %v53, %v124
    %v126 = vpop.f32.mrf.mxu0
    %127 = vdwg.mxu0
    %v128 = vmax.f32 %v125, 0.0
    %v129 = vld [vmem:[%s1] sm:$0xff]
    %v130 = vld [vmem:[%s1 + $0x8] sm:$0xff]
    %v131 = vld [vmem:[%s1 + $0x10] sm:$0xff]
    %v132 = vld [vmem:[%s1 + $0x18] sm:$0xff]
    %v133 = vld [vmem:[%s1 + $0x20] sm:$0xff]
    %v134 = vld [vmem:[%s1 + $0x28] sm:$0xff]
    %v135 = vld [vmem:[%s1 + $0x30] sm:$0xff]
    %v136 = vld [vmem:[%s1 + $0x38] sm:$0xff]
    %v137 = vld [vmem:[#allocation4] sm:$0xff]
    %v138 = vld [vmem:[#allocation4 + $0x8] sm:$0xff]
    %v139 = vld [vmem:[#allocation4 + $0x10] sm:$0xff]
    %v140 = vld [vmem:[#allocation4 + $0x18] sm:$0xff]
    %v141 = vld [vmem:[#allocation4 + $0x20] sm:$0xff]
    %v142 = vld [vmem:[#allocation4 + $0x28] sm:$0xff]
    %v143 = vld [vmem:[#allocation4 + $0x30] sm:$0xff]
    %v144 = vld [vmem:[#allocation4 + $0x38] sm:$0xff]
    %v145 = vld [vmem:[#allocation4 + $0x40] sm:$0xff]
    %v146 = vld [vmem:[#allocation4 + $0x48] sm:$0xff]
    %v147 = vld [vmem:[#allocation4 + $0x50] sm:$0xff]
    %v148 = vld [vmem:[#allocation4 + $0x58] sm:$0xff]
    %v149 = vld [vmem:[#allocation4 + $0x60] sm:$0xff]
    %v150 = vld [vmem:[#allocation4 + $0x68] sm:$0xff]
    %v151 = vld [vmem:[#allocation4 + $0x70] sm:$0xff]
    %v152 = vld [vmem:[#allocation4 + $0x78] sm:$0xff]
    %v153 = vld [vmem:[#allocation4 + $0x80] sm:$0xff]
    %v154 = vld [vmem:[#allocation4 + $0x88] sm:$0xff]
    %v155 = vld [vmem:[#allocation4 + $0x90] sm:$0xff]
    %v156 = vld [vmem:[#allocation4 + $0x98] sm:$0xff]
    %v157 = vld [vmem:[#allocation4 + $0xa0] sm:$0xff]
    %v158 = vld [vmem:[#allocation4 + $0xa8] sm:$0xff]
    %v159 = vld [vmem:[#allocation4 + $0xb0] sm:$0xff]
    %v160 = vld [vmem:[#allocation4 + $0xb8] sm:$0xff]
    %v161 = vld [vmem:[#allocation4 + $0xc0] sm:$0xff]
    %v162 = vld [vmem:[#allocation4 + $0xc8] sm:$0xff]
    %v163 = vld [vmem:[#allocation4 + $0xd0] sm:$0xff]
    %v164 = vld [vmem:[#allocation4 + $0xd8] sm:$0xff]
    %v165 = vld [vmem:[#allocation4 + $0xe0] sm:$0xff]
    %v166 = vld [vmem:[#allocation4 + $0xe8] sm:$0xff]
    %v167 = vld [vmem:[#allocation4 + $0xf0] sm:$0xff]
    %v168 = vld [vmem:[#allocation4 + $0xf8] sm:$0xff]
    %v169 = vld [vmem:[#allocation4 + $0x100] sm:$0xff]
    %v170 = vld [vmem:[#allocation4 + $0x108] sm:$0xff]
    %v171 = vld [vmem:[#allocation4 + $0x110] sm:$0xff]
    %v172 = vld [vmem:[#allocation4 + $0x118] sm:$0xff]
    %v173 = vld [vmem:[#allocation4 + $0x120] sm:$0xff]
    %v174 = vld [vmem:[#allocation4 + $0x128] sm:$0xff]
    %v175 = vld [vmem:[#allocation4 + $0x130] sm:$0xff]
    %v176 = vld [vmem:[#allocation4 + $0x138] sm:$0xff]
    %v177 = vld [vmem:[#allocation4 + $0x140] sm:$0xff]
    %v178 = vld [vmem:[#allocation4 + $0x148] sm:$0xff]
    %v179 = vld [vmem:[#allocation4 + $0x150] sm:$0xff]
    %v180 = vld [vmem:[#allocation4 + $0x158] sm:$0xff]
    %v181 = vld [vmem:[#allocation4 + $0x160] sm:$0xff]
    %v182 = vld [vmem:[#allocation4 + $0x168] sm:$0xff]
    %v183 = vld [vmem:[#allocation4 + $0x170] sm:$0xff]
    %v184 = vld [vmem:[#allocation4 + $0x178] sm:$0xff]
    %v185 = vld [vmem:[#allocation4 + $0x180] sm:$0xff]
    %v186 = vld [vmem:[#allocation4 + $0x188] sm:$0xff]
    %v187 = vld [vmem:[#allocation4 + $0x190] sm:$0xff]
    %v188 = vld [vmem:[#allocation4 + $0x198] sm:$0xff]
    %v189 = vld [vmem:[#allocation4 + $0x1a0] sm:$0xff]
    %v190 = vld [vmem:[#allocation4 + $0x1a8] sm:$0xff]
    %v191 = vld [vmem:[#allocation4 + $0x1b0] sm:$0xff]
    %v192 = vld [vmem:[#allocation4 + $0x1b8] sm:$0xff]
    %v193 = vld [vmem:[#allocation4 + $0x1c0] sm:$0xff]
    %v194 = vld [vmem:[#allocation4 + $0x1c8] sm:$0xff]
    %v195 = vld [vmem:[#allocation4 + $0x1d0] sm:$0xff]
    %v196 = vld [vmem:[#allocation4 + $0x1d8] sm:$0xff]
    %v197 = vld [vmem:[#allocation4 + $0x1e0] sm:$0xff]
    %v198 = vld [vmem:[#allocation4 + $0x1e8] sm:$0xff]
    %v199 = vld [vmem:[#allocation4 + $0x1f0] sm:$0xff]
    %v200 = vld [vmem:[#allocation4 + $0x1f8] sm:$0xff]
    %v201 = vld [vmem:[#allocation4 + $0x200] sm:$0xff]
    %v202 = vld [vmem:[#allocation4 + $0x208] sm:$0xff]
    %v203 = vld [vmem:[#allocation4 + $0x210] sm:$0xff]
    %v204 = vld [vmem:[#allocation4 + $0x218] sm:$0xff]
    %v205 = vld [vmem:[#allocation4 + $0x220] sm:$0xff]
    %v206 = vld [vmem:[#allocation4 + $0x228] sm:$0xff]
    %v207 = vld [vmem:[#allocation4 + $0x230] sm:$0xff]
    %v208 = vld [vmem:[#allocation4 + $0x238] sm:$0xff]
    %v209 = vld [vmem:[#allocation4 + $0x240] sm:$0xff]
    %v210 = vld [vmem:[#allocation4 + $0x248] sm:$0xff]
    %v211 = vld [vmem:[#allocation4 + $0x250] sm:$0xff]
    %v212 = vld [vmem:[#allocation4 + $0x258] sm:$0xff]
    %v213 = vld [vmem:[#allocation4 + $0x260] sm:$0xff]
    %v214 = vld [vmem:[#allocation4 + $0x268] sm:$0xff]
    %v215 = vld [vmem:[#allocation4 + $0x270] sm:$0xff]
    %v216 = vld [vmem:[#allocation4 + $0x278] sm:$0xff]
    %v217 = vld [vmem:[#allocation4 + $0x280] sm:$0xff]
    %v218 = vld [vmem:[#allocation4 + $0x288] sm:$0xff]
    %v219 = vld [vmem:[#allocation4 + $0x290] sm:$0xff]
    %v220 = vld [vmem:[#allocation4 + $0x298] sm:$0xff]
    %v221 = vld [vmem:[#allocation4 + $0x2a0] sm:$0xff]
    %v222 = vld [vmem:[#allocation4 + $0x2a8] sm:$0xff]
    %v223 = vld [vmem:[#allocation4 + $0x2b0] sm:$0xff]
    %v224 = vld [vmem:[#allocation4 + $0x2b8] sm:$0xff]
    %v225 = vld [vmem:[#allocation4 + $0x2c0] sm:$0xff]
    %v226 = vld [vmem:[#allocation4 + $0x2c8] sm:$0xff]
    %v227 = vld [vmem:[#allocation4 + $0x2d0] sm:$0xff]
    %v228 = vld [vmem:[#allocation4 + $0x2d8] sm:$0xff]
    %v229 = vld [vmem:[#allocation4 + $0x2e0] sm:$0xff]
    %v230 = vld [vmem:[#allocation4 + $0x2e8] sm:$0xff]
    %v231 = vld [vmem:[#allocation4 + $0x2f0] sm:$0xff]
    %v232 = vld [vmem:[#allocation4 + $0x2f8] sm:$0xff]
    %v233 = vld [vmem:[#allocation4 + $0x300] sm:$0xff]
    %v234 = vld [vmem:[#allocation4 + $0x308] sm:$0xff]
    %v235 = vld [vmem:[#allocation4 + $0x310] sm:$0xff]
    %v236 = vlaneseq
    %v237 = vshrl.u32 %v236, 7
    %v238 = vsub.s32 1, %v237
    %v239 = vrot.slane %v235, %v238
    %v240 = vlaneseq
    %v241 = vshrl.u32 %v240, 7
    %v242 = vsub.s32 0, %v241
    %v243 = vrot.slane %v233, %v242
    %v244 = vlaneseq
    %v245 = vshrl.u32 %v244, 7
    %v246 = vsub.s32 0, %v245
    %v247 = vrot.slane %v234, %v246
    %v248 = vlaneseq
    %v249 = vshrl.u32 %v248, 7
    %v250 = vsub.s32 0, %v249
    %v251 = vrot.slane %v235, %v250
    %252 = vmatprep.subr.mxu0 %v183
    %253 = vmatpush1.msra.mxu0 %v182
    %254 = vmatprep.subr.mxu0 %v180
    %255 = vmatpush1.msra.mxu0 %v179
    %256 = vmatprep.subr.mxu0 %v177
    %257 = vmatpush1.msra.mxu0 %v176
    %258 = vmatprep.subr.mxu0 %v174
    %259 = vmatpush1.msra.mxu0 %v173
    %260 = vmatprep.subr.mxu0 %v171
    %261 = vmatpush1.msra.mxu0 %v170
    %262 = vmatprep.subr.mxu0 %v168
    %263 = vmatpush1.msra.mxu0 %v167
    %264 = vmatprep.subr.mxu0 %v165
    %265 = vmatpush1.msra.mxu0 %v164
    %266 = vmatprep.subr.mxu0 %v162
    %267 = vmatpush1.msra.mxu0 %v161
    %268 = vmatprep.subr.mxu0 %v159
    %269 = vmatpush1.msra.mxu0 %v158
    %270 = vmatprep.subr.mxu0 %v156
    %271 = vmatpush1.msra.mxu0 %v155
    %272 = vmatprep.subr.mxu0 %v153
    %273 = vmatpush1.msra.mxu0 %v152
    %274 = vmatprep.subr.mxu0 %v150
    %275 = vmatpush1.msra.mxu0 %v149
    %276 = vmatprep.subr.mxu0 %v147
    %277 = vmatpush1.msra.mxu0 %v146
    %278 = vmatprep.subr.mxu0 %v144
    %279 = vmatpush1.msra.mxu0 %v143
    %280 = vmatprep.subr.mxu0 %v141
    %281 = vmatpush1.msra.mxu0 %v140
    %282 = vmatprep.subr.mxu0 %v138
    %283 = vmatpush1.msra.mxu0 %v137
    %284 = vmatprep.subr.mxu0 0.0
    %285 = vmatpush2.msra.mxu0 0.0
    %286 = vmatprep.subr.mxu0 0.0
    %287 = vmatpush2.msra.mxu0 0.0
    %288 = vmatprep.subr.mxu0 0.0
    %289 = vmatpush2.msra.mxu0 0.0
    %290 = vmatprep.subr.mxu0 0.0
    %291 = vmatpush2.msra.mxu0 0.0
    %292 = vmatprep.subr.mxu0 0.0
    %293 = vmatpush2.msra.mxu0 0.0
    %294 = vmatprep.subr.mxu0 0.0
    %295 = vmatpush2.msra.mxu0 0.0
    %296 = vmatprep.subr.mxu0 0.0
    %297 = vmatpush2.msra.mxu0 0.0
    %298 = vmatprep.subr.mxu0 0.0
    %299 = vmatpush2.msra.mxu0 0.0
    %300 = vmatprep.subr.mxu0 0.0
    %301 = vmatpush2.msra.mxu0 0.0
    %302 = vmatprep.subr.mxu0 0.0
    %303 = vmatpush2.msra.mxu0 0.0
    %304 = vmatprep.subr.mxu0 0.0
    %305 = vmatpush2.msra.mxu0 0.0
    %306 = vmatprep.subr.mxu0 0.0
    %307 = vmatpush2.msra.mxu0 0.0
    %308 = vmatprep.subr.mxu0 0.0
    %309 = vmatpush2.msra.mxu0 0.0
    %310 = vmatprep.subr.mxu0 0.0
    %311 = vmatpush2.msra.mxu0 0.0
    %312 = vmatprep.subr.mxu0 0.0
    %313 = vmatpush2.msra.mxu0 0.0
    %314 = vmatprep.subr.mxu0 0.0
    %315 = vmatpush2.msra.mxu0 0.0
    %316 = vmatprep.mubr.f32.mxu0 0.0
    %317 = vmatmul.mubr.f32.gmra.mxu0 %v129
    %v318 = vpop.f32.mrf.mxu0
    %v319 = vadd.f32 %v243, %v318
    %v320 = vpop.f32.mrf.mxu0
    %v321 = vadd.f32 %v247, %v320
    %322 = vmatprep.mubr.f32.mxu0 0.0
    %323 = vmatmul.mubr.f32.gmra.mxu0 %v130
    %v324 = vpop.f32.mrf.mxu0
    %v325 = vadd.f32 %v243, %v324
    %v326 = vpop.f32.mrf.mxu0
    %v327 = vadd.f32 %v247, %v326
    %328 = vmatprep.mubr.f32.mxu0 0.0
    %329 = vmatmul.mubr.f32.gmra.mxu0 %v131
    %v330 = vpop.f32.mrf.mxu0
    %v331 = vadd.f32 %v243, %v330
    %v332 = vpop.f32.mrf.mxu0
    %v333 = vadd.f32 %v247, %v332
    %334 = vmatprep.mubr.f32.mxu0 0.0
    %335 = vmatmul.mubr.f32.gmra.mxu0 %v132
    %v336 = vpop.f32.mrf.mxu0
    %v337 = vadd.f32 %v243, %v336
    %v338 = vpop.f32.mrf.mxu0
    %v339 = vadd.f32 %v247, %v338
    %340 = vmatprep.mubr.f32.mxu0 0.0
    %341 = vmatmul.mubr.f32.gmra.mxu0 %v133
    %v342 = vpop.f32.mrf.mxu0
    %v343 = vadd.f32 %v243, %v342
    %v344 = vpop.f32.mrf.mxu0
    %v345 = vadd.f32 %v247, %v344
    %346 = vmatprep.mubr.f32.mxu0 0.0
    %347 = vmatmul.mubr.f32.gmra.mxu0 %v134
    %v348 = vpop.f32.mrf.mxu0
    %v349 = vadd.f32 %v243, %v348
    %v350 = vpop.f32.mrf.mxu0
    %v351 = vadd.f32 %v247, %v350
    %352 = vmatprep.mubr.f32.mxu0 0.0
    %353 = vmatmul.mubr.f32.gmra.mxu0 %v135
    %v354 = vpop.f32.mrf.mxu0
    %v355 = vadd.f32 %v243, %v354
    %v356 = vpop.f32.mrf.mxu0
    %v357 = vadd.f32 %v247, %v356
    %358 = vmatprep.mubr.f32.mxu0 0.0
    %359 = vmatmul.mubr.f32.gmra.mxu0 %v136
    %v360 = vpop.f32.mrf.mxu0
    %v361 = vadd.f32 %v243, %v360
    %v362 = vpop.f32.mrf.mxu0
    %v363 = vadd.f32 %v247, %v362
    %364 = vdwg.mxu0
    %365 = vmatprep.subr.mxu0 0.0
    %366 = vmatpush1.msra.mxu0 %v184
    %367 = vmatprep.subr.mxu0 0.0
    %368 = vmatpush1.msra.mxu0 %v181
    %369 = vmatprep.subr.mxu0 0.0
    %370 = vmatpush1.msra.mxu0 %v178
    %371 = vmatprep.subr.mxu0 0.0
    %372 = vmatpush1.msra.mxu0 %v175
    %373 = vmatprep.subr.mxu0 0.0
    %374 = vmatpush1.msra.mxu0 %v172
    %375 = vmatprep.subr.mxu0 0.0
    %376 = vmatpush1.msra.mxu0 %v169
    %377 = vmatprep.subr.mxu0 0.0
    %378 = vmatpush1.msra.mxu0 %v166
    %379 = vmatprep.subr.mxu0 0.0
    %380 = vmatpush1.msra.mxu0 %v163
    %381 = vmatprep.subr.mxu0 0.0
    %382 = vmatpush1.msra.mxu0 %v160
    %383 = vmatprep.subr.mxu0 0.0
    %384 = vmatpush1.msra.mxu0 %v157
    %385 = vmatprep.subr.mxu0 0.0
    %386 = vmatpush1.msra.mxu0 %v154
    %387 = vmatprep.subr.mxu0 0.0
    %388 = vmatpush1.msra.mxu0 %v151
    %389 = vmatprep.subr.mxu0 0.0
    %390 = vmatpush1.msra.mxu0 %v148
    %391 = vmatprep.subr.mxu0 0.0
    %392 = vmatpush1.msra.mxu0 %v145
    %393 = vmatprep.subr.mxu0 0.0
    %394 = vmatpush1.msra.mxu0 %v142
    %395 = vmatprep.subr.mxu0 0.0
    %396 = vmatpush1.msra.mxu0 %v139
    %397 = vmatprep.subr.mxu0 0.0
    %398 = vmatpush2.msra.mxu0 0.0
    %399 = vmatprep.subr.mxu0 0.0
    %400 = vmatpush2.msra.mxu0 0.0
    %401 = vmatprep.subr.mxu0 0.0
    %402 = vmatpush2.msra.mxu0 0.0
    %403 = vmatprep.subr.mxu0 0.0
    %404 = vmatpush2.msra.mxu0 0.0
    %405 = vmatprep.subr.mxu0 0.0
    %406 = vmatpush2.msra.mxu0 0.0
    %407 = vmatprep.subr.mxu0 0.0
    %408 = vmatpush2.msra.mxu0 0.0
    %409 = vmatprep.subr.mxu0 0.0
    %410 = vmatpush2.msra.mxu0 0.0
    %411 = vmatprep.subr.mxu0 0.0
    %412 = vmatpush2.msra.mxu0 0.0
    %413 = vmatprep.subr.mxu0 0.0
    %414 = vmatpush2.msra.mxu0 0.0
    %415 = vmatprep.subr.mxu0 0.0
    %416 = vmatpush2.msra.mxu0 0.0
    %417 = vmatprep.subr.mxu0 0.0
    %418 = vmatpush2.msra.mxu0 0.0
    %419 = vmatprep.subr.mxu0 0.0
    %420 = vmatpush2.msra.mxu0 0.0
    %421 = vmatprep.subr.mxu0 0.0
    %422 = vmatpush2.msra.mxu0 0.0
    %423 = vmatprep.subr.mxu0 0.0
    %424 = vmatpush2.msra.mxu0 0.0
    %425 = vmatprep.subr.mxu0 0.0
    %426 = vmatpush2.msra.mxu0 0.0
    %427 = vmatprep.subr.mxu0 0.0
    %428 = vmatpush2.msra.mxu0 0.0
    %429 = vmatprep.mubr.f32.mxu0 0.0
    %430 = vmatmul.mubr.f32.gmra.mxu0 %v129
    %v431 = vpop.f32.mrf.mxu0
    %v432 = vadd.f32 %v251, %v431
    %v433 = vpop.f32.mrf.mxu0
    %434 = vmatprep.mubr.f32.mxu0 0.0
    %435 = vmatmul.mubr.f32.gmra.mxu0 %v130
    %v436 = vpop.f32.mrf.mxu0
    %v437 = vadd.f32 %v251, %v436
    %v438 = vpop.f32.mrf.mxu0
    %439 = vmatprep.mubr.f32.mxu0 0.0
    %440 = vmatmul.mubr.f32.gmra.mxu0 %v131
    %v441 = vpop.f32.mrf.mxu0
    %v442 = vadd.f32 %v251, %v441
    %v443 = vpop.f32.mrf.mxu0
    %444 = vmatprep.mubr.f32.mxu0 0.0
    %445 = vmatmul.mubr.f32.gmra.mxu0 %v132
    %v446 = vpop.f32.mrf.mxu0
    %v447 = vadd.f32 %v251, %v446
    %v448 = vpop.f32.mrf.mxu0
    %449 = vmatprep.mubr.f32.mxu0 0.0
    %450 = vmatmul.mubr.f32.gmra.mxu0 %v133
    %v451 = vpop.f32.mrf.mxu0
    %v452 = vadd.f32 %v251, %v451
    %v453 = vpop.f32.mrf.mxu0
    %454 = vmatprep.mubr.f32.mxu0 0.0
    %455 = vmatmul.mubr.f32.gmra.mxu0 %v134
    %v456 = vpop.f32.mrf.mxu0
    %v457 = vadd.f32 %v251, %v456
    %v458 = vpop.f32.mrf.mxu0
    %459 = vmatprep.mubr.f32.mxu0 0.0
    %460 = vmatmul.mubr.f32.gmra.mxu0 %v135
    %v461 = vpop.f32.mrf.mxu0
    %v462 = vadd.f32 %v251, %v461
    %v463 = vpop.f32.mrf.mxu0
    %464 = vmatprep.mubr.f32.mxu0 0.0
    %465 = vmatmul.mubr.f32.gmra.mxu0 %v136
    %v466 = vpop.f32.mrf.mxu0
    %v467 = vadd.f32 %v251, %v466
    %v468 = vpop.f32.mrf.mxu0
    %469 = vdwg.mxu0
    %470 = vst [vmem:[#allocation2] sm:$0xff] %v319
    %471 = vst [vmem:[#allocation2 + $0x8] sm:$0xff] %v321
    %472 = vst [vmem:[#allocation2 + $0x10] sm:$0xff] %v432
    %473 = vst [vmem:[#allocation2 + $0x18] sm:$0xff] %v325
    %474 = vst [vmem:[#allocation2 + $0x20] sm:$0xff] %v327
    %475 = vst [vmem:[#allocation2 + $0x28] sm:$0xff] %v437
    %476 = vst [vmem:[#allocation2 + $0x30] sm:$0xff] %v331
    %477 = vst [vmem:[#allocation2 + $0x38] sm:$0xff] %v333
    %478 = vst [vmem:[#allocation2 + $0x40] sm:$0xff] %v442
    %479 = vst [vmem:[#allocation2 + $0x48] sm:$0xff] %v337
    %480 = vst [vmem:[#allocation2 + $0x50] sm:$0xff] %v339
    %481 = vst [vmem:[#allocation2 + $0x58] sm:$0xff] %v447
    %482 = vst [vmem:[#allocation2 + $0x60] sm:$0xff] %v343
    %483 = vst [vmem:[#allocation2 + $0x68] sm:$0xff] %v345
    %484 = vst [vmem:[#allocation2 + $0x70] sm:$0xff] %v452
    %485 = vst [vmem:[#allocation2 + $0x78] sm:$0xff] %v349
    %486 = vst [vmem:[#allocation2 + $0x80] sm:$0xff] %v351
    %487 = vst [vmem:[#allocation2 + $0x88] sm:$0xff] %v457
    %488 = vst [vmem:[#allocation2 + $0x90] sm:$0xff] %v355
    %489 = vst [vmem:[#allocation2 + $0x98] sm:$0xff] %v357
    %490 = vst [vmem:[#allocation2 + $0xa0] sm:$0xff] %v462
    %491 = vst [vmem:[#allocation2 + $0xa8] sm:$0xff] %v361
    %492 = vst [vmem:[#allocation2 + $0xb0] sm:$0xff] %v363
    %493 = vst [vmem:[#allocation2 + $0xb8] sm:$0xff] %v467
    %v494 = vld [vmem:[#allocation2] sm:$0xff]
    %v495 = vld [vmem:[#allocation2 + $0x8] sm:$0xff]
    %v496 = vld [vmem:[#allocation2 + $0x10] sm:$0xff]
    %497 = vmatprep.subr.mxu0 %v231
    %498 = vmatpush1.msra.mxu0 %v230
    %499 = vmatprep.subr.mxu0 %v228
    %500 = vmatpush1.msra.mxu0 %v227
    %501 = vmatprep.subr.mxu0 %v225
    %502 = vmatpush1.msra.mxu0 %v224
    %503 = vmatprep.subr.mxu0 %v222
    %504 = vmatpush1.msra.mxu0 %v221
    %505 = vmatprep.subr.mxu0 %v219
    %506 = vmatpush1.msra.mxu0 %v218
    %507 = vmatprep.subr.mxu0 %v216
    %508 = vmatpush1.msra.mxu0 %v215
    %509 = vmatprep.subr.mxu0 %v213
    %510 = vmatpush1.msra.mxu0 %v212
    %511 = vmatprep.subr.mxu0 %v210
    %512 = vmatpush1.msra.mxu0 %v209
    %513 = vmatprep.subr.mxu0 %v207
    %514 = vmatpush1.msra.mxu0 %v206
    %515 = vmatprep.subr.mxu0 %v204
    %516 = vmatpush1.msra.mxu0 %v203
    %517 = vmatprep.subr.mxu0 %v201
    %518 = vmatpush1.msra.mxu0 %v200
    %519 = vmatprep.subr.mxu0 %v198
    %520 = vmatpush1.msra.mxu0 %v197
    %521 = vmatprep.subr.mxu0 %v195
    %522 = vmatpush1.msra.mxu0 %v194
    %523 = vmatprep.subr.mxu0 %v192
    %524 = vmatpush1.msra.mxu0 %v191
    %525 = vmatprep.subr.mxu0 %v189
    %526 = vmatpush1.msra.mxu0 %v188
    %527 = vmatprep.subr.mxu0 %v186
    %528 = vmatpush1.msra.mxu0 %v185
    %529 = vmatprep.subr.mxu0 0.0
    %530 = vmatpush2.msra.mxu0 0.0
    %531 = vmatprep.subr.mxu0 0.0
    %532 = vmatpush2.msra.mxu0 0.0
    %533 = vmatprep.subr.mxu0 0.0
    %534 = vmatpush2.msra.mxu0 0.0
    %535 = vmatprep.subr.mxu0 0.0
    %536 = vmatpush2.msra.mxu0 0.0
    %537 = vmatprep.subr.mxu0 0.0
    %538 = vmatpush2.msra.mxu0 0.0
    %539 = vmatprep.subr.mxu0 0.0
    %540 = vmatpush2.msra.mxu0 0.0
    %541 = vmatprep.subr.mxu0 0.0
    %542 = vmatpush2.msra.mxu0 0.0
    %543 = vmatprep.subr.mxu0 0.0
    %544 = vmatpush2.msra.mxu0 0.0
    %545 = vmatprep.subr.mxu0 0.0
    %546 = vmatpush2.msra.mxu0 0.0
    %547 = vmatprep.subr.mxu0 0.0
    %548 = vmatpush2.msra.mxu0 0.0
    %549 = vmatprep.subr.mxu0 0.0
    %550 = vmatpush2.msra.mxu0 0.0
    %551 = vmatprep.subr.mxu0 0.0
    %552 = vmatpush2.msra.mxu0 0.0
    %553 = vmatprep.subr.mxu0 0.0
    %554 = vmatpush2.msra.mxu0 0.0
    %555 = vmatprep.subr.mxu0 0.0
    %556 = vmatpush2.msra.mxu0 0.0
    %557 = vmatprep.subr.mxu0 0.0
    %558 = vmatpush2.msra.mxu0 0.0
    %559 = vmatprep.subr.mxu0 0.0
    %560 = vmatpush2.msra.mxu0 0.0
    %561 = vmatprep.mubr.f32.mxu0 0.0
    %562 = vmatmul.mubr.f32.gmra.mxu0 0.0
    %v563 = vpop.f32.mrf.mxu0
    %v564 = vadd.f32 0.0, %v563
    %v565 = vpop.f32.mrf.mxu0
    %v566 = vadd.f32 0.0, %v565
    %567 = vdwg.mxu0
    %568 = vmatprep.subr.mxu0 0.0
    %569 = vmatpush1.msra.mxu0 %v232
    %570 = vmatprep.subr.mxu0 0.0
    %571 = vmatpush1.msra.mxu0 %v229
    %572 = vmatprep.subr.mxu0 0.0
    %573 = vmatpush1.msra.mxu0 %v226
    %574 = vmatprep.subr.mxu0 0.0
    %575 = vmatpush1.msra.mxu0 %v223
    %576 = vmatprep.subr.mxu0 0.0
    %577 = vmatpush1.msra.mxu0 %v220
    %578 = vmatprep.subr.mxu0 0.0
    %579 = vmatpush1.msra.mxu0 %v217
    %580 = vmatprep.subr.mxu0 0.0
    %581 = vmatpush1.msra.mxu0 %v214
    %582 = vmatprep.subr.mxu0 0.0
    %583 = vmatpush1.msra.mxu0 %v211
    %584 = vmatprep.subr.mxu0 0.0
    %585 = vmatpush1.msra.mxu0 %v208
    %586 = vmatprep.subr.mxu0 0.0
    %587 = vmatpush1.msra.mxu0 %v205
    %588 = vmatprep.subr.mxu0 0.0
    %589 = vmatpush1.msra.mxu0 %v202
    %590 = vmatprep.subr.mxu0 0.0
    %591 = vmatpush1.msra.mxu0 %v199
    %592 = vmatprep.subr.mxu0 0.0
    %593 = vmatpush1.msra.mxu0 %v196
    %594 = vmatprep.subr.mxu0 0.0
    %595 = vmatpush1.msra.mxu0 %v193
    %596 = vmatprep.subr.mxu0 0.0
    %597 = vmatpush1.msra.mxu0 %v190
    %598 = vmatprep.subr.mxu0 0.0
    %599 = vmatpush1.msra.mxu0 %v187
    %600 = vmatprep.subr.mxu0 0.0
    %601 = vmatpush2.msra.mxu0 0.0
    %602 = vmatprep.subr.mxu0 0.0
    %603 = vmatpush2.msra.mxu0 0.0
    %604 = vmatprep.subr.mxu0 0.0
    %605 = vmatpush2.msra.mxu0 0.0
    %606 = vmatprep.subr.mxu0 0.0
    %607 = vmatpush2.msra.mxu0 0.0
    %608 = vmatprep.subr.mxu0 0.0
    %609 = vmatpush2.msra.mxu0 0.0
    %610 = vmatprep.subr.mxu0 0.0
    %611 = vmatpush2.msra.mxu0 0.0
    %612 = vmatprep.subr.mxu0 0.0
    %613 = vmatpush2.msra.mxu0 0.0
    %614 = vmatprep.subr.mxu0 0.0
    %615 = vmatpush2.msra.mxu0 0.0
    %616 = vmatprep.subr.mxu0 0.0
    %617 = vmatpush2.msra.mxu0 0.0
    %618 = vmatprep.subr.mxu0 0.0
    %619 = vmatpush2.msra.mxu0 0.0
    %620 = vmatprep.subr.mxu0 0.0
    %621 = vmatpush2.msra.mxu0 0.0
    %622 = vmatprep.subr.mxu0 0.0
    %623 = vmatpush2.msra.mxu0 0.0
    %624 = vmatprep.subr.mxu0 0.0
    %625 = vmatpush2.msra.mxu0 0.0
    %626 = vmatprep.subr.mxu0 0.0
    %627 = vmatpush2.msra.mxu0 0.0
    %628 = vmatprep.subr.mxu0 0.0
    %629 = vmatpush2.msra.mxu0 0.0
    %630 = vmatprep.subr.mxu0 0.0
    %631 = vmatpush2.msra.mxu0 0.0
    %632 = vmatprep.mubr.f32.mxu0 0.0
    %633 = vmatmul.mubr.f32.gmra.mxu0 0.0
    %v634 = vpop.f32.mrf.mxu0
    %v635 = vadd.f32 0.0, %v634
    %v636 = vpop.f32.mrf.mxu0
    %637 = vdwg.mxu0
    %v638 = vadd.f32 %v494, %v564
    %v639 = vxor.u32 %v638, 2147483648
    %v640 = vmul.f32 %v639, 1.442695
    %v641 = vpow.pop %v640
    %v642 = vadd.f32 %v641, 1.0
    %v643 = vrcp.pop %v642
    %v644 = vmul.f32 1.0, %v643
    %v645 = vadd.f32 %v495, %v566
    %v646 = vxor.u32 %v645, 2147483648
    %v647 = vmul.f32 %v646, 1.442695
    %v648 = vpow.pop %v647
    %v649 = vadd.f32 %v648, 1.0
    %v650 = vrcp.pop %v649
    %v651 = vmul.f32 1.0, %v650
    %v652 = vadd.f32 %v635, %v239
    %v653 = vmul.f32 %v644, %v652
    %v654 = vadd.f32 %v496, %v653
    %v655 = vtanh.pop %v654
    %v656 = vsub.f32 1.0, %v651
    %v657 = vmul.f32 %v656, %v655
    %v658 = vmul.f32 %v651, 0.0
    %v659 = vadd.f32 %v657, %v658
    %660 = vst [vmem:[#allocation3] sm:$0xff] %v659
    %v661 = vld [vmem:[#allocation2 + $0x18] sm:$0xff]
    %v662 = vld [vmem:[#allocation2 + $0x20] sm:$0xff]
    %v663 = vld [vmem:[#allocation2 + $0x28] sm:$0xff]
    %664 = vmatprep.subr.mxu0 %v231
    %665 = vmatpush1.msra.mxu0 %v230
    %666 = vmatprep.subr.mxu0 %v228
    %667 = vmatpush1.msra.mxu0 %v227
    %668 = vmatprep.subr.mxu0 %v225
    %669 = vmatpush1.msra.mxu0 %v224
    %670 = vmatprep.subr.mxu0 %v222
    %671 = vmatpush1.msra.mxu0 %v221
    %672 = vmatprep.subr.mxu0 %v219
    %673 = vmatpush1.msra.mxu0 %v218
    %674 = vmatprep.subr.mxu0 %v216
    %675 = vmatpush1.msra.mxu0 %v215
    %676 = vmatprep.subr.mxu0 %v213
    %677 = vmatpush1.msra.mxu0 %v212
    %678 = vmatprep.subr.mxu0 %v210
    %679 = vmatpush1.msra.mxu0 %v209
    %680 = vmatprep.subr.mxu0 %v207
    %681 = vmatpush1.msra.mxu0 %v206
    %682 = vmatprep.subr.mxu0 %v204
    %683 = vmatpush1.msra.mxu0 %v203
    %684 = vmatprep.subr.mxu0 %v201
    %685 = vmatpush1.msra.mxu0 %v200
    %686 = vmatprep.subr.mxu0 %v198
    %687 = vmatpush1.msra.mxu0 %v197
    %688 = vmatprep.subr.mxu0 %v195
    %689 = vmatpush1.msra.mxu0 %v194
    %690 = vmatprep.subr.mxu0 %v192
    %691 = vmatpush1.msra.mxu0 %v191
    %692 = vmatprep.subr.mxu0 %v189
    %693 = vmatpush1.msra.mxu0 %v188
    %694 = vmatprep.subr.mxu0 %v186
    %695 = vmatpush1.msra.mxu0 %v185
    %696 = vmatprep.subr.mxu0 0.0
    %697 = vmatpush2.msra.mxu0 0.0
    %698 = vmatprep.subr.mxu0 0.0
    %699 = vmatpush2.msra.mxu0 0.0
    %700 = vmatprep.subr.mxu0 0.0
    %701 = vmatpush2.msra.mxu0 0.0
    %702 = vmatprep.subr.mxu0 0.0
    %703 = vmatpush2.msra.mxu0 0.0
    %704 = vmatprep.subr.mxu0 0.0
    %705 = vmatpush2.msra.mxu0 0.0
    %706 = vmatprep.subr.mxu0 0.0
    %707 = vmatpush2.msra.mxu0 0.0
    %708 = vmatprep.subr.mxu0 0.0
    %709 = vmatpush2.msra.mxu0 0.0
    %710 = vmatprep.subr.mxu0 0.0
    %711 = vmatpush2.msra.mxu0 0.0
    %712 = vmatprep.subr.mxu0 0.0
    %713 = vmatpush2.msra.mxu0 0.0
    %714 = vmatprep.subr.mxu0 0.0
    %715 = vmatpush2.msra.mxu0 0.0
    %716 = vmatprep.subr.mxu0 0.0
    %717 = vmatpush2.msra.mxu0 0.0
    %718 = vmatprep.subr.mxu0 0.0
    %719 = vmatpush2.msra.mxu0 0.0
    %720 = vmatprep.subr.mxu0 0.0
    %721 = vmatpush2.msra.mxu0 0.0
    %722 = vmatprep.subr.mxu0 0.0
    %723 = vmatpush2.msra.mxu0 0.0
    %724 = vmatprep.subr.mxu0 0.0
    %725 = vmatpush2.msra.mxu0 0.0
    %726 = vmatprep.subr.mxu0 0.0
    %727 = vmatpush2.msra.mxu0 0.0
    %728 = vmatprep.mubr.f32.mxu0 0.0
    %729 = vmatmul.mubr.f32.gmra.mxu0 %v659
    %v730 = vpop.f32.mrf.mxu0
    %v731 = vadd.f32 0.0, %v730
    %v732 = vpop.f32.mrf.mxu0
    %v733 = vadd.f32 0.0, %v732
    %734 = vdwg.mxu0
    %735 = vmatprep.subr.mxu0 0.0
    %736 = vmatpush1.msra.mxu0 %v232
    %737 = vmatprep.subr.mxu0 0.0
    %738 = vmatpush1.msra.mxu0 %v229
    %739 = vmatprep.subr.mxu0 0.0
    %740 = vmatpush1.msra.mxu0 %v226
    %741 = vmatprep.subr.mxu0 0.0
    %742 = vmatpush1.msra.mxu0 %v223
    %743 = vmatprep.subr.mxu0 0.0
    %744 = vmatpush1.msra.mxu0 %v220
    %745 = vmatprep.subr.mxu0 0.0
    %746 = vmatpush1.msra.mxu0 %v217
    %747 = vmatprep.subr.mxu0 0.0
    %748 = vmatpush1.msra.mxu0 %v214
    %749 = vmatprep.subr.mxu0 0.0
    %750 = vmatpush1.msra.mxu0 %v211
    %751 = vmatprep.subr.mxu0 0.0
    %752 = vmatpush1.msra.mxu0 %v208
    %753 = vmatprep.subr.mxu0 0.0
    %754 = vmatpush1.msra.mxu0 %v205
    %755 = vmatprep.subr.mxu0 0.0
    %756 = vmatpush1.msra.mxu0 %v202
    %757 = vmatprep.subr.mxu0 0.0
    %758 = vmatpush1.msra.mxu0 %v199
    %759 = vmatprep.subr.mxu0 0.0
    %760 = vmatpush1.msra.mxu0 %v196
    %761 = vmatprep.subr.mxu0 0.0
    %762 = vmatpush1.msra.mxu0 %v193
    %763 = vmatprep.subr.mxu0 0.0
    %764 = vmatpush1.msra.mxu0 %v190
    %765 = vmatprep.subr.mxu0 0.0
    %766 = vmatpush1.msra.mxu0 %v187
    %767 = vmatprep.subr.mxu0 0.0
    %768 = vmatpush2.msra.mxu0 0.0
    %769 = vmatprep.subr.mxu0 0.0
    %770 = vmatpush2.msra.mxu0 0.0
    %771 = vmatprep.subr.mxu0 0.0
    %772 = vmatpush2.msra.mxu0 0.0
    %773 = vmatprep.subr.mxu0 0.0
    %774 = vmatpush2.msra.mxu0 0.0
    %775 = vmatprep.subr.mxu0 0.0
    %776 = vmatpush2.msra.mxu0 0.0
    %777 = vmatprep.subr.mxu0 0.0
    %778 = vmatpush2.msra.mxu0 0.0
    %779 = vmatprep.subr.mxu0 0.0
    %780 = vmatpush2.msra.mxu0 0.0
    %781 = vmatprep.subr.mxu0 0.0
    %782 = vmatpush2.msra.mxu0 0.0
    %783 = vmatprep.subr.mxu0 0.0
    %784 = vmatpush2.msra.mxu0 0.0
    %785 = vmatprep.subr.mxu0 0.0
    %786 = vmatpush2.msra.mxu0 0.0
    %787 = vmatprep.subr.mxu0 0.0
    %788 = vmatpush2.msra.mxu0 0.0
    %789 = vmatprep.subr.mxu0 0.0
    %790 = vmatpush2.msra.mxu0 0.0
    %791 = vmatprep.subr.mxu0 0.0
    %792 = vmatpush2.msra.mxu0 0.0
    %793 = vmatprep.subr.mxu0 0.0
    %794 = vmatpush2.msra.mxu0 0.0
    %795 = vmatprep.subr.mxu0 0.0
    %796 = vmatpush2.msra.mxu0 0.0
    %797 = vmatprep.subr.mxu0 0.0
    %798 = vmatpush2.msra.mxu0 0.0
    %799 = vmatprep.mubr.f32.mxu0 0.0
    %800 = vmatmul.mubr.f32.gmra.mxu0 %v659
    %v801 = vpop.f32.mrf.mxu0
    %v802 = vadd.f32 0.0, %v801
    %v803 = vpop.f32.mrf.mxu0
    %804 = vdwg.mxu0
    %v805 = vadd.f32 %v661, %v731
    %v806 = vxor.u32 %v805, 2147483648
    %v807 = vmul.f32 %v806, 1.442695
    %v808 = vpow.pop %v807
    %v809 = vadd.f32 %v808, 1.0
    %v810 = vrcp.pop %v809
    %v811 = vmul.f32 1.0, %v810
    %v812 = vadd.f32 %v662, %v733
    %v813 = vxor.u32 %v812, 2147483648
    %v814 = vmul.f32 %v813, 1.442695
    %v815 = vpow.pop %v814
    %v816 = vadd.f32 %v815, 1.0
    %v817 = vrcp.pop %v816
    %v818 = vmul.f32 1.0, %v817
    %v819 = vadd.f32 %v802, %v239
    %v820 = vmul.f32 %v811, %v819
    %v821 = vadd.f32 %v663, %v820
    %v822 = vtanh.pop %v821
    %v823 = vsub.f32 1.0, %v818
    %v824 = vmul.f32 %v823, %v822
    %v825 = vmul.f32 %v818, %v659
    %v826 = vadd.f32 %v824, %v825
    %827 = vst [vmem:[#allocation3 + $0x8] sm:$0xff] %v826
    %v828 = vld [vmem:[#allocation2 + $0x30] sm:$0xff]
    %v829 = vld [vmem:[#allocation2 + $0x38] sm:$0xff]
    %v830 = vld [vmem:[#allocation2 + $0x40] sm:$0xff]
    %831 = vmatprep.subr.mxu0 %v231
    %832 = vmatpush1.msra.mxu0 %v230
    %833 = vmatprep.subr.mxu0 %v228
    %834 = vmatpush1.msra.mxu0 %v227
    %835 = vmatprep.subr.mxu0 %v225
    %836 = vmatpush1.msra.mxu0 %v224
    %837 = vmatprep.subr.mxu0 %v222
    %838 = vmatpush1.msra.mxu0 %v221
    %839 = vmatprep.subr.mxu0 %v219
    %840 = vmatpush1.msra.mxu0 %v218
    %841 = vmatprep.subr.mxu0 %v216
    %842 = vmatpush1.msra.mxu0 %v215
    %843 = vmatprep.subr.mxu0 %v213
    %844 = vmatpush1.msra.mxu0 %v212
    %845 = vmatprep.subr.mxu0 %v210
    %846 = vmatpush1.msra.mxu0 %v209
    %847 = vmatprep.subr.mxu0 %v207
    %848 = vmatpush1.msra.mxu0 %v206
    %849 = vmatprep.subr.mxu0 %v204
    %850 = vmatpush1.msra.mxu0 %v203
    %851 = vmatprep.subr.mxu0 %v201
    %852 = vmatpush1.msra.mxu0 %v200
    %853 = vmatprep.subr.mxu0 %v198
    %854 = vmatpush1.msra.mxu0 %v197
    %855 = vmatprep.subr.mxu0 %v195
    %856 = vmatpush1.msra.mxu0 %v194
    %857 = vmatprep.subr.mxu0 %v192
    %858 = vmatpush1.msra.mxu0 %v191
    %859 = vmatprep.subr.mxu0 %v189
    %860 = vmatpush1.msra.mxu0 %v188
    %861 = vmatprep.subr.mxu0 %v186
    %862 = vmatpush1.msra.mxu0 %v185
    %863 = vmatprep.subr.mxu0 0.0
    %864 = vmatpush2.msra.mxu0 0.0
    %865 = vmatprep.subr.mxu0 0.0
    %866 = vmatpush2.msra.mxu0 0.0
    %867 = vmatprep.subr.mxu0 0.0
    %868 = vmatpush2.msra.mxu0 0.0
    %869 = vmatprep.subr.mxu0 0.0
    %870 = vmatpush2.msra.mxu0 0.0
    %871 = vmatprep.subr.mxu0 0.0
    %872 = vmatpush2.msra.mxu0 0.0
    %873 = vmatprep.subr.mxu0 0.0
    %874 = vmatpush2.msra.mxu0 0.0
    %875 = vmatprep.subr.mxu0 0.0
    %876 = vmatpush2.msra.mxu0 0.0
    %877 = vmatprep.subr.mxu0 0.0
    %878 = vmatpush2.msra.mxu0 0.0
    %879 = vmatprep.subr.mxu0 0.0
    %880 = vmatpush2.msra.mxu0 0.0
    %881 = vmatprep.subr.mxu0 0.0
    %882 = vmatpush2.msra.mxu0 0.0
    %883 = vmatprep.subr.mxu0 0.0
    %884 = vmatpush2.msra.mxu0 0.0
    %885 = vmatprep.subr.mxu0 0.0
    %886 = vmatpush2.msra.mxu0 0.0
    %887 = vmatprep.subr.mxu0 0.0
    %888 = vmatpush2.msra.mxu0 0.0
    %889 = vmatprep.subr.mxu0 0.0
    %890 = vmatpush2.msra.mxu0 0.0
    %891 = vmatprep.subr.mxu0 0.0
    %892 = vmatpush2.msra.mxu0 0.0
    %893 = vmatprep.subr.mxu0 0.0
    %894 = vmatpush2.msra.mxu0 0.0
    %895 = vmatprep.mubr.f32.mxu0 0.0
    %896 = vmatmul.mubr.f32.gmra.mxu0 %v826
    %v897 = vpop.f32.mrf.mxu0
    %v898 = vadd.f32 0.0, %v897
    %v899 = vpop.f32.mrf.mxu0
    %v900 = vadd.f32 0.0, %v899
    %901 = vdwg.mxu0
    %902 = vmatprep.subr.mxu0 0.0
    %903 = vmatpush1.msra.mxu0 %v232
    %904 = vmatprep.subr.mxu0 0.0
    %905 = vmatpush1.msra.mxu0 %v229
    %906 = vmatprep.subr.mxu0 0.0
    %907 = vmatpush1.msra.mxu0 %v226
    %908 = vmatprep.subr.mxu0 0.0
    %909 = vmatpush1.msra.mxu0 %v223
    %910 = vmatprep.subr.mxu0 0.0
    %911 = vmatpush1.msra.mxu0 %v220
    %912 = vmatprep.subr.mxu0 0.0
    %913 = vmatpush1.msra.mxu0 %v217
    %914 = vmatprep.subr.mxu0 0.0
    %915 = vmatpush1.msra.mxu0 %v214
    %916 = vmatprep.subr.mxu0 0.0
    %917 = vmatpush1.msra.mxu0 %v211
    %918 = vmatprep.subr.mxu0 0.0
    %919 = vmatpush1.msra.mxu0 %v208
    %920 = vmatprep.subr.mxu0 0.0
    %921 = vmatpush1.msra.mxu0 %v205
    %922 = vmatprep.subr.mxu0 0.0
    %923 = vmatpush1.msra.mxu0 %v202
    %924 = vmatprep.subr.mxu0 0.0
    %925 = vmatpush1.msra.mxu0 %v199
    %926 = vmatprep.subr.mxu0 0.0
    %927 = vmatpush1.msra.mxu0 %v196
    %928 = vmatprep.subr.mxu0 0.0
    %929 = vmatpush1.msra.mxu0 %v193
    %930 = vmatprep.subr.mxu0 0.0
    %931 = vmatpush1.msra.mxu0 %v190
    %932 = vmatprep.subr.mxu0 0.0
    %933 = vmatpush1.msra.mxu0 %v187
    %934 = vmatprep.subr.mxu0 0.0
    %935 = vmatpush2.msra.mxu0 0.0
    %936 = vmatprep.subr.mxu0 0.0
    %937 = vmatpush2.msra.mxu0 0.0
    %938 = vmatprep.subr.mxu0 0.0
    %939 = vmatpush2.msra.mxu0 0.0
    %940 = vmatprep.subr.mxu0 0.0
    %941 = vmatpush2.msra.mxu0 0.0
    %942 = vmatprep.subr.mxu0 0.0
    %943 = vmatpush2.msra.mxu0 0.0
    %944 = vmatprep.subr.mxu0 0.0
    %945 = vmatpush2.msra.mxu0 0.0
    %946 = vmatprep.subr.mxu0 0.0
    %947 = vmatpush2.msra.mxu0 0.0
    %948 = vmatprep.subr.mxu0 0.0
    %949 = vmatpush2.msra.mxu0 0.0
    %950 = vmatprep.subr.mxu0 0.0
    %951 = vmatpush2.msra.mxu0 0.0
    %952 = vmatprep.subr.mxu0 0.0
    %953 = vmatpush2.msra.mxu0 0.0
    %954 = vmatprep.subr.mxu0 0.0
    %955 = vmatpush2.msra.mxu0 0.0
    %956 = vmatprep.subr.mxu0 0.0
    %957 = vmatpush2.msra.mxu0 0.0
    %958 = vmatprep.subr.mxu0 0.0
    %959 = vmatpush2.msra.mxu0 0.0
    %960 = vmatprep.subr.mxu0 0.0
    %961 = vmatpush2.msra.mxu0 0.0
    %962 = vmatprep.subr.mxu0 0.0
    %963 = vmatpush2.msra.mxu0 0.0
    %964 = vmatprep.subr.mxu0 0.0
    %965 = vmatpush2.msra.mxu0 0.0
    %966 = vmatprep.mubr.f32.mxu0 0.0
    %967 = vmatmul.mubr.f32.gmra.mxu0 %v826
    %v968 = vpop.f32.mrf.mxu0
    %v969 = vadd.f32 0.0, %v968
    %v970 = vpop.f32.mrf.mxu0
    %971 = vdwg.mxu0
    %v972 = vadd.f32 %v828, %v898
    %v973 = vxor.u32 %v972, 2147483648
    %v974 = vmul.f32 %v973, 1.442695
    %v975 = vpow.pop %v974
    %v976 = vadd.f32 %v975, 1.0
    %v977 = vrcp.pop %v976
    %v978 = vmul.f32 1.0, %v977
    %v979 = vadd.f32 %v829, %v900
    %v980 = vxor.u32 %v979, 2147483648
    %v981 = vmul.f32 %v980, 1.442695
    %v982 = vpow.pop %v981
    %v983 = vadd.f32 %v982, 1.0
    %v984 = vrcp.pop %v983
    %v985 = vmul.f32 1.0, %v984
    %v986 = vadd.f32 %v969, %v239
    %v987 = vmul.f32 %v978, %v986
    %v988 = vadd.f32 %v830, %v987
    %v989 = vtanh.pop %v988
    %v990 = vsub.f32 1.0, %v985
    %v991 = vmul.f32 %v990, %v989
    %v992 = vmul.f32 %v985, %v826
    %v993 = vadd.f32 %v991, %v992
    %994 = vst [vmem:[#allocation3 + $0x10] sm:$0xff] %v993
    %v995 = vld [vmem:[#allocation2 + $0x48] sm:$0xff]
    %v996 = vld [vmem:[#allocation2 + $0x50] sm:$0xff]
    %v997 = vld [vmem:[#allocation2 + $0x58] sm:$0xff]
    %998 = vmatprep.subr.mxu0 %v231
    %999 = vmatpush1.msra.mxu0 %v230
    %1000 = vmatprep.subr.mxu0 %v228
    %1001 = vmatpush1.msra.mxu0 %v227
    %1002 = vmatprep.subr.mxu0 %v225
    %1003 = vmatpush1.msra.mxu0 %v224
    %1004 = vmatprep.subr.mxu0 %v222
    %1005 = vmatpush1.msra.mxu0 %v221
    %1006 = vmatprep.subr.mxu0 %v219
    %1007 = vmatpush1.msra.mxu0 %v218
    %1008 = vmatprep.subr.mxu0 %v216
    %1009 = vmatpush1.msra.mxu0 %v215
    %1010 = vmatprep.subr.mxu0 %v213
    %1011 = vmatpush1.msra.mxu0 %v212
    %1012 = vmatprep.subr.mxu0 %v210
    %1013 = vmatpush1.msra.mxu0 %v209
    %1014 = vmatprep.subr.mxu0 %v207
    %1015 = vmatpush1.msra.mxu0 %v206
    %1016 = vmatprep.subr.mxu0 %v204
    %1017 = vmatpush1.msra.mxu0 %v203
    %1018 = vmatprep.subr.mxu0 %v201
    %1019 = vmatpush1.msra.mxu0 %v200
    %1020 = vmatprep.subr.mxu0 %v198
    %1021 = vmatpush1.msra.mxu0 %v197
    %1022 = vmatprep.subr.mxu0 %v195
    %1023 = vmatpush1.msra.mxu0 %v194
    %1024 = vmatprep.subr.mxu0 %v192
    %1025 = vmatpush1.msra.mxu0 %v191
    %1026 = vmatprep.subr.mxu0 %v189
    %1027 = vmatpush1.msra.mxu0 %v188
    %1028 = vmatprep.subr.mxu0 %v186
    %1029 = vmatpush1.msra.mxu0 %v185
    %1030 = vmatprep.subr.mxu0 0.0
    %1031 = vmatpush2.msra.mxu0 0.0
    %1032 = vmatprep.subr.mxu0 0.0
    %1033 = vmatpush2.msra.mxu0 0.0
    %1034 = vmatprep.subr.mxu0 0.0
    %1035 = vmatpush2.msra.mxu0 0.0
    %1036 = vmatprep.subr.mxu0 0.0
    %1037 = vmatpush2.msra.mxu0 0.0
    %1038 = vmatprep.subr.mxu0 0.0
    %1039 = vmatpush2.msra.mxu0 0.0
    %1040 = vmatprep.subr.mxu0 0.0
    %1041 = vmatpush2.msra.mxu0 0.0
    %1042 = vmatprep.subr.mxu0 0.0
    %1043 = vmatpush2.msra.mxu0 0.0
    %1044 = vmatprep.subr.mxu0 0.0
    %1045 = vmatpush2.msra.mxu0 0.0
    %1046 = vmatprep.subr.mxu0 0.0
    %1047 = vmatpush2.msra.mxu0 0.0
    %1048 = vmatprep.subr.mxu0 0.0
    %1049 = vmatpush2.msra.mxu0 0.0
    %1050 = vmatprep.subr.mxu0 0.0
    %1051 = vmatpush2.msra.mxu0 0.0
    %1052 = vmatprep.subr.mxu0 0.0
    %1053 = vmatpush2.msra.mxu0 0.0
    %1054 = vmatprep.subr.mxu0 0.0
    %1055 = vmatpush2.msra.mxu0 0.0
    %1056 = vmatprep.subr.mxu0 0.0
    %1057 = vmatpush2.msra.mxu0 0.0
    %1058 = vmatprep.subr.mxu0 0.0
    %1059 = vmatpush2.msra.mxu0 0.0
    %1060 = vmatprep.subr.mxu0 0.0
    %1061 = vmatpush2.msra.mxu0 0.0
    %1062 = vmatprep.mubr.f32.mxu0 0.0
    %1063 = vmatmul.mubr.f32.gmra.mxu0 %v993
    %v1064 = vpop.f32.mrf.mxu0
    %v1065 = vadd.f32 0.0, %v1064
    %v1066 = vpop.f32.mrf.mxu0
    %v1067 = vadd.f32 0.0, %v1066
    %1068 = vdwg.mxu0
    %1069 = vmatprep.subr.mxu0 0.0
    %1070 = vmatpush1.msra.mxu0 %v232
    %1071 = vmatprep.subr.mxu0 0.0
    %1072 = vmatpush1.msra.mxu0 %v229
    %1073 = vmatprep.subr.mxu0 0.0
    %1074 = vmatpush1.msra.mxu0 %v226
    %1075 = vmatprep.subr.mxu0 0.0
    %1076 = vmatpush1.msra.mxu0 %v223
    %1077 = vmatprep.subr.mxu0 0.0
    %1078 = vmatpush1.msra.mxu0 %v220
    %1079 = vmatprep.subr.mxu0 0.0
    %1080 = vmatpush1.msra.mxu0 %v217
    %1081 = vmatprep.subr.mxu0 0.0
    %1082 = vmatpush1.msra.mxu0 %v214
    %1083 = vmatprep.subr.mxu0 0.0
    %1084 = vmatpush1.msra.mxu0 %v211
    %1085 = vmatprep.subr.mxu0 0.0
    %1086 = vmatpush1.msra.mxu0 %v208
    %1087 = vmatprep.subr.mxu0 0.0
    %1088 = vmatpush1.msra.mxu0 %v205
    %1089 = vmatprep.subr.mxu0 0.0
    %1090 = vmatpush1.msra.mxu0 %v202
    %1091 = vmatprep.subr.mxu0 0.0
    %1092 = vmatpush1.msra.mxu0 %v199
    %1093 = vmatprep.subr.mxu0 0.0
    %1094 = vmatpush1.msra.mxu0 %v196
    %1095 = vmatprep.subr.mxu0 0.0
    %1096 = vmatpush1.msra.mxu0 %v193
    %1097 = vmatprep.subr.mxu0 0.0
    %1098 = vmatpush1.msra.mxu0 %v190
    %1099 = vmatprep.subr.mxu0 0.0
    %1100 = vmatpush1.msra.mxu0 %v187
    %1101 = vmatprep.subr.mxu0 0.0
    %1102 = vmatpush2.msra.mxu0 0.0
    %1103 = vmatprep.subr.mxu0 0.0
    %1104 = vmatpush2.msra.mxu0 0.0
    %1105 = vmatprep.subr.mxu0 0.0
    %1106 = vmatpush2.msra.mxu0 0.0
    %1107 = vmatprep.subr.mxu0 0.0
    %1108 = vmatpush2.msra.mxu0 0.0
    %1109 = vmatprep.subr.mxu0 0.0
    %1110 = vmatpush2.msra.mxu0 0.0
    %1111 = vmatprep.subr.mxu0 0.0
    %1112 = vmatpush2.msra.mxu0 0.0
    %1113 = vmatprep.subr.mxu0 0.0
    %1114 = vmatpush2.msra.mxu0 0.0
    %1115 = vmatprep.subr.mxu0 0.0
    %1116 = vmatpush2.msra.mxu0 0.0
    %1117 = vmatprep.subr.mxu0 0.0
    %1118 = vmatpush2.msra.mxu0 0.0
    %1119 = vmatprep.subr.mxu0 0.0
    %1120 = vmatpush2.msra.mxu0 0.0
    %1121 = vmatprep.subr.mxu0 0.0
    %1122 = vmatpush2.msra.mxu0 0.0
    %1123 = vmatprep.subr.mxu0 0.0
    %1124 = vmatpush2.msra.mxu0 0.0
    %1125 = vmatprep.subr.mxu0 0.0
    %1126 = vmatpush2.msra.mxu0 0.0
    %1127 = vmatprep.subr.mxu0 0.0
    %1128 = vmatpush2.msra.mxu0 0.0
    %1129 = vmatprep.subr.mxu0 0.0
    %1130 = vmatpush2.msra.mxu0 0.0
    %1131 = vmatprep.subr.mxu0 0.0
    %1132 = vmatpush2.msra.mxu0 0.0
    %1133 = vmatprep.mubr.f32.mxu0 0.0
    %1134 = vmatmul.mubr.f32.gmra.mxu0 %v993
    %v1135 = vpop.f32.mrf.mxu0
    %v1136 = vadd.f32 0.0, %v1135
    %v1137 = vpop.f32.mrf.mxu0
    %1138 = vdwg.mxu0
    %v1139 = vadd.f32 %v995, %v1065
    %v1140 = vxor.u32 %v1139, 2147483648
    %v1141 = vmul.f32 %v1140, 1.442695
    %v1142 = vpow.pop %v1141
    %v1143 = vadd.f32 %v1142, 1.0
    %v1144 = vrcp.pop %v1143
    %v1145 = vmul.f32 1.0, %v1144
    %v1146 = vadd.f32 %v996, %v1067
    %v1147 = vxor.u32 %v1146, 2147483648
    %v1148 = vmul.f32 %v1147, 1.442695
    %v1149 = vpow.pop %v1148
    %v1150 = vadd.f32 %v1149, 1.0
    %v1151 = vrcp.pop %v1150
    %v1152 = vmul.f32 1.0, %v1151
    %v1153 = vadd.f32 %v1136, %v239
    %v1154 = vmul.f32 %v1145, %v1153
    %v1155 = vadd.f32 %v997, %v1154
    %v1156 = vtanh.pop %v1155
    %v1157 = vsub.f32 1.0, %v1152
    %v1158 = vmul.f32 %v1157, %v1156
    %v1159 = vmul.f32 %v1152, %v993
    %v1160 = vadd.f32 %v1158, %v1159
    %1161 = vst [vmem:[#allocation3 + $0x18] sm:$0xff] %v1160
    %v1162 = vld [vmem:[#allocation2 + $0x60] sm:$0xff]
    %v1163 = vld [vmem:[#allocation2 + $0x68] sm:$0xff]
    %v1164 = vld [vmem:[#allocation2 + $0x70] sm:$0xff]
    %1165 = vmatprep.subr.mxu0 %v231
    %1166 = vmatpush1.msra.mxu0 %v230
    %1167 = vmatprep.subr.mxu0 %v228
    %1168 = vmatpush1.msra.mxu0 %v227
    %1169 = vmatprep.subr.mxu0 %v225
    %1170 = vmatpush1.msra.mxu0 %v224
    %1171 = vmatprep.subr.mxu0 %v222
    %1172 = vmatpush1.msra.mxu0 %v221
    %1173 = vmatprep.subr.mxu0 %v219
    %1174 = vmatpush1.msra.mxu0 %v218
    %1175 = vmatprep.subr.mxu0 %v216
    %1176 = vmatpush1.msra.mxu0 %v215
    %1177 = vmatprep.subr.mxu0 %v213
    %1178 = vmatpush1.msra.mxu0 %v212
    %1179 = vmatprep.subr.mxu0 %v210
    %1180 = vmatpush1.msra.mxu0 %v209
    %1181 = vmatprep.subr.mxu0 %v207
    %1182 = vmatpush1.msra.mxu0 %v206
    %1183 = vmatprep.subr.mxu0 %v204
    %1184 = vmatpush1.msra.mxu0 %v203
    %1185 = vmatprep.subr.mxu0 %v201
    %1186 = vmatpush1.msra.mxu0 %v200
    %1187 = vmatprep.subr.mxu0 %v198
    %1188 = vmatpush1.msra.mxu0 %v197
    %1189 = vmatprep.subr.mxu0 %v195
    %1190 = vmatpush1.msra.mxu0 %v194
    %1191 = vmatprep.subr.mxu0 %v192
    %1192 = vmatpush1.msra.mxu0 %v191
    %1193 = vmatprep.subr.mxu0 %v189
    %1194 = vmatpush1.msra.mxu0 %v188
    %1195 = vmatprep.subr.mxu0 %v186
    %1196 = vmatpush1.msra.mxu0 %v185
    %1197 = vmatprep.subr.mxu0 0.0
    %1198 = vmatpush2.msra.mxu0 0.0
    %1199 = vmatprep.subr.mxu0 0.0
    %1200 = vmatpush2.msra.mxu0 0.0
    %1201 = vmatprep.subr.mxu0 0.0
    %1202 = vmatpush2.msra.mxu0 0.0
    %1203 = vmatprep.subr.mxu0 0.0
    %1204 = vmatpush2.msra.mxu0 0.0
    %1205 = vmatprep.subr.mxu0 0.0
    %1206 = vmatpush2.msra.mxu0 0.0
    %1207 = vmatprep.subr.mxu0 0.0
    %1208 = vmatpush2.msra.mxu0 0.0
    %1209 = vmatprep.subr.mxu0 0.0
    %1210 = vmatpush2.msra.mxu0 0.0
    %1211 = vmatprep.subr.mxu0 0.0
    %1212 = vmatpush2.msra.mxu0 0.0
    %1213 = vmatprep.subr.mxu0 0.0
    %1214 = vmatpush2.msra.mxu0 0.0
    %1215 = vmatprep.subr.mxu0 0.0
    %1216 = vmatpush2.msra.mxu0 0.0
    %1217 = vmatprep.subr.mxu0 0.0
    %1218 = vmatpush2.msra.mxu0 0.0
    %1219 = vmatprep.subr.mxu0 0.0
    %1220 = vmatpush2.msra.mxu0 0.0
    %1221 = vmatprep.subr.mxu0 0.0
    %1222 = vmatpush2.msra.mxu0 0.0
    %1223 = vmatprep.subr.mxu0 0.0
    %1224 = vmatpush2.msra.mxu0 0.0
    %1225 = vmatprep.subr.mxu0 0.0
    %1226 = vmatpush2.msra.mxu0 0.0
    %1227 = vmatprep.subr.mxu0 0.0
    %1228 = vmatpush2.msra.mxu0 0.0
    %1229 = vmatprep.mubr.f32.mxu0 0.0
    %1230 = vmatmul.mubr.f32.gmra.mxu0 %v1160
    %v1231 = vpop.f32.mrf.mxu0
    %v1232 = vadd.f32 0.0, %v1231
    %v1233 = vpop.f32.mrf.mxu0
    %v1234 = vadd.f32 0.0, %v1233
    %1235 = vdwg.mxu0
    %1236 = vmatprep.subr.mxu0 0.0
    %1237 = vmatpush1.msra.mxu0 %v232
    %1238 = vmatprep.subr.mxu0 0.0
    %1239 = vmatpush1.msra.mxu0 %v229
    %1240 = vmatprep.subr.mxu0 0.0
    %1241 = vmatpush1.msra.mxu0 %v226
    %1242 = vmatprep.subr.mxu0 0.0
    %1243 = vmatpush1.msra.mxu0 %v223
    %1244 = vmatprep.subr.mxu0 0.0
    %1245 = vmatpush1.msra.mxu0 %v220
    %1246 = vmatprep.subr.mxu0 0.0
    %1247 = vmatpush1.msra.mxu0 %v217
    %1248 = vmatprep.subr.mxu0 0.0
    %1249 = vmatpush1.msra.mxu0 %v214
    %1250 = vmatprep.subr.mxu0 0.0
    %1251 = vmatpush1.msra.mxu0 %v211
    %1252 = vmatprep.subr.mxu0 0.0
    %1253 = vmatpush1.msra.mxu0 %v208
    %1254 = vmatprep.subr.mxu0 0.0
    %1255 = vmatpush1.msra.mxu0 %v205
    %1256 = vmatprep.subr.mxu0 0.0
    %1257 = vmatpush1.msra.mxu0 %v202
    %1258 = vmatprep.subr.mxu0 0.0
    %1259 = vmatpush1.msra.mxu0 %v199
    %1260 = vmatprep.subr.mxu0 0.0
    %1261 = vmatpush1.msra.mxu0 %v196
    %1262 = vmatprep.subr.mxu0 0.0
    %1263 = vmatpush1.msra.mxu0 %v193
    %1264 = vmatprep.subr.mxu0 0.0
    %1265 = vmatpush1.msra.mxu0 %v190
    %1266 = vmatprep.subr.mxu0 0.0
    %1267 = vmatpush1.msra.mxu0 %v187
    %1268 = vmatprep.subr.mxu0 0.0
    %1269 = vmatpush2.msra.mxu0 0.0
    %1270 = vmatprep.subr.mxu0 0.0
    %1271 = vmatpush2.msra.mxu0 0.0
    %1272 = vmatprep.subr.mxu0 0.0
    %1273 = vmatpush2.msra.mxu0 0.0
    %1274 = vmatprep.subr.mxu0 0.0
    %1275 = vmatpush2.msra.mxu0 0.0
    %1276 = vmatprep.subr.mxu0 0.0
    %1277 = vmatpush2.msra.mxu0 0.0
    %1278 = vmatprep.subr.mxu0 0.0
    %1279 = vmatpush2.msra.mxu0 0.0
    %1280 = vmatprep.subr.mxu0 0.0
    %1281 = vmatpush2.msra.mxu0 0.0
    %1282 = vmatprep.subr.mxu0 0.0
    %1283 = vmatpush2.msra.mxu0 0.0
    %1284 = vmatprep.subr.mxu0 0.0
    %1285 = vmatpush2.msra.mxu0 0.0
    %1286 = vmatprep.subr.mxu0 0.0
    %1287 = vmatpush2.msra.mxu0 0.0
    %1288 = vmatprep.subr.mxu0 0.0
    %1289 = vmatpush2.msra.mxu0 0.0
    %1290 = vmatprep.subr.mxu0 0.0
    %1291 = vmatpush2.msra.mxu0 0.0
    %1292 = vmatprep.subr.mxu0 0.0
    %1293 = vmatpush2.msra.mxu0 0.0
    %1294 = vmatprep.subr.mxu0 0.0
    %1295 = vmatpush2.msra.mxu0 0.0
    %1296 = vmatprep.subr.mxu0 0.0
    %1297 = vmatpush2.msra.mxu0 0.0
    %1298 = vmatprep.subr.mxu0 0.0
    %1299 = vmatpush2.msra.mxu0 0.0
    %1300 = vmatprep.mubr.f32.mxu0 0.0
    %1301 = vmatmul.mubr.f32.gmra.mxu0 %v1160
    %v1302 = vpop.f32.mrf.mxu0
    %v1303 = vadd.f32 0.0, %v1302
    %v1304 = vpop.f32.mrf.mxu0
    %1305 = vdwg.mxu0
    %v1306 = vadd.f32 %v1162, %v1232
    %v1307 = vxor.u32 %v1306, 2147483648
    %v1308 = vmul.f32 %v1307, 1.442695
    %v1309 = vpow.pop %v1308
    %v1310 = vadd.f32 %v1309, 1.0
    %v1311 = vrcp.pop %v1310
    %v1312 = vmul.f32 1.0, %v1311
    %v1313 = vadd.f32 %v1163, %v1234
    %v1314 = vxor.u32 %v1313, 2147483648
    %v1315 = vmul.f32 %v1314, 1.442695
    %v1316 = vpow.pop %v1315
    %v1317 = vadd.f32 %v1316, 1.0
    %v1318 = vrcp.pop %v1317
    %v1319 = vmul.f32 1.0, %v1318
    %v1320 = vadd.f32 %v1303, %v239
    %v1321 = vmul.f32 %v1312, %v1320
    %v1322 = vadd.f32 %v1164, %v1321
    %v1323 = vtanh.pop %v1322
    %v1324 = vsub.f32 1.0, %v1319
    %v1325 = vmul.f32 %v1324, %v1323
    %v1326 = vmul.f32 %v1319, %v1160
    %v1327 = vadd.f32 %v1325, %v1326
    %1328 = vst [vmem:[#allocation3 + $0x20] sm:$0xff] %v1327
    %v1329 = vld [vmem:[#allocation2 + $0x78] sm:$0xff]
    %v1330 = vld [vmem:[#allocation2 + $0x80] sm:$0xff]
    %v1331 = vld [vmem:[#allocation2 + $0x88] sm:$0xff]
    %1332 = vmatprep.subr.mxu0 %v231
    %1333 = vmatpush1.msra.mxu0 %v230
    %1334 = vmatprep.subr.mxu0 %v228
    %1335 = vmatpush1.msra.mxu0 %v227
    %1336 = vmatprep.subr.mxu0 %v225
    %1337 = vmatpush1.msra.mxu0 %v224
    %1338 = vmatprep.subr.mxu0 %v222
    %1339 = vmatpush1.msra.mxu0 %v221
    %1340 = vmatprep.subr.mxu0 %v219
    %1341 = vmatpush1.msra.mxu0 %v218
    %1342 = vmatprep.subr.mxu0 %v216
    %1343 = vmatpush1.msra.mxu0 %v215
    %1344 = vmatprep.subr.mxu0 %v213
    %1345 = vmatpush1.msra.mxu0 %v212
    %1346 = vmatprep.subr.mxu0 %v210
    %1347 = vmatpush1.msra.mxu0 %v209
    %1348 = vmatprep.subr.mxu0 %v207
    %1349 = vmatpush1.msra.mxu0 %v206
    %1350 = vmatprep.subr.mxu0 %v204
    %1351 = vmatpush1.msra.mxu0 %v203
    %1352 = vmatprep.subr.mxu0 %v201
    %1353 = vmatpush1.msra.mxu0 %v200
    %1354 = vmatprep.subr.mxu0 %v198
    %1355 = vmatpush1.msra.mxu0 %v197
    %1356 = vmatprep.subr.mxu0 %v195
    %1357 = vmatpush1.msra.mxu0 %v194
    %1358 = vmatprep.subr.mxu0 %v192
    %1359 = vmatpush1.msra.mxu0 %v191
    %1360 = vmatprep.subr.mxu0 %v189
    %1361 = vmatpush1.msra.mxu0 %v188
    %1362 = vmatprep.subr.mxu0 %v186
    %1363 = vmatpush1.msra.mxu0 %v185
    %1364 = vmatprep.subr.mxu0 0.0
    %1365 = vmatpush2.msra.mxu0 0.0
    %1366 = vmatprep.subr.mxu0 0.0
    %1367 = vmatpush2.msra.mxu0 0.0
    %1368 = vmatprep.subr.mxu0 0.0
    %1369 = vmatpush2.msra.mxu0 0.0
    %1370 = vmatprep.subr.mxu0 0.0
    %1371 = vmatpush2.msra.mxu0 0.0
    %1372 = vmatprep.subr.mxu0 0.0
    %1373 = vmatpush2.msra.mxu0 0.0
    %1374 = vmatprep.subr.mxu0 0.0
    %1375 = vmatpush2.msra.mxu0 0.0
    %1376 = vmatprep.subr.mxu0 0.0
    %1377 = vmatpush2.msra.mxu0 0.0
    %1378 = vmatprep.subr.mxu0 0.0
    %1379 = vmatpush2.msra.mxu0 0.0
    %1380 = vmatprep.subr.mxu0 0.0
    %1381 = vmatpush2.msra.mxu0 0.0
    %1382 = vmatprep.subr.mxu0 0.0
    %1383 = vmatpush2.msra.mxu0 0.0
    %1384 = vmatprep.subr.mxu0 0.0
    %1385 = vmatpush2.msra.mxu0 0.0
    %1386 = vmatprep.subr.mxu0 0.0
    %1387 = vmatpush2.msra.mxu0 0.0
    %1388 = vmatprep.subr.mxu0 0.0
    %1389 = vmatpush2.msra.mxu0 0.0
    %1390 = vmatprep.subr.mxu0 0.0
    %1391 = vmatpush2.msra.mxu0 0.0
    %1392 = vmatprep.subr.mxu0 0.0
    %1393 = vmatpush2.msra.mxu0 0.0
    %1394 = vmatprep.subr.mxu0 0.0
    %1395 = vmatpush2.msra.mxu0 0.0
    %1396 = vmatprep.mubr.f32.mxu0 0.0
    %1397 = vmatmul.mubr.f32.gmra.mxu0 %v1327
    %v1398 = vpop.f32.mrf.mxu0
    %v1399 = vadd.f32 0.0, %v1398
    %v1400 = vpop.f32.mrf.mxu0
    %v1401 = vadd.f32 0.0, %v1400
    %1402 = vdwg.mxu0
    %1403 = vmatprep.subr.mxu0 0.0
    %1404 = vmatpush1.msra.mxu0 %v232
    %1405 = vmatprep.subr.mxu0 0.0
    %1406 = vmatpush1.msra.mxu0 %v229
    %1407 = vmatprep.subr.mxu0 0.0
    %1408 = vmatpush1.msra.mxu0 %v226
    %1409 = vmatprep.subr.mxu0 0.0
    %1410 = vmatpush1.msra.mxu0 %v223
    %1411 = vmatprep.subr.mxu0 0.0
    %1412 = vmatpush1.msra.mxu0 %v220
    %1413 = vmatprep.subr.mxu0 0.0
    %1414 = vmatpush1.msra.mxu0 %v217
    %1415 = vmatprep.subr.mxu0 0.0
    %1416 = vmatpush1.msra.mxu0 %v214
    %1417 = vmatprep.subr.mxu0 0.0
    %1418 = vmatpush1.msra.mxu0 %v211
    %1419 = vmatprep.subr.mxu0 0.0
    %1420 = vmatpush1.msra.mxu0 %v208
    %1421 = vmatprep.subr.mxu0 0.0
    %1422 = vmatpush1.msra.mxu0 %v205
    %1423 = vmatprep.subr.mxu0 0.0
    %1424 = vmatpush1.msra.mxu0 %v202
    %1425 = vmatprep.subr.mxu0 0.0
    %1426 = vmatpush1.msra.mxu0 %v199
    %1427 = vmatprep.subr.mxu0 0.0
    %1428 = vmatpush1.msra.mxu0 %v196
    %1429 = vmatprep.subr.mxu0 0.0
    %1430 = vmatpush1.msra.mxu0 %v193
    %1431 = vmatprep.subr.mxu0 0.0
    %1432 = vmatpush1.msra.mxu0 %v190
    %1433 = vmatprep.subr.mxu0 0.0
    %1434 = vmatpush1.msra.mxu0 %v187
    %1435 = vmatprep.subr.mxu0 0.0
    %1436 = vmatpush2.msra.mxu0 0.0
    %1437 = vmatprep.subr.mxu0 0.0
    %1438 = vmatpush2.msra.mxu0 0.0
    %1439 = vmatprep.subr.mxu0 0.0
    %1440 = vmatpush2.msra.mxu0 0.0
    %1441 = vmatprep.subr.mxu0 0.0
    %1442 = vmatpush2.msra.mxu0 0.0
    %1443 = vmatprep.subr.mxu0 0.0
    %1444 = vmatpush2.msra.mxu0 0.0
    %1445 = vmatprep.subr.mxu0 0.0
    %1446 = vmatpush2.msra.mxu0 0.0
    %1447 = vmatprep.subr.mxu0 0.0
    %1448 = vmatpush2.msra.mxu0 0.0
    %1449 = vmatprep.subr.mxu0 0.0
    %1450 = vmatpush2.msra.mxu0 0.0
    %1451 = vmatprep.subr.mxu0 0.0
    %1452 = vmatpush2.msra.mxu0 0.0
    %1453 = vmatprep.subr.mxu0 0.0
    %1454 = vmatpush2.msra.mxu0 0.0
    %1455 = vmatprep.subr.mxu0 0.0
    %1456 = vmatpush2.msra.mxu0 0.0
    %1457 = vmatprep.subr.mxu0 0.0
    %1458 = vmatpush2.msra.mxu0 0.0
    %1459 = vmatprep.subr.mxu0 0.0
    %1460 = vmatpush2.msra.mxu0 0.0
    %1461 = vmatprep.subr.mxu0 0.0
    %1462 = vmatpush2.msra.mxu0 0.0
    %1463 = vmatprep.subr.mxu0 0.0
    %1464 = vmatpush2.msra.mxu0 0.0
    %1465 = vmatprep.subr.mxu0 0.0
    %1466 = vmatpush2.msra.mxu0 0.0
    %1467 = vmatprep.mubr.f32.mxu0 0.0
    %1468 = vmatmul.mubr.f32.gmra.mxu0 %v1327
    %v1469 = vpop.f32.mrf.mxu0
    %v1470 = vadd.f32 0.0, %v1469
    %v1471 = vpop.f32.mrf.mxu0
    %1472 = vdwg.mxu0
    %v1473 = vadd.f32 %v1329, %v1399
    %v1474 = vxor.u32 %v1473, 2147483648
    %v1475 = vmul.f32 %v1474, 1.442695
    %v1476 = vpow.pop %v1475
    %v1477 = vadd.f32 %v1476, 1.0
    %v1478 = vrcp.pop %v1477
    %v1479 = vmul.f32 1.0, %v1478
    %v1480 = vadd.f32 %v1330, %v1401
    %v1481 = vxor.u32 %v1480, 2147483648
    %v1482 = vmul.f32 %v1481, 1.442695
    %v1483 = vpow.pop %v1482
    %v1484 = vadd.f32 %v1483, 1.0
    %v1485 = vrcp.pop %v1484
    %v1486 = vmul.f32 1.0, %v1485
    %v1487 = vadd.f32 %v1470, %v239
    %v1488 = vmul.f32 %v1479, %v1487
    %v1489 = vadd.f32 %v1331, %v1488
    %v1490 = vtanh.pop %v1489
    %v1491 = vsub.f32 1.0, %v1486
    %v1492 = vmul.f32 %v1491, %v1490
    %v1493 = vmul.f32 %v1486, %v1327
    %v1494 = vadd.f32 %v1492, %v1493
    %1495 = vst [vmem:[#allocation3 + $0x28] sm:$0xff] %v1494
    %v1496 = vld [vmem:[#allocation2 + $0x90] sm:$0xff]
    %v1497 = vld [vmem:[#allocation2 + $0x98] sm:$0xff]
    %v1498 = vld [vmem:[#allocation2 + $0xa0] sm:$0xff]
    %1499 = vmatprep.subr.mxu0 %v231
    %1500 = vmatpush1.msra.mxu0 %v230
    %1501 = vmatprep.subr.mxu0 %v228
    %1502 = vmatpush1.msra.mxu0 %v227
    %1503 = vmatprep.subr.mxu0 %v225
    %1504 = vmatpush1.msra.mxu0 %v224
    %1505 = vmatprep.subr.mxu0 %v222
    %1506 = vmatpush1.msra.mxu0 %v221
    %1507 = vmatprep.subr.mxu0 %v219
    %1508 = vmatpush1.msra.mxu0 %v218
    %1509 = vmatprep.subr.mxu0 %v216
    %1510 = vmatpush1.msra.mxu0 %v215
    %1511 = vmatprep.subr.mxu0 %v213
    %1512 = vmatpush1.msra.mxu0 %v212
    %1513 = vmatprep.subr.mxu0 %v210
    %1514 = vmatpush1.msra.mxu0 %v209
    %1515 = vmatprep.subr.mxu0 %v207
    %1516 = vmatpush1.msra.mxu0 %v206
    %1517 = vmatprep.subr.mxu0 %v204
    %1518 = vmatpush1.msra.mxu0 %v203
    %1519 = vmatprep.subr.mxu0 %v201
    %1520 = vmatpush1.msra.mxu0 %v200
    %1521 = vmatprep.subr.mxu0 %v198
    %1522 = vmatpush1.msra.mxu0 %v197
    %1523 = vmatprep.subr.mxu0 %v195
    %1524 = vmatpush1.msra.mxu0 %v194
    %1525 = vmatprep.subr.mxu0 %v192
    %1526 = vmatpush1.msra.mxu0 %v191
    %1527 = vmatprep.subr.mxu0 %v189
    %1528 = vmatpush1.msra.mxu0 %v188
    %1529 = vmatprep.subr.mxu0 %v186
    %1530 = vmatpush1.msra.mxu0 %v185
    %1531 = vmatprep.subr.mxu0 0.0
    %1532 = vmatpush2.msra.mxu0 0.0
    %1533 = vmatprep.subr.mxu0 0.0
    %1534 = vmatpush2.msra.mxu0 0.0
    %1535 = vmatprep.subr.mxu0 0.0
    %1536 = vmatpush2.msra.mxu0 0.0
    %1537 = vmatprep.subr.mxu0 0.0
    %1538 = vmatpush2.msra.mxu0 0.0
    %1539 = vmatprep.subr.mxu0 0.0
    %1540 = vmatpush2.msra.mxu0 0.0
    %1541 = vmatprep.subr.mxu0 0.0
    %1542 = vmatpush2.msra.mxu0 0.0
    %1543 = vmatprep.subr.mxu0 0.0
    %1544 = vmatpush2.msra.mxu0 0.0
    %1545 = vmatprep.subr.mxu0 0.0
    %1546 = vmatpush2.msra.mxu0 0.0
    %1547 = vmatprep.subr.mxu0 0.0
    %1548 = vmatpush2.msra.mxu0 0.0
    %1549 = vmatprep.subr.mxu0 0.0
    %1550 = vmatpush2.msra.mxu0 0.0
    %1551 = vmatprep.subr.mxu0 0.0
    %1552 = vmatpush2.msra.mxu0 0.0
    %1553 = vmatprep.subr.mxu0 0.0
    %1554 = vmatpush2.msra.mxu0 0.0
    %1555 = vmatprep.subr.mxu0 0.0
    %1556 = vmatpush2.msra.mxu0 0.0
    %1557 = vmatprep.subr.mxu0 0.0
    %1558 = vmatpush2.msra.mxu0 0.0
    %1559 = vmatprep.subr.mxu0 0.0
    %1560 = vmatpush2.msra.mxu0 0.0
    %1561 = vmatprep.subr.mxu0 0.0
    %1562 = vmatpush2.msra.mxu0 0.0
    %1563 = vmatprep.mubr.f32.mxu0 0.0
    %1564 = vmatmul.mubr.f32.gmra.mxu0 %v1494
    %v1565 = vpop.f32.mrf.mxu0
    %v1566 = vadd.f32 0.0, %v1565
    %v1567 = vpop.f32.mrf.mxu0
    %v1568 = vadd.f32 0.0, %v1567
    %1569 = vdwg.mxu0
    %1570 = vmatprep.subr.mxu0 0.0
    %1571 = vmatpush1.msra.mxu0 %v232
    %1572 = vmatprep.subr.mxu0 0.0
    %1573 = vmatpush1.msra.mxu0 %v229
    %1574 = vmatprep.subr.mxu0 0.0
    %1575 = vmatpush1.msra.mxu0 %v226
    %1576 = vmatprep.subr.mxu0 0.0
    %1577 = vmatpush1.msra.mxu0 %v223
    %1578 = vmatprep.subr.mxu0 0.0
    %1579 = vmatpush1.msra.mxu0 %v220
    %1580 = vmatprep.subr.mxu0 0.0
    %1581 = vmatpush1.msra.mxu0 %v217
    %1582 = vmatprep.subr.mxu0 0.0
    %1583 = vmatpush1.msra.mxu0 %v214
    %1584 = vmatprep.subr.mxu0 0.0
    %1585 = vmatpush1.msra.mxu0 %v211
    %1586 = vmatprep.subr.mxu0 0.0
    %1587 = vmatpush1.msra.mxu0 %v208
    %1588 = vmatprep.subr.mxu0 0.0
    %1589 = vmatpush1.msra.mxu0 %v205
    %1590 = vmatprep.subr.mxu0 0.0
    %1591 = vmatpush1.msra.mxu0 %v202
    %1592 = vmatprep.subr.mxu0 0.0
    %1593 = vmatpush1.msra.mxu0 %v199
    %1594 = vmatprep.subr.mxu0 0.0
    %1595 = vmatpush1.msra.mxu0 %v196
    %1596 = vmatprep.subr.mxu0 0.0
    %1597 = vmatpush1.msra.mxu0 %v193
    %1598 = vmatprep.subr.mxu0 0.0
    %1599 = vmatpush1.msra.mxu0 %v190
    %1600 = vmatprep.subr.mxu0 0.0
    %1601 = vmatpush1.msra.mxu0 %v187
    %1602 = vmatprep.subr.mxu0 0.0
    %1603 = vmatpush2.msra.mxu0 0.0
    %1604 = vmatprep.subr.mxu0 0.0
    %1605 = vmatpush2.msra.mxu0 0.0
    %1606 = vmatprep.subr.mxu0 0.0
    %1607 = vmatpush2.msra.mxu0 0.0
    %1608 = vmatprep.subr.mxu0 0.0
    %1609 = vmatpush2.msra.mxu0 0.0
    %1610 = vmatprep.subr.mxu0 0.0
    %1611 = vmatpush2.msra.mxu0 0.0
    %1612 = vmatprep.subr.mxu0 0.0
    %1613 = vmatpush2.msra.mxu0 0.0
    %1614 = vmatprep.subr.mxu0 0.0
    %1615 = vmatpush2.msra.mxu0 0.0
    %1616 = vmatprep.subr.mxu0 0.0
    %1617 = vmatpush2.msra.mxu0 0.0
    %1618 = vmatprep.subr.mxu0 0.0
    %1619 = vmatpush2.msra.mxu0 0.0
    %1620 = vmatprep.subr.mxu0 0.0
    %1621 = vmatpush2.msra.mxu0 0.0
    %1622 = vmatprep.subr.mxu0 0.0
    %1623 = vmatpush2.msra.mxu0 0.0
    %1624 = vmatprep.subr.mxu0 0.0
    %1625 = vmatpush2.msra.mxu0 0.0
    %1626 = vmatprep.subr.mxu0 0.0
    %1627 = vmatpush2.msra.mxu0 0.0
    %1628 = vmatprep.subr.mxu0 0.0
    %1629 = vmatpush2.msra.mxu0 0.0
    %1630 = vmatprep.subr.mxu0 0.0
    %1631 = vmatpush2.msra.mxu0 0.0
    %1632 = vmatprep.subr.mxu0 0.0
    %1633 = vmatpush2.msra.mxu0 0.0
    %1634 = vmatprep.mubr.f32.mxu0 0.0
    %1635 = vmatmul.mubr.f32.gmra.mxu0 %v1494
    %v1636 = vpop.f32.mrf.mxu0
    %v1637 = vadd.f32 0.0, %v1636
    %v1638 = vpop.f32.mrf.mxu0
    %1639 = vdwg.mxu0
    %v1640 = vadd.f32 %v1496, %v1566
    %v1641 = vxor.u32 %v1640, 2147483648
    %v1642 = vmul.f32 %v1641, 1.442695
    %v1643 = vpow.pop %v1642
    %v1644 = vadd.f32 %v1643, 1.0
    %v1645 = vrcp.pop %v1644
    %v1646 = vmul.f32 1.0, %v1645
    %v1647 = vadd.f32 %v1497, %v1568
    %v1648 = vxor.u32 %v1647, 2147483648
    %v1649 = vmul.f32 %v1648, 1.442695
    %v1650 = vpow.pop %v1649
    %v1651 = vadd.f32 %v1650, 1.0
    %v1652 = vrcp.pop %v1651
    %v1653 = vmul.f32 1.0, %v1652
    %v1654 = vadd.f32 %v1637, %v239
    %v1655 = vmul.f32 %v1646, %v1654
    %v1656 = vadd.f32 %v1498, %v1655
    %v1657 = vtanh.pop %v1656
    %v1658 = vsub.f32 1.0, %v1653
    %v1659 = vmul.f32 %v1658, %v1657
    %v1660 = vmul.f32 %v1653, %v1494
    %v1661 = vadd.f32 %v1659, %v1660
    %1662 = vst [vmem:[#allocation3 + $0x30] sm:$0xff] %v1661
    %v1663 = vld [vmem:[#allocation2 + $0xa8] sm:$0xff]
    %v1664 = vld [vmem:[#allocation2 + $0xb0] sm:$0xff]
    %v1665 = vld [vmem:[#allocation2 + $0xb8] sm:$0xff]
    %1666 = vmatprep.subr.mxu0 %v231
    %1667 = vmatpush1.msra.mxu0 %v230
    %1668 = vmatprep.subr.mxu0 %v228
    %1669 = vmatpush1.msra.mxu0 %v227
    %1670 = vmatprep.subr.mxu0 %v225
    %1671 = vmatpush1.msra.mxu0 %v224
    %1672 = vmatprep.subr.mxu0 %v222
    %1673 = vmatpush1.msra.mxu0 %v221
    %1674 = vmatprep.subr.mxu0 %v219
    %1675 = vmatpush1.msra.mxu0 %v218
    %1676 = vmatprep.subr.mxu0 %v216
    %1677 = vmatpush1.msra.mxu0 %v215
    %1678 = vmatprep.subr.mxu0 %v213
    %1679 = vmatpush1.msra.mxu0 %v212
    %1680 = vmatprep.subr.mxu0 %v210
    %1681 = vmatpush1.msra.mxu0 %v209
    %1682 = vmatprep.subr.mxu0 %v207
    %1683 = vmatpush1.msra.mxu0 %v206
    %1684 = vmatprep.subr.mxu0 %v204
    %1685 = vmatpush1.msra.mxu0 %v203
    %1686 = vmatprep.subr.mxu0 %v201
    %1687 = vmatpush1.msra.mxu0 %v200
    %1688 = vmatprep.subr.mxu0 %v198
    %1689 = vmatpush1.msra.mxu0 %v197
    %1690 = vmatprep.subr.mxu0 %v195
    %1691 = vmatpush1.msra.mxu0 %v194
    %1692 = vmatprep.subr.mxu0 %v192
    %1693 = vmatpush1.msra.mxu0 %v191
    %1694 = vmatprep.subr.mxu0 %v189
    %1695 = vmatpush1.msra.mxu0 %v188
    %1696 = vmatprep.subr.mxu0 %v186
    %1697 = vmatpush1.msra.mxu0 %v185
    %1698 = vmatprep.subr.mxu0 0.0
    %1699 = vmatpush2.msra.mxu0 0.0
    %1700 = vmatprep.subr.mxu0 0.0
    %1701 = vmatpush2.msra.mxu0 0.0
    %1702 = vmatprep.subr.mxu0 0.0
    %1703 = vmatpush2.msra.mxu0 0.0
    %1704 = vmatprep.subr.mxu0 0.0
    %1705 = vmatpush2.msra.mxu0 0.0
    %1706 = vmatprep.subr.mxu0 0.0
    %1707 = vmatpush2.msra.mxu0 0.0
    %1708 = vmatprep.subr.mxu0 0.0
    %1709 = vmatpush2.msra.mxu0 0.0
    %1710 = vmatprep.subr.mxu0 0.0
    %1711 = vmatpush2.msra.mxu0 0.0
    %1712 = vmatprep.subr.mxu0 0.0
    %1713 = vmatpush2.msra.mxu0 0.0
    %1714 = vmatprep.subr.mxu0 0.0
    %1715 = vmatpush2.msra.mxu0 0.0
    %1716 = vmatprep.subr.mxu0 0.0
    %1717 = vmatpush2.msra.mxu0 0.0
    %1718 = vmatprep.subr.mxu0 0.0
    %1719 = vmatpush2.msra.mxu0 0.0
    %1720 = vmatprep.subr.mxu0 0.0
    %1721 = vmatpush2.msra.mxu0 0.0
    %1722 = vmatprep.subr.mxu0 0.0
    %1723 = vmatpush2.msra.mxu0 0.0
    %1724 = vmatprep.subr.mxu0 0.0
    %1725 = vmatpush2.msra.mxu0 0.0
    %1726 = vmatprep.subr.mxu0 0.0
    %1727 = vmatpush2.msra.mxu0 0.0
    %1728 = vmatprep.subr.mxu0 0.0
    %1729 = vmatpush2.msra.mxu0 0.0
    %1730 = vmatprep.mubr.f32.mxu0 0.0
    %1731 = vmatmul.mubr.f32.gmra.mxu0 %v1661
    %v1732 = vpop.f32.mrf.mxu0
    %v1733 = vadd.f32 0.0, %v1732
    %v1734 = vpop.f32.mrf.mxu0
    %v1735 = vadd.f32 0.0, %v1734
    %1736 = vdwg.mxu0
    %1737 = vmatprep.subr.mxu0 0.0
    %1738 = vmatpush1.msra.mxu0 %v232
    %1739 = vmatprep.subr.mxu0 0.0
    %1740 = vmatpush1.msra.mxu0 %v229
    %1741 = vmatprep.subr.mxu0 0.0
    %1742 = vmatpush1.msra.mxu0 %v226
    %1743 = vmatprep.subr.mxu0 0.0
    %1744 = vmatpush1.msra.mxu0 %v223
    %1745 = vmatprep.subr.mxu0 0.0
    %1746 = vmatpush1.msra.mxu0 %v220
    %1747 = vmatprep.subr.mxu0 0.0
    %1748 = vmatpush1.msra.mxu0 %v217
    %1749 = vmatprep.subr.mxu0 0.0
    %1750 = vmatpush1.msra.mxu0 %v214
    %1751 = vmatprep.subr.mxu0 0.0
    %1752 = vmatpush1.msra.mxu0 %v211
    %1753 = vmatprep.subr.mxu0 0.0
    %1754 = vmatpush1.msra.mxu0 %v208
    %1755 = vmatprep.subr.mxu0 0.0
    %1756 = vmatpush1.msra.mxu0 %v205
    %1757 = vmatprep.subr.mxu0 0.0
    %1758 = vmatpush1.msra.mxu0 %v202
    %1759 = vmatprep.subr.mxu0 0.0
    %1760 = vmatpush1.msra.mxu0 %v199
    %1761 = vmatprep.subr.mxu0 0.0
    %1762 = vmatpush1.msra.mxu0 %v196
    %1763 = vmatprep.subr.mxu0 0.0
    %1764 = vmatpush1.msra.mxu0 %v193
    %1765 = vmatprep.subr.mxu0 0.0
    %1766 = vmatpush1.msra.mxu0 %v190
    %1767 = vmatprep.subr.mxu0 0.0
    %1768 = vmatpush1.msra.mxu0 %v187
    %1769 = vmatprep.subr.mxu0 0.0
    %1770 = vmatpush2.msra.mxu0 0.0
    %1771 = vmatprep.subr.mxu0 0.0
    %1772 = vmatpush2.msra.mxu0 0.0
    %1773 = vmatprep.subr.mxu0 0.0
    %1774 = vmatpush2.msra.mxu0 0.0
    %1775 = vmatprep.subr.mxu0 0.0
    %1776 = vmatpush2.msra.mxu0 0.0
    %1777 = vmatprep.subr.mxu0 0.0
    %1778 = vmatpush2.msra.mxu0 0.0
    %1779 = vmatprep.subr.mxu0 0.0
    %1780 = vmatpush2.msra.mxu0 0.0
    %1781 = vmatprep.subr.mxu0 0.0
    %1782 = vmatpush2.msra.mxu0 0.0
    %1783 = vmatprep.subr.mxu0 0.0
    %1784 = vmatpush2.msra.mxu0 0.0
    %1785 = vmatprep.subr.mxu0 0.0
    %1786 = vmatpush2.msra.mxu0 0.0
    %1787 = vmatprep.subr.mxu0 0.0
    %1788 = vmatpush2.msra.mxu0 0.0
    %1789 = vmatprep.subr.mxu0 0.0
    %1790 = vmatpush2.msra.mxu0 0.0
    %1791 = vmatprep.subr.mxu0 0.0
    %1792 = vmatpush2.msra.mxu0 0.0
    %1793 = vmatprep.subr.mxu0 0.0
    %1794 = vmatpush2.msra.mxu0 0.0
    %1795 = vmatprep.subr.mxu0 0.0
    %1796 = vmatpush2.msra.mxu0 0.0
    %1797 = vmatprep.subr.mxu0 0.0
    %1798 = vmatpush2.msra.mxu0 0.0
    %1799 = vmatprep.subr.mxu0 0.0
    %1800 = vmatpush2.msra.mxu0 0.0
    %1801 = vmatprep.mubr.f32.mxu0 0.0
    %1802 = vmatmul.mubr.f32.gmra.mxu0 %v1661
    %v1803 = vpop.f32.mrf.mxu0
    %v1804 = vadd.f32 0.0, %v1803
    %v1805 = vpop.f32.mrf.mxu0
    %1806 = vdwg.mxu0
    %v1807 = vadd.f32 %v1663, %v1733
    %v1808 = vxor.u32 %v1807, 2147483648
    %v1809 = vmul.f32 %v1808, 1.442695
    %v1810 = vpow.pop %v1809
    %v1811 = vadd.f32 %v1810, 1.0
    %v1812 = vrcp.pop %v1811
    %v1813 = vmul.f32 1.0, %v1812
    %v1814 = vadd.f32 %v1664, %v1735
    %v1815 = vxor.u32 %v1814, 2147483648
    %v1816 = vmul.f32 %v1815, 1.442695
    %v1817 = vpow.pop %v1816
    %v1818 = vadd.f32 %v1817, 1.0
    %v1819 = vrcp.pop %v1818
    %v1820 = vmul.f32 1.0, %v1819
    %v1821 = vadd.f32 %v1804, %v239
    %v1822 = vmul.f32 %v1813, %v1821
    %v1823 = vadd.f32 %v1665, %v1822
    %v1824 = vtanh.pop %v1823
    %v1825 = vsub.f32 1.0, %v1820
    %v1826 = vmul.f32 %v1825, %v1824
    %v1827 = vmul.f32 %v1820, %v1661
    %v1828 = vadd.f32 %v1826, %v1827
    %1829 = vst [vmem:[#allocation3 + $0x38] sm:$0xff] %v1828
    %v1830 = vld [vmem:[#allocation3] sm:$0xff]
    %v1831 = vld [vmem:[#allocation3 + $0x8] sm:$0xff]
    %v1832 = vld [vmem:[#allocation3 + $0x10] sm:$0xff]
    %v1833 = vld [vmem:[#allocation3 + $0x18] sm:$0xff]
    %v1834 = vld [vmem:[#allocation3 + $0x20] sm:$0xff]
    %v1835 = vld [vmem:[#allocation3 + $0x28] sm:$0xff]
    %v1836 = vld [vmem:[#allocation3 + $0x30] sm:$0xff]
    %v1837 = vld [vmem:[#allocation3 + $0x38] sm:$0xff]
    %s1838 = scalar_lea.vmem [#allocation4], 792
    %v1839 = vld [vmem:[%s1838] sm:$0xff]
    %v1840 = vld [vmem:[%s1838 + $0x8] sm:$0xff]
    %v1841 = vld [vmem:[%s1838 + $0x10] sm:$0xff]
    %v1842 = vld [vmem:[%s1838 + $0x18] sm:$0xff]
    %v1843 = vld [vmem:[%s1838 + $0x20] sm:$0xff]
    %v1844 = vld [vmem:[%s1838 + $0x28] sm:$0xff]
    %v1845 = vld [vmem:[%s1838 + $0x30] sm:$0xff]
    %v1846 = vld [vmem:[%s1838 + $0x38] sm:$0xff]
    %v1847 = vld [vmem:[%s1838 + $0x40] sm:$0xff]
    %v1848 = vld [vmem:[%s1838 + $0x48] sm:$0xff]
    %v1849 = vld [vmem:[%s1838 + $0x50] sm:$0xff]
    %v1850 = vld [vmem:[%s1838 + $0x58] sm:$0xff]
    %v1851 = vld [vmem:[%s1838 + $0x60] sm:$0xff]
    %v1852 = vld [vmem:[%s1838 + $0x68] sm:$0xff]
    %v1853 = vld [vmem:[%s1838 + $0x70] sm:$0xff]
    %v1854 = vld [vmem:[%s1838 + $0x78] sm:$0xff]
    %v1855 = vld [vmem:[%s1838 + $0x80] sm:$0xff]
    %v1856 = vld [vmem:[%s1838 + $0x88] sm:$0xff]
    %v1857 = vld [vmem:[%s1838 + $0x90] sm:$0xff]
    %v1858 = vld [vmem:[%s1838 + $0x98] sm:$0xff]
    %v1859 = vld [vmem:[%s1838 + $0xa0] sm:$0xff]
    %v1860 = vld [vmem:[%s1838 + $0xa8] sm:$0xff]
    %v1861 = vld [vmem:[%s1838 + $0xb0] sm:$0xff]
    %v1862 = vld [vmem:[%s1838 + $0xb8] sm:$0xff]
    %v1863 = vld [vmem:[%s1838 + $0xc0] sm:$0xff]
    %v1864 = vld [vmem:[%s1838 + $0xc8] sm:$0xff]
    %v1865 = vld [vmem:[%s1838 + $0xd0] sm:$0xff]
    %v1866 = vld [vmem:[%s1838 + $0xd8] sm:$0xff]
    %v1867 = vld [vmem:[%s1838 + $0xe0] sm:$0xff]
    %v1868 = vld [vmem:[%s1838 + $0xe8] sm:$0xff]
    %v1869 = vld [vmem:[%s1838 + $0xf0] sm:$0xff]
    %v1870 = vld [vmem:[%s1838 + $0xf8] sm:$0xff]
    %v1871 = vld [vmem:[%s1838 + $0x100] sm:$0xff]
    %v1872 = vld [vmem:[%s1838 + $0x108] sm:$0xff]
    %v1873 = vld [vmem:[%s1838 + $0x110] sm:$0xff]
    %v1874 = vld [vmem:[%s1838 + $0x118] sm:$0xff]
    %v1875 = vld [vmem:[%s1838 + $0x120] sm:$0xff]
    %v1876 = vld [vmem:[%s1838 + $0x128] sm:$0xff]
    %v1877 = vld [vmem:[%s1838 + $0x130] sm:$0xff]
    %v1878 = vld [vmem:[%s1838 + $0x138] sm:$0xff]
    %v1879 = vld [vmem:[%s1838 + $0x140] sm:$0xff]
    %v1880 = vld [vmem:[%s1838 + $0x148] sm:$0xff]
    %v1881 = vld [vmem:[%s1838 + $0x150] sm:$0xff]
    %v1882 = vld [vmem:[%s1838 + $0x158] sm:$0xff]
    %v1883 = vld [vmem:[%s1838 + $0x160] sm:$0xff]
    %v1884 = vld [vmem:[%s1838 + $0x168] sm:$0xff]
    %v1885 = vld [vmem:[%s1838 + $0x170] sm:$0xff]
    %v1886 = vld [vmem:[%s1838 + $0x178] sm:$0xff]
    %v1887 = vld [vmem:[%s1838 + $0x180] sm:$0xff]
    %v1888 = vld [vmem:[%s1838 + $0x188] sm:$0xff]
    %v1889 = vld [vmem:[%s1838 + $0x190] sm:$0xff]
    %v1890 = vld [vmem:[%s1838 + $0x198] sm:$0xff]
    %v1891 = vld [vmem:[%s1838 + $0x1a0] sm:$0xff]
    %v1892 = vld [vmem:[%s1838 + $0x1a8] sm:$0xff]
    %v1893 = vld [vmem:[%s1838 + $0x1b0] sm:$0xff]
    %v1894 = vld [vmem:[%s1838 + $0x1b8] sm:$0xff]
    %v1895 = vld [vmem:[%s1838 + $0x1c0] sm:$0xff]
    %v1896 = vld [vmem:[%s1838 + $0x1c8] sm:$0xff]
    %v1897 = vld [vmem:[%s1838 + $0x1d0] sm:$0xff]
    %v1898 = vld [vmem:[%s1838 + $0x1d8] sm:$0xff]
    %v1899 = vld [vmem:[%s1838 + $0x1e0] sm:$0xff]
    %v1900 = vld [vmem:[%s1838 + $0x1e8] sm:$0xff]
    %v1901 = vld [vmem:[%s1838 + $0x1f0] sm:$0xff]
    %v1902 = vld [vmem:[%s1838 + $0x1f8] sm:$0xff]
    %v1903 = vld [vmem:[%s1838 + $0x200] sm:$0xff]
    %v1904 = vld [vmem:[%s1838 + $0x208] sm:$0xff]
    %v1905 = vld [vmem:[%s1838 + $0x210] sm:$0xff]
    %v1906 = vld [vmem:[%s1838 + $0x218] sm:$0xff]
    %v1907 = vld [vmem:[%s1838 + $0x220] sm:$0xff]
    %v1908 = vld [vmem:[%s1838 + $0x228] sm:$0xff]
    %v1909 = vld [vmem:[%s1838 + $0x230] sm:$0xff]
    %v1910 = vld [vmem:[%s1838 + $0x238] sm:$0xff]
    %v1911 = vld [vmem:[%s1838 + $0x240] sm:$0xff]
    %v1912 = vld [vmem:[%s1838 + $0x248] sm:$0xff]
    %v1913 = vld [vmem:[%s1838 + $0x250] sm:$0xff]
    %v1914 = vld [vmem:[%s1838 + $0x258] sm:$0xff]
    %v1915 = vld [vmem:[%s1838 + $0x260] sm:$0xff]
    %v1916 = vld [vmem:[%s1838 + $0x268] sm:$0xff]
    %v1917 = vld [vmem:[%s1838 + $0x270] sm:$0xff]
    %v1918 = vld [vmem:[%s1838 + $0x278] sm:$0xff]
    %v1919 = vld [vmem:[%s1838 + $0x280] sm:$0xff]
    %v1920 = vld [vmem:[%s1838 + $0x288] sm:$0xff]
    %v1921 = vld [vmem:[%s1838 + $0x290] sm:$0xff]
    %v1922 = vld [vmem:[%s1838 + $0x298] sm:$0xff]
    %v1923 = vld [vmem:[%s1838 + $0x2a0] sm:$0xff]
    %v1924 = vld [vmem:[%s1838 + $0x2a8] sm:$0xff]
    %v1925 = vld [vmem:[%s1838 + $0x2b0] sm:$0xff]
    %v1926 = vld [vmem:[%s1838 + $0x2b8] sm:$0xff]
    %v1927 = vld [vmem:[%s1838 + $0x2c0] sm:$0xff]
    %v1928 = vld [vmem:[%s1838 + $0x2c8] sm:$0xff]
    %v1929 = vld [vmem:[%s1838 + $0x2d0] sm:$0xff]
    %v1930 = vld [vmem:[%s1838 + $0x2d8] sm:$0xff]
    %v1931 = vld [vmem:[%s1838 + $0x2e0] sm:$0xff]
    %v1932 = vld [vmem:[%s1838 + $0x2e8] sm:$0xff]
    %v1933 = vld [vmem:[%s1838 + $0x2f0] sm:$0xff]
    %v1934 = vld [vmem:[%s1838 + $0x2f8] sm:$0xff]
    %v1935 = vld [vmem:[%s1838 + $0x300] sm:$0xff]
    %v1936 = vld [vmem:[%s1838 + $0x308] sm:$0xff]
    %v1937 = vld [vmem:[%s1838 + $0x310] sm:$0xff]
    %v1938 = vlaneseq
    %v1939 = vshrl.u32 %v1938, 7
    %v1940 = vsub.s32 1, %v1939
    %v1941 = vrot.slane %v1937, %v1940
    %v1942 = vlaneseq
    %v1943 = vshrl.u32 %v1942, 7
    %v1944 = vsub.s32 0, %v1943
    %v1945 = vrot.slane %v1935, %v1944
    %v1946 = vlaneseq
    %v1947 = vshrl.u32 %v1946, 7
    %v1948 = vsub.s32 0, %v1947
    %v1949 = vrot.slane %v1936, %v1948
    %v1950 = vlaneseq
    %v1951 = vshrl.u32 %v1950, 7
    %v1952 = vsub.s32 0, %v1951
    %v1953 = vrot.slane %v1937, %v1952
    %1954 = vmatprep.subr.mxu0 %v1885
    %1955 = vmatpush1.msra.mxu0 %v1884
    %1956 = vmatprep.subr.mxu0 %v1882
    %1957 = vmatpush1.msra.mxu0 %v1881
    %1958 = vmatprep.subr.mxu0 %v1879
    %1959 = vmatpush1.msra.mxu0 %v1878
    %1960 = vmatprep.subr.mxu0 %v1876
    %1961 = vmatpush1.msra.mxu0 %v1875
    %1962 = vmatprep.subr.mxu0 %v1873
    %1963 = vmatpush1.msra.mxu0 %v1872
    %1964 = vmatprep.subr.mxu0 %v1870
    %1965 = vmatpush1.msra.mxu0 %v1869
    %1966 = vmatprep.subr.mxu0 %v1867
    %1967 = vmatpush1.msra.mxu0 %v1866
    %1968 = vmatprep.subr.mxu0 %v1864
    %1969 = vmatpush1.msra.mxu0 %v1863
    %1970 = vmatprep.subr.mxu0 %v1861
    %1971 = vmatpush1.msra.mxu0 %v1860
    %1972 = vmatprep.subr.mxu0 %v1858
    %1973 = vmatpush1.msra.mxu0 %v1857
    %1974 = vmatprep.subr.mxu0 %v1855
    %1975 = vmatpush1.msra.mxu0 %v1854
    %1976 = vmatprep.subr.mxu0 %v1852
    %1977 = vmatpush1.msra.mxu0 %v1851
    %1978 = vmatprep.subr.mxu0 %v1849
    %1979 = vmatpush1.msra.mxu0 %v1848
    %1980 = vmatprep.subr.mxu0 %v1846
    %1981 = vmatpush1.msra.mxu0 %v1845
    %1982 = vmatprep.subr.mxu0 %v1843
    %1983 = vmatpush1.msra.mxu0 %v1842
    %1984 = vmatprep.subr.mxu0 %v1840
    %1985 = vmatpush1.msra.mxu0 %v1839
    %1986 = vmatprep.subr.mxu0 0.0
    %1987 = vmatpush2.msra.mxu0 0.0
    %1988 = vmatprep.subr.mxu0 0.0
    %1989 = vmatpush2.msra.mxu0 0.0
    %1990 = vmatprep.subr.mxu0 0.0
    %1991 = vmatpush2.msra.mxu0 0.0
    %1992 = vmatprep.subr.mxu0 0.0
    %1993 = vmatpush2.msra.mxu0 0.0
    %1994 = vmatprep.subr.mxu0 0.0
    %1995 = vmatpush2.msra.mxu0 0.0
    %1996 = vmatprep.subr.mxu0 0.0
    %1997 = vmatpush2.msra.mxu0 0.0
    %1998 = vmatprep.subr.mxu0 0.0
    %1999 = vmatpush2.msra.mxu0 0.0
    %2000 = vmatprep.subr.mxu0 0.0
    %2001 = vmatpush2.msra.mxu0 0.0
    %2002 = vmatprep.subr.mxu0 0.0
    %2003 = vmatpush2.msra.mxu0 0.0
    %2004 = vmatprep.subr.mxu0 0.0
    %2005 = vmatpush2.msra.mxu0 0.0
    %2006 = vmatprep.subr.mxu0 0.0
    %2007 = vmatpush2.msra.mxu0 0.0
    %2008 = vmatprep.subr.mxu0 0.0
    %2009 = vmatpush2.msra.mxu0 0.0
    %2010 = vmatprep.subr.mxu0 0.0
    %2011 = vmatpush2.msra.mxu0 0.0
    %2012 = vmatprep.subr.mxu0 0.0
    %2013 = vmatpush2.msra.mxu0 0.0
    %2014 = vmatprep.subr.mxu0 0.0
    %2015 = vmatpush2.msra.mxu0 0.0
    %2016 = vmatprep.subr.mxu0 0.0
    %2017 = vmatpush2.msra.mxu0 0.0
    %2018 = vmatprep.mubr.f32.mxu0 0.0
    %2019 = vmatmul.mubr.f32.gmra.mxu0 %v1830
    %v2020 = vpop.f32.mrf.mxu0
    %v2021 = vadd.f32 %v1945, %v2020
    %v2022 = vpop.f32.mrf.mxu0
    %v2023 = vadd.f32 %v1949, %v2022
    %2024 = vmatprep.mubr.f32.mxu0 0.0
    %2025 = vmatmul.mubr.f32.gmra.mxu0 %v1831
    %v2026 = vpop.f32.mrf.mxu0
    %v2027 = vadd.f32 %v1945, %v2026
    %v2028 = vpop.f32.mrf.mxu0
    %v2029 = vadd.f32 %v1949, %v2028
    %2030 = vmatprep.mubr.f32.mxu0 0.0
    %2031 = vmatmul.mubr.f32.gmra.mxu0 %v1832
    %v2032 = vpop.f32.mrf.mxu0
    %v2033 = vadd.f32 %v1945, %v2032
    %v2034 = vpop.f32.mrf.mxu0
    %v2035 = vadd.f32 %v1949, %v2034
    %2036 = vmatprep.mubr.f32.mxu0 0.0
    %2037 = vmatmul.mubr.f32.gmra.mxu0 %v1833
    %v2038 = vpop.f32.mrf.mxu0
    %v2039 = vadd.f32 %v1945, %v2038
    %v2040 = vpop.f32.mrf.mxu0
    %v2041 = vadd.f32 %v1949, %v2040
    %2042 = vmatprep.mubr.f32.mxu0 0.0
    %2043 = vmatmul.mubr.f32.gmra.mxu0 %v1834
    %v2044 = vpop.f32.mrf.mxu0
    %v2045 = vadd.f32 %v1945, %v2044
    %v2046 = vpop.f32.mrf.mxu0
    %v2047 = vadd.f32 %v1949, %v2046
    %2048 = vmatprep.mubr.f32.mxu0 0.0
    %2049 = vmatmul.mubr.f32.gmra.mxu0 %v1835
    %v2050 = vpop.f32.mrf.mxu0
    %v2051 = vadd.f32 %v1945, %v2050
    %v2052 = vpop.f32.mrf.mxu0
    %v2053 = vadd.f32 %v1949, %v2052
    %2054 = vmatprep.mubr.f32.mxu0 0.0
    %2055 = vmatmul.mubr.f32.gmra.mxu0 %v1836
    %v2056 = vpop.f32.mrf.mxu0
    %v2057 = vadd.f32 %v1945, %v2056
    %v2058 = vpop.f32.mrf.mxu0
    %v2059 = vadd.f32 %v1949, %v2058
    %2060 = vmatprep.mubr.f32.mxu0 0.0
    %2061 = vmatmul.mubr.f32.gmra.mxu0 %v1837
    %v2062 = vpop.f32.mrf.mxu0
    %v2063 = vadd.f32 %v1945, %v2062
    %v2064 = vpop.f32.mrf.mxu0
    %v2065 = vadd.f32 %v1949, %v2064
    %2066 = vdwg.mxu0
    %2067 = vmatprep.subr.mxu0 0.0
    %2068 = vmatpush1.msra.mxu0 %v1886
    %2069 = vmatprep.subr.mxu0 0.0
    %2070 = vmatpush1.msra.mxu0 %v1883
    %2071 = vmatprep.subr.mxu0 0.0
    %2072 = vmatpush1.msra.mxu0 %v1880
    %2073 = vmatprep.subr.mxu0 0.0
    %2074 = vmatpush1.msra.mxu0 %v1877
    %2075 = vmatprep.subr.mxu0 0.0
    %2076 = vmatpush1.msra.mxu0 %v1874
    %2077 = vmatprep.subr.mxu0 0.0
    %2078 = vmatpush1.msra.mxu0 %v1871
    %2079 = vmatprep.subr.mxu0 0.0
    %2080 = vmatpush1.msra.mxu0 %v1868
    %2081 = vmatprep.subr.mxu0 0.0
    %2082 = vmatpush1.msra.mxu0 %v1865
    %2083 = vmatprep.subr.mxu0 0.0
    %2084 = vmatpush1.msra.mxu0 %v1862
    %2085 = vmatprep.subr.mxu0 0.0
    %2086 = vmatpush1.msra.mxu0 %v1859
    %2087 = vmatprep.subr.mxu0 0.0
    %2088 = vmatpush1.msra.mxu0 %v1856
    %2089 = vmatprep.subr.mxu0 0.0
    %2090 = vmatpush1.msra.mxu0 %v1853
    %2091 = vmatprep.subr.mxu0 0.0
    %2092 = vmatpush1.msra.mxu0 %v1850
    %2093 = vmatprep.subr.mxu0 0.0
    %2094 = vmatpush1.msra.mxu0 %v1847
    %2095 = vmatprep.subr.mxu0 0.0
    %2096 = vmatpush1.msra.mxu0 %v1844
    %2097 = vmatprep.subr.mxu0 0.0
    %2098 = vmatpush1.msra.mxu0 %v1841
    %2099 = vmatprep.subr.mxu0 0.0
    %2100 = vmatpush2.msra.mxu0 0.0
    %2101 = vmatprep.subr.mxu0 0.0
    %2102 = vmatpush2.msra.mxu0 0.0
    %2103 = vmatprep.subr.mxu0 0.0
    %2104 = vmatpush2.msra.mxu0 0.0
    %2105 = vmatprep.subr.mxu0 0.0
    %2106 = vmatpush2.msra.mxu0 0.0
    %2107 = vmatprep.subr.mxu0 0.0
    %2108 = vmatpush2.msra.mxu0 0.0
    %2109 = vmatprep.subr.mxu0 0.0
    %2110 = vmatpush2.msra.mxu0 0.0
    %2111 = vmatprep.subr.mxu0 0.0
    %2112 = vmatpush2.msra.mxu0 0.0
    %2113 = vmatprep.subr.mxu0 0.0
    %2114 = vmatpush2.msra.mxu0 0.0
    %2115 = vmatprep.subr.mxu0 0.0
    %2116 = vmatpush2.msra.mxu0 0.0
    %2117 = vmatprep.subr.mxu0 0.0
    %2118 = vmatpush2.msra.mxu0 0.0
    %2119 = vmatprep.subr.mxu0 0.0
    %2120 = vmatpush2.msra.mxu0 0.0
    %2121 = vmatprep.subr.mxu0 0.0
    %2122 = vmatpush2.msra.mxu0 0.0
    %2123 = vmatprep.subr.mxu0 0.0
    %2124 = vmatpush2.msra.mxu0 0.0
    %2125 = vmatprep.subr.mxu0 0.0
    %2126 = vmatpush2.msra.mxu0 0.0
    %2127 = vmatprep.subr.mxu0 0.0
    %2128 = vmatpush2.msra.mxu0 0.0
    %2129 = vmatprep.subr.mxu0 0.0
    %2130 = vmatpush2.msra.mxu0 0.0
    %2131 = vmatprep.mubr.f32.mxu0 0.0
    %2132 = vmatmul.mubr.f32.gmra.mxu0 %v1830
    %v2133 = vpop.f32.mrf.mxu0
    %v2134 = vadd.f32 %v1953, %v2133
    %v2135 = vpop.f32.mrf.mxu0
    %2136 = vmatprep.mubr.f32.mxu0 0.0
    %2137 = vmatmul.mubr.f32.gmra.mxu0 %v1831
    %v2138 = vpop.f32.mrf.mxu0
    %v2139 = vadd.f32 %v1953, %v2138
    %v2140 = vpop.f32.mrf.mxu0
    %2141 = vmatprep.mubr.f32.mxu0 0.0
    %2142 = vmatmul.mubr.f32.gmra.mxu0 %v1832
    %v2143 = vpop.f32.mrf.mxu0
    %v2144 = vadd.f32 %v1953, %v2143
    %v2145 = vpop.f32.mrf.mxu0
    %2146 = vmatprep.mubr.f32.mxu0 0.0
    %2147 = vmatmul.mubr.f32.gmra.mxu0 %v1833
    %v2148 = vpop.f32.mrf.mxu0
    %v2149 = vadd.f32 %v1953, %v2148
    %v2150 = vpop.f32.mrf.mxu0
    %2151 = vmatprep.mubr.f32.mxu0 0.0
    %2152 = vmatmul.mubr.f32.gmra.mxu0 %v1834
    %v2153 = vpop.f32.mrf.mxu0
    %v2154 = vadd.f32 %v1953, %v2153
    %v2155 = vpop.f32.mrf.mxu0
    %2156 = vmatprep.mubr.f32.mxu0 0.0
    %2157 = vmatmul.mubr.f32.gmra.mxu0 %v1835
    %v2158 = vpop.f32.mrf.mxu0
    %v2159 = vadd.f32 %v1953, %v2158
    %v2160 = vpop.f32.mrf.mxu0
    %2161 = vmatprep.mubr.f32.mxu0 0.0
    %2162 = vmatmul.mubr.f32.gmra.mxu0 %v1836
    %v2163 = vpop.f32.mrf.mxu0
    %v2164 = vadd.f32 %v1953, %v2163
    %v2165 = vpop.f32.mrf.mxu0
    %2166 = vmatprep.mubr.f32.mxu0 0.0
    %2167 = vmatmul.mubr.f32.gmra.mxu0 %v1837
    %v2168 = vpop.f32.mrf.mxu0
    %v2169 = vadd.f32 %v1953, %v2168
    %v2170 = vpop.f32.mrf.mxu0
    %2171 = vdwg.mxu0
    %2172 = vst [vmem:[#allocation2] sm:$0xff] %v2021
    %2173 = vst [vmem:[#allocation2 + $0x8] sm:$0xff] %v2023
    %2174 = vst [vmem:[#allocation2 + $0x10] sm:$0xff] %v2134
    %2175 = vst [vmem:[#allocation2 + $0x18] sm:$0xff] %v2027
    %2176 = vst [vmem:[#allocation2 + $0x20] sm:$0xff] %v2029
    %2177 = vst [vmem:[#allocation2 + $0x28] sm:$0xff] %v2139
    %2178 = vst [vmem:[#allocation2 + $0x30] sm:$0xff] %v2033
    %2179 = vst [vmem:[#allocation2 + $0x38] sm:$0xff] %v2035
    %2180 = vst [vmem:[#allocation2 + $0x40] sm:$0xff] %v2144
    %2181 = vst [vmem:[#allocation2 + $0x48] sm:$0xff] %v2039
    %2182 = vst [vmem:[#allocation2 + $0x50] sm:$0xff] %v2041
    %2183 = vst [vmem:[#allocation2 + $0x58] sm:$0xff] %v2149
    %2184 = vst [vmem:[#allocation2 + $0x60] sm:$0xff] %v2045
    %2185 = vst [vmem:[#allocation2 + $0x68] sm:$0xff] %v2047
    %2186 = vst [vmem:[#allocation2 + $0x70] sm:$0xff] %v2154
    %2187 = vst [vmem:[#allocation2 + $0x78] sm:$0xff] %v2051
    %2188 = vst [vmem:[#allocation2 + $0x80] sm:$0xff] %v2053
    %2189 = vst [vmem:[#allocation2 + $0x88] sm:$0xff] %v2159
    %2190 = vst [vmem:[#allocation2 + $0x90] sm:$0xff] %v2057
    %2191 = vst [vmem:[#allocation2 + $0x98] sm:$0xff] %v2059
    %2192 = vst [vmem:[#allocation2 + $0xa0] sm:$0xff] %v2164
    %2193 = vst [vmem:[#allocation2 + $0xa8] sm:$0xff] %v2063
    %2194 = vst [vmem:[#allocation2 + $0xb0] sm:$0xff] %v2065
    %2195 = vst [vmem:[#allocation2 + $0xb8] sm:$0xff] %v2169
    %v2196 = vld [vmem:[#allocation2] sm:$0xff]
    %v2197 = vld [vmem:[#allocation2 + $0x8] sm:$0xff]
    %v2198 = vld [vmem:[#allocation2 + $0x10] sm:$0xff]
    %2199 = vmatprep.subr.mxu0 %v1933
    %2200 = vmatpush1.msra.mxu0 %v1932
    %2201 = vmatprep.subr.mxu0 %v1930
    %2202 = vmatpush1.msra.mxu0 %v1929
    %2203 = vmatprep.subr.mxu0 %v1927
    %2204 = vmatpush1.msra.mxu0 %v1926
    %2205 = vmatprep.subr.mxu0 %v1924
    %2206 = vmatpush1.msra.mxu0 %v1923
    %2207 = vmatprep.subr.mxu0 %v1921
    %2208 = vmatpush1.msra.mxu0 %v1920
    %2209 = vmatprep.subr.mxu0 %v1918
    %2210 = vmatpush1.msra.mxu0 %v1917
    %2211 = vmatprep.subr.mxu0 %v1915
    %2212 = vmatpush1.msra.mxu0 %v1914
    %2213 = vmatprep.subr.mxu0 %v1912
    %2214 = vmatpush1.msra.mxu0 %v1911
    %2215 = vmatprep.subr.mxu0 %v1909
    %2216 = vmatpush1.msra.mxu0 %v1908
    %2217 = vmatprep.subr.mxu0 %v1906
    %2218 = vmatpush1.msra.mxu0 %v1905
    %2219 = vmatprep.subr.mxu0 %v1903
    %2220 = vmatpush1.msra.mxu0 %v1902
    %2221 = vmatprep.subr.mxu0 %v1900
    %2222 = vmatpush1.msra.mxu0 %v1899
    %2223 = vmatprep.subr.mxu0 %v1897
    %2224 = vmatpush1.msra.mxu0 %v1896
    %2225 = vmatprep.subr.mxu0 %v1894
    %2226 = vmatpush1.msra.mxu0 %v1893
    %2227 = vmatprep.subr.mxu0 %v1891
    %2228 = vmatpush1.msra.mxu0 %v1890
    %2229 = vmatprep.subr.mxu0 %v1888
    %2230 = vmatpush1.msra.mxu0 %v1887
    %2231 = vmatprep.subr.mxu0 0.0
    %2232 = vmatpush2.msra.mxu0 0.0
    %2233 = vmatprep.subr.mxu0 0.0
    %2234 = vmatpush2.msra.mxu0 0.0
    %2235 = vmatprep.subr.mxu0 0.0
    %2236 = vmatpush2.msra.mxu0 0.0
    %2237 = vmatprep.subr.mxu0 0.0
    %2238 = vmatpush2.msra.mxu0 0.0
    %2239 = vmatprep.subr.mxu0 0.0
    %2240 = vmatpush2.msra.mxu0 0.0
    %2241 = vmatprep.subr.mxu0 0.0
    %2242 = vmatpush2.msra.mxu0 0.0
    %2243 = vmatprep.subr.mxu0 0.0
    %2244 = vmatpush2.msra.mxu0 0.0
    %2245 = vmatprep.subr.mxu0 0.0
    %2246 = vmatpush2.msra.mxu0 0.0
    %2247 = vmatprep.subr.mxu0 0.0
    %2248 = vmatpush2.msra.mxu0 0.0
    %2249 = vmatprep.subr.mxu0 0.0
    %2250 = vmatpush2.msra.mxu0 0.0
    %2251 = vmatprep.subr.mxu0 0.0
    %2252 = vmatpush2.msra.mxu0 0.0
    %2253 = vmatprep.subr.mxu0 0.0
    %2254 = vmatpush2.msra.mxu0 0.0
    %2255 = vmatprep.subr.mxu0 0.0
    %2256 = vmatpush2.msra.mxu0 0.0
    %2257 = vmatprep.subr.mxu0 0.0
    %2258 = vmatpush2.msra.mxu0 0.0
    %2259 = vmatprep.subr.mxu0 0.0
    %2260 = vmatpush2.msra.mxu0 0.0
    %2261 = vmatprep.subr.mxu0 0.0
    %2262 = vmatpush2.msra.mxu0 0.0
    %2263 = vmatprep.mubr.f32.mxu0 0.0
    %2264 = vmatmul.mubr.f32.gmra.mxu0 0.0
    %v2265 = vpop.f32.mrf.mxu0
    %v2266 = vadd.f32 0.0, %v2265
    %v2267 = vpop.f32.mrf.mxu0
    %v2268 = vadd.f32 0.0, %v2267
    %2269 = vdwg.mxu0
    %2270 = vmatprep.subr.mxu0 0.0
    %2271 = vmatpush1.msra.mxu0 %v1934
    %2272 = vmatprep.subr.mxu0 0.0
    %2273 = vmatpush1.msra.mxu0 %v1931
    %2274 = vmatprep.subr.mxu0 0.0
    %2275 = vmatpush1.msra.mxu0 %v1928
    %2276 = vmatprep.subr.mxu0 0.0
    %2277 = vmatpush1.msra.mxu0 %v1925
    %2278 = vmatprep.subr.mxu0 0.0
    %2279 = vmatpush1.msra.mxu0 %v1922
    %2280 = vmatprep.subr.mxu0 0.0
    %2281 = vmatpush1.msra.mxu0 %v1919
    %2282 = vmatprep.subr.mxu0 0.0
    %2283 = vmatpush1.msra.mxu0 %v1916
    %2284 = vmatprep.subr.mxu0 0.0
    %2285 = vmatpush1.msra.mxu0 %v1913
    %2286 = vmatprep.subr.mxu0 0.0
    %2287 = vmatpush1.msra.mxu0 %v1910
    %2288 = vmatprep.subr.mxu0 0.0
    %2289 = vmatpush1.msra.mxu0 %v1907
    %2290 = vmatprep.subr.mxu0 0.0
    %2291 = vmatpush1.msra.mxu0 %v1904
    %2292 = vmatprep.subr.mxu0 0.0
    %2293 = vmatpush1.msra.mxu0 %v1901
    %2294 = vmatprep.subr.mxu0 0.0
    %2295 = vmatpush1.msra.mxu0 %v1898
    %2296 = vmatprep.subr.mxu0 0.0
    %2297 = vmatpush1.msra.mxu0 %v1895
    %2298 = vmatprep.subr.mxu0 0.0
    %2299 = vmatpush1.msra.mxu0 %v1892
    %2300 = vmatprep.subr.mxu0 0.0
    %2301 = vmatpush1.msra.mxu0 %v1889
    %2302 = vmatprep.subr.mxu0 0.0
    %2303 = vmatpush2.msra.mxu0 0.0
    %2304 = vmatprep.subr.mxu0 0.0
    %2305 = vmatpush2.msra.mxu0 0.0
    %2306 = vmatprep.subr.mxu0 0.0
    %2307 = vmatpush2.msra.mxu0 0.0
    %2308 = vmatprep.subr.mxu0 0.0
    %2309 = vmatpush2.msra.mxu0 0.0
    %2310 = vmatprep.subr.mxu0 0.0
    %2311 = vmatpush2.msra.mxu0 0.0
    %2312 = vmatprep.subr.mxu0 0.0
    %2313 = vmatpush2.msra.mxu0 0.0
    %2314 = vmatprep.subr.mxu0 0.0
    %2315 = vmatpush2.msra.mxu0 0.0
    %2316 = vmatprep.subr.mxu0 0.0
    %2317 = vmatpush2.msra.mxu0 0.0
    %2318 = vmatprep.subr.mxu0 0.0
    %2319 = vmatpush2.msra.mxu0 0.0
    %2320 = vmatprep.subr.mxu0 0.0
    %2321 = vmatpush2.msra.mxu0 0.0
    %2322 = vmatprep.subr.mxu0 0.0
    %2323 = vmatpush2.msra.mxu0 0.0
    %2324 = vmatprep.subr.mxu0 0.0
    %2325 = vmatpush2.msra.mxu0 0.0
    %2326 = vmatprep.subr.mxu0 0.0
    %2327 = vmatpush2.msra.mxu0 0.0
    %2328 = vmatprep.subr.mxu0 0.0
    %2329 = vmatpush2.msra.mxu0 0.0
    %2330 = vmatprep.subr.mxu0 0.0
    %2331 = vmatpush2.msra.mxu0 0.0
    %2332 = vmatprep.subr.mxu0 0.0
    %2333 = vmatpush2.msra.mxu0 0.0
    %2334 = vmatprep.mubr.f32.mxu0 0.0
    %2335 = vmatmul.mubr.f32.gmra.mxu0 0.0
    %v2336 = vpop.f32.mrf.mxu0
    %v2337 = vadd.f32 0.0, %v2336
    %v2338 = vpop.f32.mrf.mxu0
    %2339 = vdwg.mxu0
    %v2340 = vadd.f32 %v2196, %v2266
    %v2341 = vxor.u32 %v2340, 2147483648
    %v2342 = vmul.f32 %v2341, 1.442695
    %v2343 = vpow.pop %v2342
    %v2344 = vadd.f32 %v2343, 1.0
    %v2345 = vrcp.pop %v2344
    %v2346 = vmul.f32 1.0, %v2345
    %v2347 = vadd.f32 %v2197, %v2268
    %v2348 = vxor.u32 %v2347, 2147483648
    %v2349 = vmul.f32 %v2348, 1.442695
    %v2350 = vpow.pop %v2349
    %v2351 = vadd.f32 %v2350, 1.0
    %v2352 = vrcp.pop %v2351
    %v2353 = vmul.f32 1.0, %v2352
    %v2354 = vadd.f32 %v2337, %v1941
    %v2355 = vmul.f32 %v2346, %v2354
    %v2356 = vadd.f32 %v2198, %v2355
    %v2357 = vtanh.pop %v2356
    %v2358 = vsub.f32 1.0, %v2353
    %v2359 = vmul.f32 %v2358, %v2357
    %v2360 = vmul.f32 %v2353, 0.0
    %v2361 = vadd.f32 %v2359, %v2360
    %v2362 = vld [vmem:[#allocation2 + $0x18] sm:$0xff]
    %v2363 = vld [vmem:[#allocation2 + $0x20] sm:$0xff]
    %v2364 = vld [vmem:[#allocation2 + $0x28] sm:$0xff]
    %2365 = vmatprep.subr.mxu0 %v1933
    %2366 = vmatpush1.msra.mxu0 %v1932
    %2367 = vmatprep.subr.mxu0 %v1930
    %2368 = vmatpush1.msra.mxu0 %v1929
    %2369 = vmatprep.subr.mxu0 %v1927
    %2370 = vmatpush1.msra.mxu0 %v1926
    %2371 = vmatprep.subr.mxu0 %v1924
    %2372 = vmatpush1.msra.mxu0 %v1923
    %2373 = vmatprep.subr.mxu0 %v1921
    %2374 = vmatpush1.msra.mxu0 %v1920
    %2375 = vmatprep.subr.mxu0 %v1918
    %2376 = vmatpush1.msra.mxu0 %v1917
    %2377 = vmatprep.subr.mxu0 %v1915
    %2378 = vmatpush1.msra.mxu0 %v1914
    %2379 = vmatprep.subr.mxu0 %v1912
    %2380 = vmatpush1.msra.mxu0 %v1911
    %2381 = vmatprep.subr.mxu0 %v1909
    %2382 = vmatpush1.msra.mxu0 %v1908
    %2383 = vmatprep.subr.mxu0 %v1906
    %2384 = vmatpush1.msra.mxu0 %v1905
    %2385 = vmatprep.subr.mxu0 %v1903
    %2386 = vmatpush1.msra.mxu0 %v1902
    %2387 = vmatprep.subr.mxu0 %v1900
    %2388 = vmatpush1.msra.mxu0 %v1899
    %2389 = vmatprep.subr.mxu0 %v1897
    %2390 = vmatpush1.msra.mxu0 %v1896
    %2391 = vmatprep.subr.mxu0 %v1894
    %2392 = vmatpush1.msra.mxu0 %v1893
    %2393 = vmatprep.subr.mxu0 %v1891
    %2394 = vmatpush1.msra.mxu0 %v1890
    %2395 = vmatprep.subr.mxu0 %v1888
    %2396 = vmatpush1.msra.mxu0 %v1887
    %2397 = vmatprep.subr.mxu0 0.0
    %2398 = vmatpush2.msra.mxu0 0.0
    %2399 = vmatprep.subr.mxu0 0.0
    %2400 = vmatpush2.msra.mxu0 0.0
    %2401 = vmatprep.subr.mxu0 0.0
    %2402 = vmatpush2.msra.mxu0 0.0
    %2403 = vmatprep.subr.mxu0 0.0
    %2404 = vmatpush2.msra.mxu0 0.0
    %2405 = vmatprep.subr.mxu0 0.0
    %2406 = vmatpush2.msra.mxu0 0.0
    %2407 = vmatprep.subr.mxu0 0.0
    %2408 = vmatpush2.msra.mxu0 0.0
    %2409 = vmatprep.subr.mxu0 0.0
    %2410 = vmatpush2.msra.mxu0 0.0
    %2411 = vmatprep.subr.mxu0 0.0
    %2412 = vmatpush2.msra.mxu0 0.0
    %2413 = vmatprep.subr.mxu0 0.0
    %2414 = vmatpush2.msra.mxu0 0.0
    %2415 = vmatprep.subr.mxu0 0.0
    %2416 = vmatpush2.msra.mxu0 0.0
    %2417 = vmatprep.subr.mxu0 0.0
    %2418 = vmatpush2.msra.mxu0 0.0
    %2419 = vmatprep.subr.mxu0 0.0
    %2420 = vmatpush2.msra.mxu0 0.0
    %2421 = vmatprep.subr.mxu0 0.0
    %2422 = vmatpush2.msra.mxu0 0.0
    %2423 = vmatprep.subr.mxu0 0.0
    %2424 = vmatpush2.msra.mxu0 0.0
    %2425 = vmatprep.subr.mxu0 0.0
    %2426 = vmatpush2.msra.mxu0 0.0
    %2427 = vmatprep.subr.mxu0 0.0
    %2428 = vmatpush2.msra.mxu0 0.0
    %2429 = vmatprep.mubr.f32.mxu0 0.0
    %2430 = vmatmul.mubr.f32.gmra.mxu0 %v2361
    %v2431 = vpop.f32.mrf.mxu0
    %v2432 = vadd.f32 0.0, %v2431
    %v2433 = vpop.f32.mrf.mxu0
    %v2434 = vadd.f32 0.0, %v2433
    %2435 = vdwg.mxu0
    %2436 = vmatprep.subr.mxu0 0.0
    %2437 = vmatpush1.msra.mxu0 %v1934
    %2438 = vmatprep.subr.mxu0 0.0
    %2439 = vmatpush1.msra.mxu0 %v1931
    %2440 = vmatprep.subr.mxu0 0.0
    %2441 = vmatpush1.msra.mxu0 %v1928
    %2442 = vmatprep.subr.mxu0 0.0
    %2443 = vmatpush1.msra.mxu0 %v1925
    %2444 = vmatprep.subr.mxu0 0.0
    %2445 = vmatpush1.msra.mxu0 %v1922
    %2446 = vmatprep.subr.mxu0 0.0
    %2447 = vmatpush1.msra.mxu0 %v1919
    %2448 = vmatprep.subr.mxu0 0.0
    %2449 = vmatpush1.msra.mxu0 %v1916
    %2450 = vmatprep.subr.mxu0 0.0
    %2451 = vmatpush1.msra.mxu0 %v1913
    %2452 = vmatprep.subr.mxu0 0.0
    %2453 = vmatpush1.msra.mxu0 %v1910
    %2454 = vmatprep.subr.mxu0 0.0
    %2455 = vmatpush1.msra.mxu0 %v1907
    %2456 = vmatprep.subr.mxu0 0.0
    %2457 = vmatpush1.msra.mxu0 %v1904
    %2458 = vmatprep.subr.mxu0 0.0
    %2459 = vmatpush1.msra.mxu0 %v1901
    %2460 = vmatprep.subr.mxu0 0.0
    %2461 = vmatpush1.msra.mxu0 %v1898
    %2462 = vmatprep.subr.mxu0 0.0
    %2463 = vmatpush1.msra.mxu0 %v1895
    %2464 = vmatprep.subr.mxu0 0.0
    %2465 = vmatpush1.msra.mxu0 %v1892
    %2466 = vmatprep.subr.mxu0 0.0
    %2467 = vmatpush1.msra.mxu0 %v1889
    %2468 = vmatprep.subr.mxu0 0.0
    %2469 = vmatpush2.msra.mxu0 0.0
    %2470 = vmatprep.subr.mxu0 0.0
    %2471 = vmatpush2.msra.mxu0 0.0
    %2472 = vmatprep.subr.mxu0 0.0
    %2473 = vmatpush2.msra.mxu0 0.0
    %2474 = vmatprep.subr.mxu0 0.0
    %2475 = vmatpush2.msra.mxu0 0.0
    %2476 = vmatprep.subr.mxu0 0.0
    %2477 = vmatpush2.msra.mxu0 0.0
    %2478 = vmatprep.subr.mxu0 0.0
    %2479 = vmatpush2.msra.mxu0 0.0
    %2480 = vmatprep.subr.mxu0 0.0
    %2481 = vmatpush2.msra.mxu0 0.0
    %2482 = vmatprep.subr.mxu0 0.0
    %2483 = vmatpush2.msra.mxu0 0.0
    %2484 = vmatprep.subr.mxu0 0.0
    %2485 = vmatpush2.msra.mxu0 0.0
    %2486 = vmatprep.subr.mxu0 0.0
    %2487 = vmatpush2.msra.mxu0 0.0
    %2488 = vmatprep.subr.mxu0 0.0
    %2489 = vmatpush2.msra.mxu0 0.0
    %2490 = vmatprep.subr.mxu0 0.0
    %2491 = vmatpush2.msra.mxu0 0.0
    %2492 = vmatprep.subr.mxu0 0.0
    %2493 = vmatpush2.msra.mxu0 0.0
    %2494 = vmatprep.subr.mxu0 0.0
    %2495 = vmatpush2.msra.mxu0 0.0
    %2496 = vmatprep.subr.mxu0 0.0
    %2497 = vmatpush2.msra.mxu0 0.0
    %2498 = vmatprep.subr.mxu0 0.0
    %2499 = vmatpush2.msra.mxu0 0.0
    %2500 = vmatprep.mubr.f32.mxu0 0.0
    %2501 = vmatmul.mubr.f32.gmra.mxu0 %v2361
    %v2502 = vpop.f32.mrf.mxu0
    %v2503 = vadd.f32 0.0, %v2502
    %v2504 = vpop.f32.mrf.mxu0
    %2505 = vdwg.mxu0
    %v2506 = vadd.f32 %v2362, %v2432
    %v2507 = vxor.u32 %v2506, 2147483648
    %v2508 = vmul.f32 %v2507, 1.442695
    %v2509 = vpow.pop %v2508
    %v2510 = vadd.f32 %v2509, 1.0
    %v2511 = vrcp.pop %v2510
    %v2512 = vmul.f32 1.0, %v2511
    %v2513 = vadd.f32 %v2363, %v2434
    %v2514 = vxor.u32 %v2513, 2147483648
    %v2515 = vmul.f32 %v2514, 1.442695
    %v2516 = vpow.pop %v2515
    %v2517 = vadd.f32 %v2516, 1.0
    %v2518 = vrcp.pop %v2517
    %v2519 = vmul.f32 1.0, %v2518
    %v2520 = vadd.f32 %v2503, %v1941
    %v2521 = vmul.f32 %v2512, %v2520
    %v2522 = vadd.f32 %v2364, %v2521
    %v2523 = vtanh.pop %v2522
    %v2524 = vsub.f32 1.0, %v2519
    %v2525 = vmul.f32 %v2524, %v2523
    %v2526 = vmul.f32 %v2519, %v2361
    %v2527 = vadd.f32 %v2525, %v2526
    %v2528 = vld [vmem:[#allocation2 + $0x30] sm:$0xff]
    %v2529 = vld [vmem:[#allocation2 + $0x38] sm:$0xff]
    %v2530 = vld [vmem:[#allocation2 + $0x40] sm:$0xff]
    %2531 = vmatprep.subr.mxu0 %v1933
    %2532 = vmatpush1.msra.mxu0 %v1932
    %2533 = vmatprep.subr.mxu0 %v1930
    %2534 = vmatpush1.msra.mxu0 %v1929
    %2535 = vmatprep.subr.mxu0 %v1927
    %2536 = vmatpush1.msra.mxu0 %v1926
    %2537 = vmatprep.subr.mxu0 %v1924
    %2538 = vmatpush1.msra.mxu0 %v1923
    %2539 = vmatprep.subr.mxu0 %v1921
    %2540 = vmatpush1.msra.mxu0 %v1920
    %2541 = vmatprep.subr.mxu0 %v1918
    %2542 = vmatpush1.msra.mxu0 %v1917
    %2543 = vmatprep.subr.mxu0 %v1915
    %2544 = vmatpush1.msra.mxu0 %v1914
    %2545 = vmatprep.subr.mxu0 %v1912
    %2546 = vmatpush1.msra.mxu0 %v1911
    %2547 = vmatprep.subr.mxu0 %v1909
    %2548 = vmatpush1.msra.mxu0 %v1908
    %2549 = vmatprep.subr.mxu0 %v1906
    %2550 = vmatpush1.msra.mxu0 %v1905
    %2551 = vmatprep.subr.mxu0 %v1903
    %2552 = vmatpush1.msra.mxu0 %v1902
    %2553 = vmatprep.subr.mxu0 %v1900
    %2554 = vmatpush1.msra.mxu0 %v1899
    %2555 = vmatprep.subr.mxu0 %v1897
    %2556 = vmatpush1.msra.mxu0 %v1896
    %2557 = vmatprep.subr.mxu0 %v1894
    %2558 = vmatpush1.msra.mxu0 %v1893
    %2559 = vmatprep.subr.mxu0 %v1891
    %2560 = vmatpush1.msra.mxu0 %v1890
    %2561 = vmatprep.subr.mxu0 %v1888
    %2562 = vmatpush1.msra.mxu0 %v1887
    %2563 = vmatprep.subr.mxu0 0.0
    %2564 = vmatpush2.msra.mxu0 0.0
    %2565 = vmatprep.subr.mxu0 0.0
    %2566 = vmatpush2.msra.mxu0 0.0
    %2567 = vmatprep.subr.mxu0 0.0
    %2568 = vmatpush2.msra.mxu0 0.0
    %2569 = vmatprep.subr.mxu0 0.0
    %2570 = vmatpush2.msra.mxu0 0.0
    %2571 = vmatprep.subr.mxu0 0.0
    %2572 = vmatpush2.msra.mxu0 0.0
    %2573 = vmatprep.subr.mxu0 0.0
    %2574 = vmatpush2.msra.mxu0 0.0
    %2575 = vmatprep.subr.mxu0 0.0
    %2576 = vmatpush2.msra.mxu0 0.0
    %2577 = vmatprep.subr.mxu0 0.0
    %2578 = vmatpush2.msra.mxu0 0.0
    %2579 = vmatprep.subr.mxu0 0.0
    %2580 = vmatpush2.msra.mxu0 0.0
    %2581 = vmatprep.subr.mxu0 0.0
    %2582 = vmatpush2.msra.mxu0 0.0
    %2583 = vmatprep.subr.mxu0 0.0
    %2584 = vmatpush2.msra.mxu0 0.0
    %2585 = vmatprep.subr.mxu0 0.0
    %2586 = vmatpush2.msra.mxu0 0.0
    %2587 = vmatprep.subr.mxu0 0.0
    %2588 = vmatpush2.msra.mxu0 0.0
    %2589 = vmatprep.subr.mxu0 0.0
    %2590 = vmatpush2.msra.mxu0 0.0
    %2591 = vmatprep.subr.mxu0 0.0
    %2592 = vmatpush2.msra.mxu0 0.0
    %2593 = vmatprep.subr.mxu0 0.0
    %2594 = vmatpush2.msra.mxu0 0.0
    %2595 = vmatprep.mubr.f32.mxu0 0.0
    %2596 = vmatmul.mubr.f32.gmra.mxu0 %v2527
    %v2597 = vpop.f32.mrf.mxu0
    %v2598 = vadd.f32 0.0, %v2597
    %v2599 = vpop.f32.mrf.mxu0
    %v2600 = vadd.f32 0.0, %v2599
    %2601 = vdwg.mxu0
    %2602 = vmatprep.subr.mxu0 0.0
    %2603 = vmatpush1.msra.mxu0 %v1934
    %2604 = vmatprep.subr.mxu0 0.0
    %2605 = vmatpush1.msra.mxu0 %v1931
    %2606 = vmatprep.subr.mxu0 0.0
    %2607 = vmatpush1.msra.mxu0 %v1928
    %2608 = vmatprep.subr.mxu0 0.0
    %2609 = vmatpush1.msra.mxu0 %v1925
    %2610 = vmatprep.subr.mxu0 0.0
    %2611 = vmatpush1.msra.mxu0 %v1922
    %2612 = vmatprep.subr.mxu0 0.0
    %2613 = vmatpush1.msra.mxu0 %v1919
    %2614 = vmatprep.subr.mxu0 0.0
    %2615 = vmatpush1.msra.mxu0 %v1916
    %2616 = vmatprep.subr.mxu0 0.0
    %2617 = vmatpush1.msra.mxu0 %v1913
    %2618 = vmatprep.subr.mxu0 0.0
    %2619 = vmatpush1.msra.mxu0 %v1910
    %2620 = vmatprep.subr.mxu0 0.0
    %2621 = vmatpush1.msra.mxu0 %v1907
    %2622 = vmatprep.subr.mxu0 0.0
    %2623 = vmatpush1.msra.mxu0 %v1904
    %2624 = vmatprep.subr.mxu0 0.0
    %2625 = vmatpush1.msra.mxu0 %v1901
    %2626 = vmatprep.subr.mxu0 0.0
    %2627 = vmatpush1.msra.mxu0 %v1898
    %2628 = vmatprep.subr.mxu0 0.0
    %2629 = vmatpush1.msra.mxu0 %v1895
    %2630 = vmatprep.subr.mxu0 0.0
    %2631 = vmatpush1.msra.mxu0 %v1892
    %2632 = vmatprep.subr.mxu0 0.0
    %2633 = vmatpush1.msra.mxu0 %v1889
    %2634 = vmatprep.subr.mxu0 0.0
    %2635 = vmatpush2.msra.mxu0 0.0
    %2636 = vmatprep.subr.mxu0 0.0
    %2637 = vmatpush2.msra.mxu0 0.0
    %2638 = vmatprep.subr.mxu0 0.0
    %2639 = vmatpush2.msra.mxu0 0.0
    %2640 = vmatprep.subr.mxu0 0.0
    %2641 = vmatpush2.msra.mxu0 0.0
    %2642 = vmatprep.subr.mxu0 0.0
    %2643 = vmatpush2.msra.mxu0 0.0
    %2644 = vmatprep.subr.mxu0 0.0
    %2645 = vmatpush2.msra.mxu0 0.0
    %2646 = vmatprep.subr.mxu0 0.0
    %2647 = vmatpush2.msra.mxu0 0.0
    %2648 = vmatprep.subr.mxu0 0.0
    %2649 = vmatpush2.msra.mxu0 0.0
    %2650 = vmatprep.subr.mxu0 0.0
    %2651 = vmatpush2.msra.mxu0 0.0
    %2652 = vmatprep.subr.mxu0 0.0
    %2653 = vmatpush2.msra.mxu0 0.0
    %2654 = vmatprep.subr.mxu0 0.0
    %2655 = vmatpush2.msra.mxu0 0.0
    %2656 = vmatprep.subr.mxu0 0.0
    %2657 = vmatpush2.msra.mxu0 0.0
    %2658 = vmatprep.subr.mxu0 0.0
    %2659 = vmatpush2.msra.mxu0 0.0
    %2660 = vmatprep.subr.mxu0 0.0
    %2661 = vmatpush2.msra.mxu0 0.0
    %2662 = vmatprep.subr.mxu0 0.0
    %2663 = vmatpush2.msra.mxu0 0.0
    %2664 = vmatprep.subr.mxu0 0.0
    %2665 = vmatpush2.msra.mxu0 0.0
    %2666 = vmatprep.mubr.f32.mxu0 0.0
    %2667 = vmatmul.mubr.f32.gmra.mxu0 %v2527
    %v2668 = vpop.f32.mrf.mxu0
    %v2669 = vadd.f32 0.0, %v2668
    %v2670 = vpop.f32.mrf.mxu0
    %2671 = vdwg.mxu0
    %v2672 = vadd.f32 %v2528, %v2598
    %v2673 = vxor.u32 %v2672, 2147483648
    %v2674 = vmul.f32 %v2673, 1.442695
    %v2675 = vpow.pop %v2674
    %v2676 = vadd.f32 %v2675, 1.0
    %v2677 = vrcp.pop %v2676
    %v2678 = vmul.f32 1.0, %v2677
    %v2679 = vadd.f32 %v2529, %v2600
    %v2680 = vxor.u32 %v2679, 2147483648
    %v2681 = vmul.f32 %v2680, 1.442695
    %v2682 = vpow.pop %v2681
    %v2683 = vadd.f32 %v2682, 1.0
    %v2684 = vrcp.pop %v2683
    %v2685 = vmul.f32 1.0, %v2684
    %v2686 = vadd.f32 %v2669, %v1941
    %v2687 = vmul.f32 %v2678, %v2686
    %v2688 = vadd.f32 %v2530, %v2687
    %v2689 = vtanh.pop %v2688
    %v2690 = vsub.f32 1.0, %v2685
    %v2691 = vmul.f32 %v2690, %v2689
    %v2692 = vmul.f32 %v2685, %v2527
    %v2693 = vadd.f32 %v2691, %v2692
    %v2694 = vld [vmem:[#allocation2 + $0x48] sm:$0xff]
    %v2695 = vld [vmem:[#allocation2 + $0x50] sm:$0xff]
    %v2696 = vld [vmem:[#allocation2 + $0x58] sm:$0xff]
    %2697 = vmatprep.subr.mxu0 %v1933
    %2698 = vmatpush1.msra.mxu0 %v1932
    %2699 = vmatprep.subr.mxu0 %v1930
    %2700 = vmatpush1.msra.mxu0 %v1929
    %2701 = vmatprep.subr.mxu0 %v1927
    %2702 = vmatpush1.msra.mxu0 %v1926
    %2703 = vmatprep.subr.mxu0 %v1924
    %2704 = vmatpush1.msra.mxu0 %v1923
    %2705 = vmatprep.subr.mxu0 %v1921
    %2706 = vmatpush1.msra.mxu0 %v1920
    %2707 = vmatprep.subr.mxu0 %v1918
    %2708 = vmatpush1.msra.mxu0 %v1917
    %2709 = vmatprep.subr.mxu0 %v1915
    %2710 = vmatpush1.msra.mxu0 %v1914
    %2711 = vmatprep.subr.mxu0 %v1912
    %2712 = vmatpush1.msra.mxu0 %v1911
    %2713 = vmatprep.subr.mxu0 %v1909
    %2714 = vmatpush1.msra.mxu0 %v1908
    %2715 = vmatprep.subr.mxu0 %v1906
    %2716 = vmatpush1.msra.mxu0 %v1905
    %2717 = vmatprep.subr.mxu0 %v1903
    %2718 = vmatpush1.msra.mxu0 %v1902
    %2719 = vmatprep.subr.mxu0 %v1900
    %2720 = vmatpush1.msra.mxu0 %v1899
    %2721 = vmatprep.subr.mxu0 %v1897
    %2722 = vmatpush1.msra.mxu0 %v1896
    %2723 = vmatprep.subr.mxu0 %v1894
    %2724 = vmatpush1.msra.mxu0 %v1893
    %2725 = vmatprep.subr.mxu0 %v1891
    %2726 = vmatpush1.msra.mxu0 %v1890
    %2727 = vmatprep.subr.mxu0 %v1888
    %2728 = vmatpush1.msra.mxu0 %v1887
    %2729 = vmatprep.subr.mxu0 0.0
    %2730 = vmatpush2.msra.mxu0 0.0
    %2731 = vmatprep.subr.mxu0 0.0
    %2732 = vmatpush2.msra.mxu0 0.0
    %2733 = vmatprep.subr.mxu0 0.0
    %2734 = vmatpush2.msra.mxu0 0.0
    %2735 = vmatprep.subr.mxu0 0.0
    %2736 = vmatpush2.msra.mxu0 0.0
    %2737 = vmatprep.subr.mxu0 0.0
    %2738 = vmatpush2.msra.mxu0 0.0
    %2739 = vmatprep.subr.mxu0 0.0
    %2740 = vmatpush2.msra.mxu0 0.0
    %2741 = vmatprep.subr.mxu0 0.0
    %2742 = vmatpush2.msra.mxu0 0.0
    %2743 = vmatprep.subr.mxu0 0.0
    %2744 = vmatpush2.msra.mxu0 0.0
    %2745 = vmatprep.subr.mxu0 0.0
    %2746 = vmatpush2.msra.mxu0 0.0
    %2747 = vmatprep.subr.mxu0 0.0
    %2748 = vmatpush2.msra.mxu0 0.0
    %2749 = vmatprep.subr.mxu0 0.0
    %2750 = vmatpush2.msra.mxu0 0.0
    %2751 = vmatprep.subr.mxu0 0.0
    %2752 = vmatpush2.msra.mxu0 0.0
    %2753 = vmatprep.subr.mxu0 0.0
    %2754 = vmatpush2.msra.mxu0 0.0
    %2755 = vmatprep.subr.mxu0 0.0
    %2756 = vmatpush2.msra.mxu0 0.0
    %2757 = vmatprep.subr.mxu0 0.0
    %2758 = vmatpush2.msra.mxu0 0.0
    %2759 = vmatprep.subr.mxu0 0.0
    %2760 = vmatpush2.msra.mxu0 0.0
    %2761 = vmatprep.mubr.f32.mxu0 0.0
    %2762 = vmatmul.mubr.f32.gmra.mxu0 %v2693
    %v2763 = vpop.f32.mrf.mxu0
    %v2764 = vadd.f32 0.0, %v2763
    %v2765 = vpop.f32.mrf.mxu0
    %v2766 = vadd.f32 0.0, %v2765
    %2767 = vdwg.mxu0
    %2768 = vmatprep.subr.mxu0 0.0
    %2769 = vmatpush1.msra.mxu0 %v1934
    %2770 = vmatprep.subr.mxu0 0.0
    %2771 = vmatpush1.msra.mxu0 %v1931
    %2772 = vmatprep.subr.mxu0 0.0
    %2773 = vmatpush1.msra.mxu0 %v1928
    %2774 = vmatprep.subr.mxu0 0.0
    %2775 = vmatpush1.msra.mxu0 %v1925
    %2776 = vmatprep.subr.mxu0 0.0
    %2777 = vmatpush1.msra.mxu0 %v1922
    %2778 = vmatprep.subr.mxu0 0.0
    %2779 = vmatpush1.msra.mxu0 %v1919
    %2780 = vmatprep.subr.mxu0 0.0
    %2781 = vmatpush1.msra.mxu0 %v1916
    %2782 = vmatprep.subr.mxu0 0.0
    %2783 = vmatpush1.msra.mxu0 %v1913
    %2784 = vmatprep.subr.mxu0 0.0
    %2785 = vmatpush1.msra.mxu0 %v1910
    %2786 = vmatprep.subr.mxu0 0.0
    %2787 = vmatpush1.msra.mxu0 %v1907
    %2788 = vmatprep.subr.mxu0 0.0
    %2789 = vmatpush1.msra.mxu0 %v1904
    %2790 = vmatprep.subr.mxu0 0.0
    %2791 = vmatpush1.msra.mxu0 %v1901
    %2792 = vmatprep.subr.mxu0 0.0
    %2793 = vmatpush1.msra.mxu0 %v1898
    %2794 = vmatprep.subr.mxu0 0.0
    %2795 = vmatpush1.msra.mxu0 %v1895
    %2796 = vmatprep.subr.mxu0 0.0
    %2797 = vmatpush1.msra.mxu0 %v1892
    %2798 = vmatprep.subr.mxu0 0.0
    %2799 = vmatpush1.msra.mxu0 %v1889
    %2800 = vmatprep.subr.mxu0 0.0
    %2801 = vmatpush2.msra.mxu0 0.0
    %2802 = vmatprep.subr.mxu0 0.0
    %2803 = vmatpush2.msra.mxu0 0.0
    %2804 = vmatprep.subr.mxu0 0.0
    %2805 = vmatpush2.msra.mxu0 0.0
    %2806 = vmatprep.subr.mxu0 0.0
    %2807 = vmatpush2.msra.mxu0 0.0
    %2808 = vmatprep.subr.mxu0 0.0
    %2809 = vmatpush2.msra.mxu0 0.0
    %2810 = vmatprep.subr.mxu0 0.0
    %2811 = vmatpush2.msra.mxu0 0.0
    %2812 = vmatprep.subr.mxu0 0.0
    %2813 = vmatpush2.msra.mxu0 0.0
    %2814 = vmatprep.subr.mxu0 0.0
    %2815 = vmatpush2.msra.mxu0 0.0
    %2816 = vmatprep.subr.mxu0 0.0
    %2817 = vmatpush2.msra.mxu0 0.0
    %2818 = vmatprep.subr.mxu0 0.0
    %2819 = vmatpush2.msra.mxu0 0.0
    %2820 = vmatprep.subr.mxu0 0.0
    %2821 = vmatpush2.msra.mxu0 0.0
    %2822 = vmatprep.subr.mxu0 0.0
    %2823 = vmatpush2.msra.mxu0 0.0
    %2824 = vmatprep.subr.mxu0 0.0
    %2825 = vmatpush2.msra.mxu0 0.0
    %2826 = vmatprep.subr.mxu0 0.0
    %2827 = vmatpush2.msra.mxu0 0.0
    %2828 = vmatprep.subr.mxu0 0.0
    %2829 = vmatpush2.msra.mxu0 0.0
    %2830 = vmatprep.subr.mxu0 0.0
    %2831 = vmatpush2.msra.mxu0 0.0
    %2832 = vmatprep.mubr.f32.mxu0 0.0
    %2833 = vmatmul.mubr.f32.gmra.mxu0 %v2693
    %v2834 = vpop.f32.mrf.mxu0
    %v2835 = vadd.f32 0.0, %v2834
    %v2836 = vpop.f32.mrf.mxu0
    %2837 = vdwg.mxu0
    %v2838 = vadd.f32 %v2694, %v2764
    %v2839 = vxor.u32 %v2838, 2147483648
    %v2840 = vmul.f32 %v2839, 1.442695
    %v2841 = vpow.pop %v2840
    %v2842 = vadd.f32 %v2841, 1.0
    %v2843 = vrcp.pop %v2842
    %v2844 = vmul.f32 1.0, %v2843
    %v2845 = vadd.f32 %v2695, %v2766
    %v2846 = vxor.u32 %v2845, 2147483648
    %v2847 = vmul.f32 %v2846, 1.442695
    %v2848 = vpow.pop %v2847
    %v2849 = vadd.f32 %v2848, 1.0
    %v2850 = vrcp.pop %v2849
    %v2851 = vmul.f32 1.0, %v2850
    %v2852 = vadd.f32 %v2835, %v1941
    %v2853 = vmul.f32 %v2844, %v2852
    %v2854 = vadd.f32 %v2696, %v2853
    %v2855 = vtanh.pop %v2854
    %v2856 = vsub.f32 1.0, %v2851
    %v2857 = vmul.f32 %v2856, %v2855
    %v2858 = vmul.f32 %v2851, %v2693
    %v2859 = vadd.f32 %v2857, %v2858
    %v2860 = vld [vmem:[#allocation2 + $0x60] sm:$0xff]
    %v2861 = vld [vmem:[#allocation2 + $0x68] sm:$0xff]
    %v2862 = vld [vmem:[#allocation2 + $0x70] sm:$0xff]
    %2863 = vmatprep.subr.mxu0 %v1933
    %2864 = vmatpush1.msra.mxu0 %v1932
    %2865 = vmatprep.subr.mxu0 %v1930
    %2866 = vmatpush1.msra.mxu0 %v1929
    %2867 = vmatprep.subr.mxu0 %v1927
    %2868 = vmatpush1.msra.mxu0 %v1926
    %2869 = vmatprep.subr.mxu0 %v1924
    %2870 = vmatpush1.msra.mxu0 %v1923
    %2871 = vmatprep.subr.mxu0 %v1921
    %2872 = vmatpush1.msra.mxu0 %v1920
    %2873 = vmatprep.subr.mxu0 %v1918
    %2874 = vmatpush1.msra.mxu0 %v1917
    %2875 = vmatprep.subr.mxu0 %v1915
    %2876 = vmatpush1.msra.mxu0 %v1914
    %2877 = vmatprep.subr.mxu0 %v1912
    %2878 = vmatpush1.msra.mxu0 %v1911
    %2879 = vmatprep.subr.mxu0 %v1909
    %2880 = vmatpush1.msra.mxu0 %v1908
    %2881 = vmatprep.subr.mxu0 %v1906
    %2882 = vmatpush1.msra.mxu0 %v1905
    %2883 = vmatprep.subr.mxu0 %v1903
    %2884 = vmatpush1.msra.mxu0 %v1902
    %2885 = vmatprep.subr.mxu0 %v1900
    %2886 = vmatpush1.msra.mxu0 %v1899
    %2887 = vmatprep.subr.mxu0 %v1897
    %2888 = vmatpush1.msra.mxu0 %v1896
    %2889 = vmatprep.subr.mxu0 %v1894
    %2890 = vmatpush1.msra.mxu0 %v1893
    %2891 = vmatprep.subr.mxu0 %v1891
    %2892 = vmatpush1.msra.mxu0 %v1890
    %2893 = vmatprep.subr.mxu0 %v1888
    %2894 = vmatpush1.msra.mxu0 %v1887
    %2895 = vmatprep.subr.mxu0 0.0
    %2896 = vmatpush2.msra.mxu0 0.0
    %2897 = vmatprep.subr.mxu0 0.0
    %2898 = vmatpush2.msra.mxu0 0.0
    %2899 = vmatprep.subr.mxu0 0.0
    %2900 = vmatpush2.msra.mxu0 0.0
    %2901 = vmatprep.subr.mxu0 0.0
    %2902 = vmatpush2.msra.mxu0 0.0
    %2903 = vmatprep.subr.mxu0 0.0
    %2904 = vmatpush2.msra.mxu0 0.0
    %2905 = vmatprep.subr.mxu0 0.0
    %2906 = vmatpush2.msra.mxu0 0.0
    %2907 = vmatprep.subr.mxu0 0.0
    %2908 = vmatpush2.msra.mxu0 0.0
    %2909 = vmatprep.subr.mxu0 0.0
    %2910 = vmatpush2.msra.mxu0 0.0
    %2911 = vmatprep.subr.mxu0 0.0
    %2912 = vmatpush2.msra.mxu0 0.0
    %2913 = vmatprep.subr.mxu0 0.0
    %2914 = vmatpush2.msra.mxu0 0.0
    %2915 = vmatprep.subr.mxu0 0.0
    %2916 = vmatpush2.msra.mxu0 0.0
    %2917 = vmatprep.subr.mxu0 0.0
    %2918 = vmatpush2.msra.mxu0 0.0
    %2919 = vmatprep.subr.mxu0 0.0
    %2920 = vmatpush2.msra.mxu0 0.0
    %2921 = vmatprep.subr.mxu0 0.0
    %2922 = vmatpush2.msra.mxu0 0.0
    %2923 = vmatprep.subr.mxu0 0.0
    %2924 = vmatpush2.msra.mxu0 0.0
    %2925 = vmatprep.subr.mxu0 0.0
    %2926 = vmatpush2.msra.mxu0 0.0
    %2927 = vmatprep.mubr.f32.mxu0 0.0
    %2928 = vmatmul.mubr.f32.gmra.mxu0 %v2859
    %v2929 = vpop.f32.mrf.mxu0
    %v2930 = vadd.f32 0.0, %v2929
    %v2931 = vpop.f32.mrf.mxu0
    %v2932 = vadd.f32 0.0, %v2931
    %2933 = vdwg.mxu0
    %2934 = vmatprep.subr.mxu0 0.0
    %2935 = vmatpush1.msra.mxu0 %v1934
    %2936 = vmatprep.subr.mxu0 0.0
    %2937 = vmatpush1.msra.mxu0 %v1931
    %2938 = vmatprep.subr.mxu0 0.0
    %2939 = vmatpush1.msra.mxu0 %v1928
    %2940 = vmatprep.subr.mxu0 0.0
    %2941 = vmatpush1.msra.mxu0 %v1925
    %2942 = vmatprep.subr.mxu0 0.0
    %2943 = vmatpush1.msra.mxu0 %v1922
    %2944 = vmatprep.subr.mxu0 0.0
    %2945 = vmatpush1.msra.mxu0 %v1919
    %2946 = vmatprep.subr.mxu0 0.0
    %2947 = vmatpush1.msra.mxu0 %v1916
    %2948 = vmatprep.subr.mxu0 0.0
    %2949 = vmatpush1.msra.mxu0 %v1913
    %2950 = vmatprep.subr.mxu0 0.0
    %2951 = vmatpush1.msra.mxu0 %v1910
    %2952 = vmatprep.subr.mxu0 0.0
    %2953 = vmatpush1.msra.mxu0 %v1907
    %2954 = vmatprep.subr.mxu0 0.0
    %2955 = vmatpush1.msra.mxu0 %v1904
    %2956 = vmatprep.subr.mxu0 0.0
    %2957 = vmatpush1.msra.mxu0 %v1901
    %2958 = vmatprep.subr.mxu0 0.0
    %2959 = vmatpush1.msra.mxu0 %v1898
    %2960 = vmatprep.subr.mxu0 0.0
    %2961 = vmatpush1.msra.mxu0 %v1895
    %2962 = vmatprep.subr.mxu0 0.0
    %2963 = vmatpush1.msra.mxu0 %v1892
    %2964 = vmatprep.subr.mxu0 0.0
    %2965 = vmatpush1.msra.mxu0 %v1889
    %2966 = vmatprep.subr.mxu0 0.0
    %2967 = vmatpush2.msra.mxu0 0.0
    %2968 = vmatprep.subr.mxu0 0.0
    %2969 = vmatpush2.msra.mxu0 0.0
    %2970 = vmatprep.subr.mxu0 0.0
    %2971 = vmatpush2.msra.mxu0 0.0
    %2972 = vmatprep.subr.mxu0 0.0
    %2973 = vmatpush2.msra.mxu0 0.0
    %2974 = vmatprep.subr.mxu0 0.0
    %2975 = vmatpush2.msra.mxu0 0.0
    %2976 = vmatprep.subr.mxu0 0.0
    %2977 = vmatpush2.msra.mxu0 0.0
    %2978 = vmatprep.subr.mxu0 0.0
    %2979 = vmatpush2.msra.mxu0 0.0
    %2980 = vmatprep.subr.mxu0 0.0
    %2981 = vmatpush2.msra.mxu0 0.0
    %2982 = vmatprep.subr.mxu0 0.0
    %2983 = vmatpush2.msra.mxu0 0.0
    %2984 = vmatprep.subr.mxu0 0.0
    %2985 = vmatpush2.msra.mxu0 0.0
    %2986 = vmatprep.subr.mxu0 0.0
    %2987 = vmatpush2.msra.mxu0 0.0
    %2988 = vmatprep.subr.mxu0 0.0
    %2989 = vmatpush2.msra.mxu0 0.0
    %2990 = vmatprep.subr.mxu0 0.0
    %2991 = vmatpush2.msra.mxu0 0.0
    %2992 = vmatprep.subr.mxu0 0.0
    %2993 = vmatpush2.msra.mxu0 0.0
    %2994 = vmatprep.subr.mxu0 0.0
    %2995 = vmatpush2.msra.mxu0 0.0
    %2996 = vmatprep.subr.mxu0 0.0
    %2997 = vmatpush2.msra.mxu0 0.0
    %2998 = vmatprep.mubr.f32.mxu0 0.0
    %2999 = vmatmul.mubr.f32.gmra.mxu0 %v2859
    %v3000 = vpop.f32.mrf.mxu0
    %v3001 = vadd.f32 0.0, %v3000
    %v3002 = vpop.f32.mrf.mxu0
    %3003 = vdwg.mxu0
    %v3004 = vadd.f32 %v2860, %v2930
    %v3005 = vxor.u32 %v3004, 2147483648
    %v3006 = vmul.f32 %v3005, 1.442695
    %v3007 = vpow.pop %v3006
    %v3008 = vadd.f32 %v3007, 1.0
    %v3009 = vrcp.pop %v3008
    %v3010 = vmul.f32 1.0, %v3009
    %v3011 = vadd.f32 %v2861, %v2932
    %v3012 = vxor.u32 %v3011, 2147483648
    %v3013 = vmul.f32 %v3012, 1.442695
    %v3014 = vpow.pop %v3013
    %v3015 = vadd.f32 %v3014, 1.0
    %v3016 = vrcp.pop %v3015
    %v3017 = vmul.f32 1.0, %v3016
    %v3018 = vadd.f32 %v3001, %v1941
    %v3019 = vmul.f32 %v3010, %v3018
    %v3020 = vadd.f32 %v2862, %v3019
    %v3021 = vtanh.pop %v3020
    %v3022 = vsub.f32 1.0, %v3017
    %v3023 = vmul.f32 %v3022, %v3021
    %v3024 = vmul.f32 %v3017, %v2859
    %v3025 = vadd.f32 %v3023, %v3024
    %v3026 = vld [vmem:[#allocation2 + $0x78] sm:$0xff]
    %v3027 = vld [vmem:[#allocation2 + $0x80] sm:$0xff]
    %v3028 = vld [vmem:[#allocation2 + $0x88] sm:$0xff]
    %3029 = vmatprep.subr.mxu0 %v1933
    %3030 = vmatpush1.msra.mxu0 %v1932
    %3031 = vmatprep.subr.mxu0 %v1930
    %3032 = vmatpush1.msra.mxu0 %v1929
    %3033 = vmatprep.subr.mxu0 %v1927
    %3034 = vmatpush1.msra.mxu0 %v1926
    %3035 = vmatprep.subr.mxu0 %v1924
    %3036 = vmatpush1.msra.mxu0 %v1923
    %3037 = vmatprep.subr.mxu0 %v1921
    %3038 = vmatpush1.msra.mxu0 %v1920
    %3039 = vmatprep.subr.mxu0 %v1918
    %3040 = vmatpush1.msra.mxu0 %v1917
    %3041 = vmatprep.subr.mxu0 %v1915
    %3042 = vmatpush1.msra.mxu0 %v1914
    %3043 = vmatprep.subr.mxu0 %v1912
    %3044 = vmatpush1.msra.mxu0 %v1911
    %3045 = vmatprep.subr.mxu0 %v1909
    %3046 = vmatpush1.msra.mxu0 %v1908
    %3047 = vmatprep.subr.mxu0 %v1906
    %3048 = vmatpush1.msra.mxu0 %v1905
    %3049 = vmatprep.subr.mxu0 %v1903
    %3050 = vmatpush1.msra.mxu0 %v1902
    %3051 = vmatprep.subr.mxu0 %v1900
    %3052 = vmatpush1.msra.mxu0 %v1899
    %3053 = vmatprep.subr.mxu0 %v1897
    %3054 = vmatpush1.msra.mxu0 %v1896
    %3055 = vmatprep.subr.mxu0 %v1894
    %3056 = vmatpush1.msra.mxu0 %v1893
    %3057 = vmatprep.subr.mxu0 %v1891
    %3058 = vmatpush1.msra.mxu0 %v1890
    %3059 = vmatprep.subr.mxu0 %v1888
    %3060 = vmatpush1.msra.mxu0 %v1887
    %3061 = vmatprep.subr.mxu0 0.0
    %3062 = vmatpush2.msra.mxu0 0.0
    %3063 = vmatprep.subr.mxu0 0.0
    %3064 = vmatpush2.msra.mxu0 0.0
    %3065 = vmatprep.subr.mxu0 0.0
    %3066 = vmatpush2.msra.mxu0 0.0
    %3067 = vmatprep.subr.mxu0 0.0
    %3068 = vmatpush2.msra.mxu0 0.0
    %3069 = vmatprep.subr.mxu0 0.0
    %3070 = vmatpush2.msra.mxu0 0.0
    %3071 = vmatprep.subr.mxu0 0.0
    %3072 = vmatpush2.msra.mxu0 0.0
    %3073 = vmatprep.subr.mxu0 0.0
    %3074 = vmatpush2.msra.mxu0 0.0
    %3075 = vmatprep.subr.mxu0 0.0
    %3076 = vmatpush2.msra.mxu0 0.0
    %3077 = vmatprep.subr.mxu0 0.0
    %3078 = vmatpush2.msra.mxu0 0.0
    %3079 = vmatprep.subr.mxu0 0.0
    %3080 = vmatpush2.msra.mxu0 0.0
    %3081 = vmatprep.subr.mxu0 0.0
    %3082 = vmatpush2.msra.mxu0 0.0
    %3083 = vmatprep.subr.mxu0 0.0
    %3084 = vmatpush2.msra.mxu0 0.0
    %3085 = vmatprep.subr.mxu0 0.0
    %3086 = vmatpush2.msra.mxu0 0.0
    %3087 = vmatprep.subr.mxu0 0.0
    %3088 = vmatpush2.msra.mxu0 0.0
    %3089 = vmatprep.subr.mxu0 0.0
    %3090 = vmatpush2.msra.mxu0 0.0
    %3091 = vmatprep.subr.mxu0 0.0
    %3092 = vmatpush2.msra.mxu0 0.0
    %3093 = vmatprep.mubr.f32.mxu0 0.0
    %3094 = vmatmul.mubr.f32.gmra.mxu0 %v3025
    %v3095 = vpop.f32.mrf.mxu0
    %v3096 = vadd.f32 0.0, %v3095
    %v3097 = vpop.f32.mrf.mxu0
    %v3098 = vadd.f32 0.0, %v3097
    %3099 = vdwg.mxu0
    %3100 = vmatprep.subr.mxu0 0.0
    %3101 = vmatpush1.msra.mxu0 %v1934
    %3102 = vmatprep.subr.mxu0 0.0
    %3103 = vmatpush1.msra.mxu0 %v1931
    %3104 = vmatprep.subr.mxu0 0.0
    %3105 = vmatpush1.msra.mxu0 %v1928
    %3106 = vmatprep.subr.mxu0 0.0
    %3107 = vmatpush1.msra.mxu0 %v1925
    %3108 = vmatprep.subr.mxu0 0.0
    %3109 = vmatpush1.msra.mxu0 %v1922
    %3110 = vmatprep.subr.mxu0 0.0
    %3111 = vmatpush1.msra.mxu0 %v1919
    %3112 = vmatprep.subr.mxu0 0.0
    %3113 = vmatpush1.msra.mxu0 %v1916
    %3114 = vmatprep.subr.mxu0 0.0
    %3115 = vmatpush1.msra.mxu0 %v1913
    %3116 = vmatprep.subr.mxu0 0.0
    %3117 = vmatpush1.msra.mxu0 %v1910
    %3118 = vmatprep.subr.mxu0 0.0
    %3119 = vmatpush1.msra.mxu0 %v1907
    %3120 = vmatprep.subr.mxu0 0.0
    %3121 = vmatpush1.msra.mxu0 %v1904
    %3122 = vmatprep.subr.mxu0 0.0
    %3123 = vmatpush1.msra.mxu0 %v1901
    %3124 = vmatprep.subr.mxu0 0.0
    %3125 = vmatpush1.msra.mxu0 %v1898
    %3126 = vmatprep.subr.mxu0 0.0
    %3127 = vmatpush1.msra.mxu0 %v1895
    %3128 = vmatprep.subr.mxu0 0.0
    %3129 = vmatpush1.msra.mxu0 %v1892
    %3130 = vmatprep.subr.mxu0 0.0
    %3131 = vmatpush1.msra.mxu0 %v1889
    %3132 = vmatprep.subr.mxu0 0.0
    %3133 = vmatpush2.msra.mxu0 0.0
    %3134 = vmatprep.subr.mxu0 0.0
    %3135 = vmatpush2.msra.mxu0 0.0
    %3136 = vmatprep.subr.mxu0 0.0
    %3137 = vmatpush2.msra.mxu0 0.0
    %3138 = vmatprep.subr.mxu0 0.0
    %3139 = vmatpush2.msra.mxu0 0.0
    %3140 = vmatprep.subr.mxu0 0.0
    %3141 = vmatpush2.msra.mxu0 0.0
    %3142 = vmatprep.subr.mxu0 0.0
    %3143 = vmatpush2.msra.mxu0 0.0
    %3144 = vmatprep.subr.mxu0 0.0
    %3145 = vmatpush2.msra.mxu0 0.0
    %3146 = vmatprep.subr.mxu0 0.0
    %3147 = vmatpush2.msra.mxu0 0.0
    %3148 = vmatprep.subr.mxu0 0.0
    %3149 = vmatpush2.msra.mxu0 0.0
    %3150 = vmatprep.subr.mxu0 0.0
    %3151 = vmatpush2.msra.mxu0 0.0
    %3152 = vmatprep.subr.mxu0 0.0
    %3153 = vmatpush2.msra.mxu0 0.0
    %3154 = vmatprep.subr.mxu0 0.0
    %3155 = vmatpush2.msra.mxu0 0.0
    %3156 = vmatprep.subr.mxu0 0.0
    %3157 = vmatpush2.msra.mxu0 0.0
    %3158 = vmatprep.subr.mxu0 0.0
    %3159 = vmatpush2.msra.mxu0 0.0
    %3160 = vmatprep.subr.mxu0 0.0
    %3161 = vmatpush2.msra.mxu0 0.0
    %3162 = vmatprep.subr.mxu0 0.0
    %3163 = vmatpush2.msra.mxu0 0.0
    %3164 = vmatprep.mubr.f32.mxu0 0.0
    %3165 = vmatmul.mubr.f32.gmra.mxu0 %v3025
    %v3166 = vpop.f32.mrf.mxu0
    %v3167 = vadd.f32 0.0, %v3166
    %v3168 = vpop.f32.mrf.mxu0
    %3169 = vdwg.mxu0
    %v3170 = vadd.f32 %v3026, %v3096
    %v3171 = vxor.u32 %v3170, 2147483648
    %v3172 = vmul.f32 %v3171, 1.442695
    %v3173 = vpow.pop %v3172
    %v3174 = vadd.f32 %v3173, 1.0
    %v3175 = vrcp.pop %v3174
    %v3176 = vmul.f32 1.0, %v3175
    %v3177 = vadd.f32 %v3027, %v3098
    %v3178 = vxor.u32 %v3177, 2147483648
    %v3179 = vmul.f32 %v3178, 1.442695
    %v3180 = vpow.pop %v3179
    %v3181 = vadd.f32 %v3180, 1.0
    %v3182 = vrcp.pop %v3181
    %v3183 = vmul.f32 1.0, %v3182
    %v3184 = vadd.f32 %v3167, %v1941
    %v3185 = vmul.f32 %v3176, %v3184
    %v3186 = vadd.f32 %v3028, %v3185
    %v3187 = vtanh.pop %v3186
    %v3188 = vsub.f32 1.0, %v3183
    %v3189 = vmul.f32 %v3188, %v3187
    %v3190 = vmul.f32 %v3183, %v3025
    %v3191 = vadd.f32 %v3189, %v3190
    %v3192 = vld [vmem:[#allocation2 + $0x90] sm:$0xff]
    %v3193 = vld [vmem:[#allocation2 + $0x98] sm:$0xff]
    %v3194 = vld [vmem:[#allocation2 + $0xa0] sm:$0xff]
    %3195 = vmatprep.subr.mxu0 %v1933
    %3196 = vmatpush1.msra.mxu0 %v1932
    %3197 = vmatprep.subr.mxu0 %v1930
    %3198 = vmatpush1.msra.mxu0 %v1929
    %3199 = vmatprep.subr.mxu0 %v1927
    %3200 = vmatpush1.msra.mxu0 %v1926
    %3201 = vmatprep.subr.mxu0 %v1924
    %3202 = vmatpush1.msra.mxu0 %v1923
    %3203 = vmatprep.subr.mxu0 %v1921
    %3204 = vmatpush1.msra.mxu0 %v1920
    %3205 = vmatprep.subr.mxu0 %v1918
    %3206 = vmatpush1.msra.mxu0 %v1917
    %3207 = vmatprep.subr.mxu0 %v1915
    %3208 = vmatpush1.msra.mxu0 %v1914
    %3209 = vmatprep.subr.mxu0 %v1912
    %3210 = vmatpush1.msra.mxu0 %v1911
    %3211 = vmatprep.subr.mxu0 %v1909
    %3212 = vmatpush1.msra.mxu0 %v1908
    %3213 = vmatprep.subr.mxu0 %v1906
    %3214 = vmatpush1.msra.mxu0 %v1905
    %3215 = vmatprep.subr.mxu0 %v1903
    %3216 = vmatpush1.msra.mxu0 %v1902
    %3217 = vmatprep.subr.mxu0 %v1900
    %3218 = vmatpush1.msra.mxu0 %v1899
    %3219 = vmatprep.subr.mxu0 %v1897
    %3220 = vmatpush1.msra.mxu0 %v1896
    %3221 = vmatprep.subr.mxu0 %v1894
    %3222 = vmatpush1.msra.mxu0 %v1893
    %3223 = vmatprep.subr.mxu0 %v1891
    %3224 = vmatpush1.msra.mxu0 %v1890
    %3225 = vmatprep.subr.mxu0 %v1888
    %3226 = vmatpush1.msra.mxu0 %v1887
    %3227 = vmatprep.subr.mxu0 0.0
    %3228 = vmatpush2.msra.mxu0 0.0
    %3229 = vmatprep.subr.mxu0 0.0
    %3230 = vmatpush2.msra.mxu0 0.0
    %3231 = vmatprep.subr.mxu0 0.0
    %3232 = vmatpush2.msra.mxu0 0.0
    %3233 = vmatprep.subr.mxu0 0.0
    %3234 = vmatpush2.msra.mxu0 0.0
    %3235 = vmatprep.subr.mxu0 0.0
    %3236 = vmatpush2.msra.mxu0 0.0
    %3237 = vmatprep.subr.mxu0 0.0
    %3238 = vmatpush2.msra.mxu0 0.0
    %3239 = vmatprep.subr.mxu0 0.0
    %3240 = vmatpush2.msra.mxu0 0.0
    %3241 = vmatprep.subr.mxu0 0.0
    %3242 = vmatpush2.msra.mxu0 0.0
    %3243 = vmatprep.subr.mxu0 0.0
    %3244 = vmatpush2.msra.mxu0 0.0
    %3245 = vmatprep.subr.mxu0 0.0
    %3246 = vmatpush2.msra.mxu0 0.0
    %3247 = vmatprep.subr.mxu0 0.0
    %3248 = vmatpush2.msra.mxu0 0.0
    %3249 = vmatprep.subr.mxu0 0.0
    %3250 = vmatpush2.msra.mxu0 0.0
    %3251 = vmatprep.subr.mxu0 0.0
    %3252 = vmatpush2.msra.mxu0 0.0
    %3253 = vmatprep.subr.mxu0 0.0
    %3254 = vmatpush2.msra.mxu0 0.0
    %3255 = vmatprep.subr.mxu0 0.0
    %3256 = vmatpush2.msra.mxu0 0.0
    %3257 = vmatprep.subr.mxu0 0.0
    %3258 = vmatpush2.msra.mxu0 0.0
    %3259 = vmatprep.mubr.f32.mxu0 0.0
    %3260 = vmatmul.mubr.f32.gmra.mxu0 %v3191
    %v3261 = vpop.f32.mrf.mxu0
    %v3262 = vadd.f32 0.0, %v3261
    %v3263 = vpop.f32.mrf.mxu0
    %v3264 = vadd.f32 0.0, %v3263
    %3265 = vdwg.mxu0
    %3266 = vmatprep.subr.mxu0 0.0
    %3267 = vmatpush1.msra.mxu0 %v1934
    %3268 = vmatprep.subr.mxu0 0.0
    %3269 = vmatpush1.msra.mxu0 %v1931
    %3270 = vmatprep.subr.mxu0 0.0
    %3271 = vmatpush1.msra.mxu0 %v1928
    %3272 = vmatprep.subr.mxu0 0.0
    %3273 = vmatpush1.msra.mxu0 %v1925
    %3274 = vmatprep.subr.mxu0 0.0
    %3275 = vmatpush1.msra.mxu0 %v1922
    %3276 = vmatprep.subr.mxu0 0.0
    %3277 = vmatpush1.msra.mxu0 %v1919
    %3278 = vmatprep.subr.mxu0 0.0
    %3279 = vmatpush1.msra.mxu0 %v1916
    %3280 = vmatprep.subr.mxu0 0.0
    %3281 = vmatpush1.msra.mxu0 %v1913
    %3282 = vmatprep.subr.mxu0 0.0
    %3283 = vmatpush1.msra.mxu0 %v1910
    %3284 = vmatprep.subr.mxu0 0.0
    %3285 = vmatpush1.msra.mxu0 %v1907
    %3286 = vmatprep.subr.mxu0 0.0
    %3287 = vmatpush1.msra.mxu0 %v1904
    %3288 = vmatprep.subr.mxu0 0.0
    %3289 = vmatpush1.msra.mxu0 %v1901
    %3290 = vmatprep.subr.mxu0 0.0
    %3291 = vmatpush1.msra.mxu0 %v1898
    %3292 = vmatprep.subr.mxu0 0.0
    %3293 = vmatpush1.msra.mxu0 %v1895
    %3294 = vmatprep.subr.mxu0 0.0
    %3295 = vmatpush1.msra.mxu0 %v1892
    %3296 = vmatprep.subr.mxu0 0.0
    %3297 = vmatpush1.msra.mxu0 %v1889
    %3298 = vmatprep.subr.mxu0 0.0
    %3299 = vmatpush2.msra.mxu0 0.0
    %3300 = vmatprep.subr.mxu0 0.0
    %3301 = vmatpush2.msra.mxu0 0.0
    %3302 = vmatprep.subr.mxu0 0.0
    %3303 = vmatpush2.msra.mxu0 0.0
    %3304 = vmatprep.subr.mxu0 0.0
    %3305 = vmatpush2.msra.mxu0 0.0
    %3306 = vmatprep.subr.mxu0 0.0
    %3307 = vmatpush2.msra.mxu0 0.0
    %3308 = vmatprep.subr.mxu0 0.0
    %3309 = vmatpush2.msra.mxu0 0.0
    %3310 = vmatprep.subr.mxu0 0.0
    %3311 = vmatpush2.msra.mxu0 0.0
    %3312 = vmatprep.subr.mxu0 0.0
    %3313 = vmatpush2.msra.mxu0 0.0
    %3314 = vmatprep.subr.mxu0 0.0
    %3315 = vmatpush2.msra.mxu0 0.0
    %3316 = vmatprep.subr.mxu0 0.0
    %3317 = vmatpush2.msra.mxu0 0.0
    %3318 = vmatprep.subr.mxu0 0.0
    %3319 = vmatpush2.msra.mxu0 0.0
    %3320 = vmatprep.subr.mxu0 0.0
    %3321 = vmatpush2.msra.mxu0 0.0
    %3322 = vmatprep.subr.mxu0 0.0
    %3323 = vmatpush2.msra.mxu0 0.0
    %3324 = vmatprep.subr.mxu0 0.0
    %3325 = vmatpush2.msra.mxu0 0.0
    %3326 = vmatprep.subr.mxu0 0.0
    %3327 = vmatpush2.msra.mxu0 0.0
    %3328 = vmatprep.subr.mxu0 0.0
    %3329 = vmatpush2.msra.mxu0 0.0
    %3330 = vmatprep.mubr.f32.mxu0 0.0
    %3331 = vmatmul.mubr.f32.gmra.mxu0 %v3191
    %v3332 = vpop.f32.mrf.mxu0
    %v3333 = vadd.f32 0.0, %v3332
    %v3334 = vpop.f32.mrf.mxu0
    %3335 = vdwg.mxu0
    %v3336 = vadd.f32 %v3192, %v3262
    %v3337 = vxor.u32 %v3336, 2147483648
    %v3338 = vmul.f32 %v3337, 1.442695
    %v3339 = vpow.pop %v3338
    %v3340 = vadd.f32 %v3339, 1.0
    %v3341 = vrcp.pop %v3340
    %v3342 = vmul.f32 1.0, %v3341
    %v3343 = vadd.f32 %v3193, %v3264
    %v3344 = vxor.u32 %v3343, 2147483648
    %v3345 = vmul.f32 %v3344, 1.442695
    %v3346 = vpow.pop %v3345
    %v3347 = vadd.f32 %v3346, 1.0
    %v3348 = vrcp.pop %v3347
    %v3349 = vmul.f32 1.0, %v3348
    %v3350 = vadd.f32 %v3333, %v1941
    %v3351 = vmul.f32 %v3342, %v3350
    %v3352 = vadd.f32 %v3194, %v3351
    %v3353 = vtanh.pop %v3352
    %v3354 = vsub.f32 1.0, %v3349
    %v3355 = vmul.f32 %v3354, %v3353
    %v3356 = vmul.f32 %v3349, %v3191
    %v3357 = vadd.f32 %v3355, %v3356
    %v3358 = vld [vmem:[#allocation2 + $0xa8] sm:$0xff]
    %v3359 = vld [vmem:[#allocation2 + $0xb0] sm:$0xff]
    %v3360 = vld [vmem:[#allocation2 + $0xb8] sm:$0xff]
    %3361 = vmatprep.subr.mxu0 %v1933
    %3362 = vmatpush1.msra.mxu0 %v1932
    %3363 = vmatprep.subr.mxu0 %v1930
    %3364 = vmatpush1.msra.mxu0 %v1929
    %3365 = vmatprep.subr.mxu0 %v1927
    %3366 = vmatpush1.msra.mxu0 %v1926
    %3367 = vmatprep.subr.mxu0 %v1924
    %3368 = vmatpush1.msra.mxu0 %v1923
    %3369 = vmatprep.subr.mxu0 %v1921
    %3370 = vmatpush1.msra.mxu0 %v1920
    %3371 = vmatprep.subr.mxu0 %v1918
    %3372 = vmatpush1.msra.mxu0 %v1917
    %3373 = vmatprep.subr.mxu0 %v1915
    %3374 = vmatpush1.msra.mxu0 %v1914
    %3375 = vmatprep.subr.mxu0 %v1912
    %3376 = vmatpush1.msra.mxu0 %v1911
    %3377 = vmatprep.subr.mxu0 %v1909
    %3378 = vmatpush1.msra.mxu0 %v1908
    %3379 = vmatprep.subr.mxu0 %v1906
    %3380 = vmatpush1.msra.mxu0 %v1905
    %3381 = vmatprep.subr.mxu0 %v1903
    %3382 = vmatpush1.msra.mxu0 %v1902
    %3383 = vmatprep.subr.mxu0 %v1900
    %3384 = vmatpush1.msra.mxu0 %v1899
    %3385 = vmatprep.subr.mxu0 %v1897
    %3386 = vmatpush1.msra.mxu0 %v1896
    %3387 = vmatprep.subr.mxu0 %v1894
    %3388 = vmatpush1.msra.mxu0 %v1893
    %3389 = vmatprep.subr.mxu0 %v1891
    %3390 = vmatpush1.msra.mxu0 %v1890
    %3391 = vmatprep.subr.mxu0 %v1888
    %3392 = vmatpush1.msra.mxu0 %v1887
    %3393 = vmatprep.subr.mxu0 0.0
    %3394 = vmatpush2.msra.mxu0 0.0
    %3395 = vmatprep.subr.mxu0 0.0
    %3396 = vmatpush2.msra.mxu0 0.0
    %3397 = vmatprep.subr.mxu0 0.0
    %3398 = vmatpush2.msra.mxu0 0.0
    %3399 = vmatprep.subr.mxu0 0.0
    %3400 = vmatpush2.msra.mxu0 0.0
    %3401 = vmatprep.subr.mxu0 0.0
    %3402 = vmatpush2.msra.mxu0 0.0
    %3403 = vmatprep.subr.mxu0 0.0
    %3404 = vmatpush2.msra.mxu0 0.0
    %3405 = vmatprep.subr.mxu0 0.0
    %3406 = vmatpush2.msra.mxu0 0.0
    %3407 = vmatprep.subr.mxu0 0.0
    %3408 = vmatpush2.msra.mxu0 0.0
    %3409 = vmatprep.subr.mxu0 0.0
    %3410 = vmatpush2.msra.mxu0 0.0
    %3411 = vmatprep.subr.mxu0 0.0
    %3412 = vmatpush2.msra.mxu0 0.0
    %3413 = vmatprep.subr.mxu0 0.0
    %3414 = vmatpush2.msra.mxu0 0.0
    %3415 = vmatprep.subr.mxu0 0.0
    %3416 = vmatpush2.msra.mxu0 0.0
    %3417 = vmatprep.subr.mxu0 0.0
    %3418 = vmatpush2.msra.mxu0 0.0
    %3419 = vmatprep.subr.mxu0 0.0
    %3420 = vmatpush2.msra.mxu0 0.0
    %3421 = vmatprep.subr.mxu0 0.0
    %3422 = vmatpush2.msra.mxu0 0.0
    %3423 = vmatprep.subr.mxu0 0.0
    %3424 = vmatpush2.msra.mxu0 0.0
    %3425 = vmatprep.mubr.f32.mxu0 0.0
    %3426 = vmatmul.mubr.f32.gmra.mxu0 %v3357
    %v3427 = vpop.f32.mrf.mxu0
    %v3428 = vadd.f32 0.0, %v3427
    %v3429 = vpop.f32.mrf.mxu0
    %v3430 = vadd.f32 0.0, %v3429
    %3431 = vdwg.mxu0
    %3432 = vmatprep.subr.mxu0 0.0
    %3433 = vmatpush1.msra.mxu0 %v1934
    %3434 = vmatprep.subr.mxu0 0.0
    %3435 = vmatpush1.msra.mxu0 %v1931
    %3436 = vmatprep.subr.mxu0 0.0
    %3437 = vmatpush1.msra.mxu0 %v1928
    %3438 = vmatprep.subr.mxu0 0.0
    %3439 = vmatpush1.msra.mxu0 %v1925
    %3440 = vmatprep.subr.mxu0 0.0
    %3441 = vmatpush1.msra.mxu0 %v1922
    %3442 = vmatprep.subr.mxu0 0.0
    %3443 = vmatpush1.msra.mxu0 %v1919
    %3444 = vmatprep.subr.mxu0 0.0
    %3445 = vmatpush1.msra.mxu0 %v1916
    %3446 = vmatprep.subr.mxu0 0.0
    %3447 = vmatpush1.msra.mxu0 %v1913
    %3448 = vmatprep.subr.mxu0 0.0
    %3449 = vmatpush1.msra.mxu0 %v1910
    %3450 = vmatprep.subr.mxu0 0.0
    %3451 = vmatpush1.msra.mxu0 %v1907
    %3452 = vmatprep.subr.mxu0 0.0
    %3453 = vmatpush1.msra.mxu0 %v1904
    %3454 = vmatprep.subr.mxu0 0.0
    %3455 = vmatpush1.msra.mxu0 %v1901
    %3456 = vmatprep.subr.mxu0 0.0
    %3457 = vmatpush1.msra.mxu0 %v1898
    %3458 = vmatprep.subr.mxu0 0.0
    %3459 = vmatpush1.msra.mxu0 %v1895
    %3460 = vmatprep.subr.mxu0 0.0
    %3461 = vmatpush1.msra.mxu0 %v1892
    %3462 = vmatprep.subr.mxu0 0.0
    %3463 = vmatpush1.msra.mxu0 %v1889
    %3464 = vmatprep.subr.mxu0 0.0
    %3465 = vmatpush2.msra.mxu0 0.0
    %3466 = vmatprep.subr.mxu0 0.0
    %3467 = vmatpush2.msra.mxu0 0.0
    %3468 = vmatprep.subr.mxu0 0.0
    %3469 = vmatpush2.msra.mxu0 0.0
    %3470 = vmatprep.subr.mxu0 0.0
    %3471 = vmatpush2.msra.mxu0 0.0
    %3472 = vmatprep.subr.mxu0 0.0
    %3473 = vmatpush2.msra.mxu0 0.0
    %3474 = vmatprep.subr.mxu0 0.0
    %3475 = vmatpush2.msra.mxu0 0.0
    %3476 = vmatprep.subr.mxu0 0.0
    %3477 = vmatpush2.msra.mxu0 0.0
    %3478 = vmatprep.subr.mxu0 0.0
    %3479 = vmatpush2.msra.mxu0 0.0
    %3480 = vmatprep.subr.mxu0 0.0
    %3481 = vmatpush2.msra.mxu0 0.0
    %3482 = vmatprep.subr.mxu0 0.0
    %3483 = vmatpush2.msra.mxu0 0.0
    %3484 = vmatprep.subr.mxu0 0.0
    %3485 = vmatpush2.msra.mxu0 0.0
    %3486 = vmatprep.subr.mxu0 0.0
    %3487 = vmatpush2.msra.mxu0 0.0
    %3488 = vmatprep.subr.mxu0 0.0
    %3489 = vmatpush2.msra.mxu0 0.0
    %3490 = vmatprep.subr.mxu0 0.0
    %3491 = vmatpush2.msra.mxu0 0.0
    %3492 = vmatprep.subr.mxu0 0.0
    %3493 = vmatpush2.msra.mxu0 0.0
    %3494 = vmatprep.subr.mxu0 0.0
    %3495 = vmatpush2.msra.mxu0 0.0
    %3496 = vmatprep.mubr.f32.mxu0 0.0
    %3497 = vmatmul.mubr.f32.gmra.mxu0 %v3357
    %v3498 = vpop.f32.mrf.mxu0
    %v3499 = vadd.f32 0.0, %v3498
    %v3500 = vpop.f32.mrf.mxu0
    %3501 = vdwg.mxu0
    %v3502 = vadd.f32 %v3358, %v3428
    %v3503 = vxor.u32 %v3502, 2147483648
    %v3504 = vmul.f32 %v3503, 1.442695
    %v3505 = vpow.pop %v3504
    %v3506 = vadd.f32 %v3505, 1.0
    %v3507 = vrcp.pop %v3506
    %v3508 = vmul.f32 1.0, %v3507
    %v3509 = vadd.f32 %v3359, %v3430
    %v3510 = vxor.u32 %v3509, 2147483648
    %v3511 = vmul.f32 %v3510, 1.442695
    %v3512 = vpow.pop %v3511
    %v3513 = vadd.f32 %v3512, 1.0
    %v3514 = vrcp.pop %v3513
    %v3515 = vmul.f32 1.0, %v3514
    %v3516 = vadd.f32 %v3499, %v1941
    %v3517 = vmul.f32 %v3508, %v3516
    %v3518 = vadd.f32 %v3360, %v3517
    %v3519 = vtanh.pop %v3518
    %v3520 = vsub.f32 1.0, %v3515
    %v3521 = vmul.f32 %v3520, %v3519
    %v3522 = vmul.f32 %v3515, %v3357
    %v3523 = vadd.f32 %v3521, %v3522
    %v3524 = vld [vmem:[#allocation6 + $0x118] sm:$0xff]
    %v3525 = vld [vmem:[#allocation6 + $0x120] sm:$0xff]
    %v3526 = vld [vmem:[#allocation6 + $0x128] sm:$0xff]
    %v3527 = vld [vmem:[#allocation6 + $0x130] sm:$0xff]
    %v3528 = vld [vmem:[#allocation6 + $0x138] sm:$0xff]
    %v3529 = vld [vmem:[#allocation6 + $0x140] sm:$0xff]
    %v3530 = vld [vmem:[#allocation6 + $0x148] sm:$0xff]
    %v3531 = vld [vmem:[#allocation6 + $0x150] sm:$0xff]
    %v3532 = vld [vmem:[#allocation6 + $0x158] sm:$0xff]
    %v3533 = vld [vmem:[#allocation6 + $0x160] sm:$0xff]
    %v3534 = vld [vmem:[#allocation6 + $0x168] sm:$0xff]
    %v3535 = vld [vmem:[#allocation6 + $0x170] sm:$0xff]
    %v3536 = vld [vmem:[#allocation6 + $0x178] sm:$0xff]
    %v3537 = vld [vmem:[#allocation6 + $0x180] sm:$0xff]
    %v3538 = vld [vmem:[#allocation6 + $0x188] sm:$0xff]
    %v3539 = vld [vmem:[#allocation6 + $0x190] sm:$0xff]
    %v3540 = vlaneseq
    %v3541 = vshrl.u32 %v3540, 7
    %v3542 = vsub.s32 2, %v3541
    %v3543 = vrot.slane %v45, %v3542
    %3544 = vmatprep.subr.mxu0 0.0
    %3545 = vmatpush1.msra.mxu0 %v3539
    %3546 = vmatprep.subr.mxu0 0.0
    %3547 = vmatpush1.msra.mxu0 %v3538
    %3548 = vmatprep.subr.mxu0 0.0
    %3549 = vmatpush1.msra.mxu0 %v3537
    %3550 = vmatprep.subr.mxu0 0.0
    %3551 = vmatpush1.msra.mxu0 %v3536
    %3552 = vmatprep.subr.mxu0 0.0
    %3553 = vmatpush1.msra.mxu0 %v3535
    %3554 = vmatprep.subr.mxu0 0.0
    %3555 = vmatpush1.msra.mxu0 %v3534
    %3556 = vmatprep.subr.mxu0 0.0
    %3557 = vmatpush1.msra.mxu0 %v3533
    %3558 = vmatprep.subr.mxu0 0.0
    %3559 = vmatpush1.msra.mxu0 %v3532
    %3560 = vmatprep.subr.mxu0 0.0
    %3561 = vmatpush1.msra.mxu0 %v3531
    %3562 = vmatprep.subr.mxu0 0.0
    %3563 = vmatpush1.msra.mxu0 %v3530
    %3564 = vmatprep.subr.mxu0 0.0
    %3565 = vmatpush1.msra.mxu0 %v3529
    %3566 = vmatprep.subr.mxu0 0.0
    %3567 = vmatpush1.msra.mxu0 %v3528
    %3568 = vmatprep.subr.mxu0 0.0
    %3569 = vmatpush1.msra.mxu0 %v3527
    %3570 = vmatprep.subr.mxu0 0.0
    %3571 = vmatpush1.msra.mxu0 %v3526
    %3572 = vmatprep.subr.mxu0 0.0
    %3573 = vmatpush1.msra.mxu0 %v3525
    %3574 = vmatprep.subr.mxu0 0.0
    %3575 = vmatpush1.msra.mxu0 %v3524
    %3576 = vmatprep.subr.mxu0 0.0
    %3577 = vmatpush2.msra.mxu0 0.0
    %3578 = vmatprep.subr.mxu0 0.0
    %3579 = vmatpush2.msra.mxu0 0.0
    %3580 = vmatprep.subr.mxu0 0.0
    %3581 = vmatpush2.msra.mxu0 0.0
    %3582 = vmatprep.subr.mxu0 0.0
    %3583 = vmatpush2.msra.mxu0 0.0
    %3584 = vmatprep.subr.mxu0 0.0
    %3585 = vmatpush2.msra.mxu0 0.0
    %3586 = vmatprep.subr.mxu0 0.0
    %3587 = vmatpush2.msra.mxu0 0.0
    %3588 = vmatprep.subr.mxu0 0.0
    %3589 = vmatpush2.msra.mxu0 0.0
    %3590 = vmatprep.subr.mxu0 0.0
    %3591 = vmatpush2.msra.mxu0 0.0
    %3592 = vmatprep.subr.mxu0 0.0
    %3593 = vmatpush2.msra.mxu0 0.0
    %3594 = vmatprep.subr.mxu0 0.0
    %3595 = vmatpush2.msra.mxu0 0.0
    %3596 = vmatprep.subr.mxu0 0.0
    %3597 = vmatpush2.msra.mxu0 0.0
    %3598 = vmatprep.subr.mxu0 0.0
    %3599 = vmatpush2.msra.mxu0 0.0
    %3600 = vmatprep.subr.mxu0 0.0
    %3601 = vmatpush2.msra.mxu0 0.0
    %3602 = vmatprep.subr.mxu0 0.0
    %3603 = vmatpush2.msra.mxu0 0.0
    %3604 = vmatprep.subr.mxu0 0.0
    %3605 = vmatpush2.msra.mxu0 0.0
    %3606 = vmatprep.subr.mxu0 0.0
    %3607 = vmatpush2.msra.mxu0 0.0
    %3608 = vmatprep.mubr.f32.mxu0 0.0
    %3609 = vmatmul.mubr.f32.gmra.mxu0 %v3523
    %v3610 = vpop.f32.mrf.mxu0
    %v3611 = vadd.f32 %v3543, %v3610
    %v3612 = vpop.f32.mrf.mxu0
    %3613 = vdwg.mxu0
    %v3614 = vld [vmem:[#allocation6 + $0x18] sm:$0xff]
    %v3615 = vld [vmem:[#allocation6 + $0x20] sm:$0xff]
    %v3616 = vld [vmem:[#allocation6 + $0x28] sm:$0xff]
    %v3617 = vld [vmem:[#allocation6 + $0x30] sm:$0xff]
    %v3618 = vld [vmem:[#allocation6 + $0x38] sm:$0xff]
    %v3619 = vld [vmem:[#allocation6 + $0x40] sm:$0xff]
    %v3620 = vld [vmem:[#allocation6 + $0x48] sm:$0xff]
    %v3621 = vld [vmem:[#allocation6 + $0x50] sm:$0xff]
    %v3622 = vld [vmem:[#allocation6 + $0x58] sm:$0xff]
    %v3623 = vld [vmem:[#allocation6 + $0x60] sm:$0xff]
    %v3624 = vld [vmem:[#allocation6 + $0x68] sm:$0xff]
    %v3625 = vld [vmem:[#allocation6 + $0x70] sm:$0xff]
    %v3626 = vld [vmem:[#allocation6 + $0x78] sm:$0xff]
    %v3627 = vld [vmem:[#allocation6 + $0x80] sm:$0xff]
    %v3628 = vld [vmem:[#allocation6 + $0x88] sm:$0xff]
    %v3629 = vld [vmem:[#allocation6 + $0x90] sm:$0xff]
    %v3630 = vld [vmem:[#allocation6 + $0x98] sm:$0xff]
    %v3631 = vld [vmem:[#allocation6 + $0xa0] sm:$0xff]
    %v3632 = vld [vmem:[#allocation6 + $0xa8] sm:$0xff]
    %v3633 = vld [vmem:[#allocation6 + $0xb0] sm:$0xff]
    %v3634 = vld [vmem:[#allocation6 + $0xb8] sm:$0xff]
    %v3635 = vld [vmem:[#allocation6 + $0xc0] sm:$0xff]
    %v3636 = vld [vmem:[#allocation6 + $0xc8] sm:$0xff]
    %v3637 = vld [vmem:[#allocation6 + $0xd0] sm:$0xff]
    %v3638 = vld [vmem:[#allocation6 + $0xd8] sm:$0xff]
    %v3639 = vld [vmem:[#allocation6 + $0xe0] sm:$0xff]
    %v3640 = vld [vmem:[#allocation6 + $0xe8] sm:$0xff]
    %v3641 = vld [vmem:[#allocation6 + $0xf0] sm:$0xff]
    %v3642 = vld [vmem:[#allocation6 + $0xf8] sm:$0xff]
    %v3643 = vld [vmem:[#allocation6 + $0x100] sm:$0xff]
    %v3644 = vld [vmem:[#allocation6 + $0x108] sm:$0xff]
    %v3645 = vld [vmem:[#allocation6 + $0x110] sm:$0xff]
    %3646 = vmatprep.subr.mxu0 0.0
    %3647 = vmatpush1.msra.mxu0 %v3645
    %3648 = vmatprep.subr.mxu0 0.0
    %3649 = vmatpush1.msra.mxu0 %v3644
    %3650 = vmatprep.subr.mxu0 0.0
    %3651 = vmatpush1.msra.mxu0 %v3643
    %3652 = vmatprep.subr.mxu0 0.0
    %3653 = vmatpush1.msra.mxu0 %v3642
    %3654 = vmatprep.subr.mxu0 0.0
    %3655 = vmatpush1.msra.mxu0 %v3641
    %3656 = vmatprep.subr.mxu0 0.0
    %3657 = vmatpush1.msra.mxu0 %v3640
    %3658 = vmatprep.subr.mxu0 0.0
    %3659 = vmatpush1.msra.mxu0 %v3639
    %3660 = vmatprep.subr.mxu0 0.0
    %3661 = vmatpush1.msra.mxu0 %v3638
    %3662 = vmatprep.subr.mxu0 0.0
    %3663 = vmatpush1.msra.mxu0 %v3637
    %3664 = vmatprep.subr.mxu0 0.0
    %3665 = vmatpush1.msra.mxu0 %v3636
    %3666 = vmatprep.subr.mxu0 0.0
    %3667 = vmatpush1.msra.mxu0 %v3635
    %3668 = vmatprep.subr.mxu0 0.0
    %3669 = vmatpush1.msra.mxu0 %v3634
    %3670 = vmatprep.subr.mxu0 0.0
    %3671 = vmatpush1.msra.mxu0 %v3633
    %3672 = vmatprep.subr.mxu0 0.0
    %3673 = vmatpush1.msra.mxu0 %v3632
    %3674 = vmatprep.subr.mxu0 0.0
    %3675 = vmatpush1.msra.mxu0 %v3631
    %3676 = vmatprep.subr.mxu0 0.0
    %3677 = vmatpush1.msra.mxu0 %v3630
    %3678 = vmatprep.subr.mxu0 0.0
    %3679 = vmatpush2.msra.mxu0 0.0
    %3680 = vmatprep.subr.mxu0 0.0
    %3681 = vmatpush2.msra.mxu0 0.0
    %3682 = vmatprep.subr.mxu0 0.0
    %3683 = vmatpush2.msra.mxu0 0.0
    %3684 = vmatprep.subr.mxu0 0.0
    %3685 = vmatpush2.msra.mxu0 0.0
    %3686 = vmatprep.subr.mxu0 0.0
    %3687 = vmatpush2.msra.mxu0 0.0
    %3688 = vmatprep.subr.mxu0 0.0
    %3689 = vmatpush2.msra.mxu0 0.0
    %3690 = vmatprep.subr.mxu0 0.0
    %3691 = vmatpush2.msra.mxu0 0.0
    %3692 = vmatprep.subr.mxu0 0.0
    %3693 = vmatpush2.msra.mxu0 0.0
    %3694 = vmatprep.subr.mxu0 0.0
    %3695 = vmatpush2.msra.mxu0 0.0
    %3696 = vmatprep.subr.mxu0 0.0
    %3697 = vmatpush2.msra.mxu0 0.0
    %3698 = vmatprep.subr.mxu0 0.0
    %3699 = vmatpush2.msra.mxu0 0.0
    %3700 = vmatprep.subr.mxu0 0.0
    %3701 = vmatpush2.msra.mxu0 0.0
    %3702 = vmatprep.subr.mxu0 0.0
    %3703 = vmatpush2.msra.mxu0 0.0
    %3704 = vmatprep.subr.mxu0 0.0
    %3705 = vmatpush2.msra.mxu0 0.0
    %3706 = vmatprep.subr.mxu0 0.0
    %3707 = vmatpush2.msra.mxu0 0.0
    %3708 = vmatprep.subr.mxu0 0.0
    %3709 = vmatpush2.msra.mxu0 0.0
    %3710 = vmatprep.mubr.f32.mxu0 0.0
    %3711 = vmatmul.mubr.f32.gmra.mxu0 %v3611
    %v3712 = vpop.f32.mrf.mxu0
    %v3713 = vadd.f32 0.0, %v3712
    %v3714 = vpop.f32.mrf.mxu0
    %3715 = vdwg.mxu0
    %3716 = vmatprep.subr.mxu0 0.0
    %3717 = vmatpush1.msra.mxu0 %v3629
    %3718 = vmatprep.subr.mxu0 0.0
    %3719 = vmatpush1.msra.mxu0 %v3628
    %3720 = vmatprep.subr.mxu0 0.0
    %3721 = vmatpush1.msra.mxu0 %v3627
    %3722 = vmatprep.subr.mxu0 0.0
    %3723 = vmatpush1.msra.mxu0 %v3626
    %3724 = vmatprep.subr.mxu0 0.0
    %3725 = vmatpush1.msra.mxu0 %v3625
    %3726 = vmatprep.subr.mxu0 0.0
    %3727 = vmatpush1.msra.mxu0 %v3624
    %3728 = vmatprep.subr.mxu0 0.0
    %3729 = vmatpush1.msra.mxu0 %v3623
    %3730 = vmatprep.subr.mxu0 0.0
    %3731 = vmatpush1.msra.mxu0 %v3622
    %3732 = vmatprep.subr.mxu0 0.0
    %3733 = vmatpush1.msra.mxu0 %v3621
    %3734 = vmatprep.subr.mxu0 0.0
    %3735 = vmatpush1.msra.mxu0 %v3620
    %3736 = vmatprep.subr.mxu0 0.0
    %3737 = vmatpush1.msra.mxu0 %v3619
    %3738 = vmatprep.subr.mxu0 0.0
    %3739 = vmatpush1.msra.mxu0 %v3618
    %3740 = vmatprep.subr.mxu0 0.0
    %3741 = vmatpush1.msra.mxu0 %v3617
    %3742 = vmatprep.subr.mxu0 0.0
    %3743 = vmatpush1.msra.mxu0 %v3616
    %3744 = vmatprep.subr.mxu0 0.0
    %3745 = vmatpush1.msra.mxu0 %v3615
    %3746 = vmatprep.subr.mxu0 0.0
    %3747 = vmatpush1.msra.mxu0 %v3614
    %3748 = vmatprep.subr.mxu0 0.0
    %3749 = vmatpush2.msra.mxu0 0.0
    %3750 = vmatprep.subr.mxu0 0.0
    %3751 = vmatpush2.msra.mxu0 0.0
    %3752 = vmatprep.subr.mxu0 0.0
    %3753 = vmatpush2.msra.mxu0 0.0
    %3754 = vmatprep.subr.mxu0 0.0
    %3755 = vmatpush2.msra.mxu0 0.0
    %3756 = vmatprep.subr.mxu0 0.0
    %3757 = vmatpush2.msra.mxu0 0.0
    %3758 = vmatprep.subr.mxu0 0.0
    %3759 = vmatpush2.msra.mxu0 0.0
    %3760 = vmatprep.subr.mxu0 0.0
    %3761 = vmatpush2.msra.mxu0 0.0
    %3762 = vmatprep.subr.mxu0 0.0
    %3763 = vmatpush2.msra.mxu0 0.0
    %3764 = vmatprep.subr.mxu0 0.0
    %3765 = vmatpush2.msra.mxu0 0.0
    %3766 = vmatprep.subr.mxu0 0.0
    %3767 = vmatpush2.msra.mxu0 0.0
    %3768 = vmatprep.subr.mxu0 0.0
    %3769 = vmatpush2.msra.mxu0 0.0
    %3770 = vmatprep.subr.mxu0 0.0
    %3771 = vmatpush2.msra.mxu0 0.0
    %3772 = vmatprep.subr.mxu0 0.0
    %3773 = vmatpush2.msra.mxu0 0.0
    %3774 = vmatprep.subr.mxu0 0.0
    %3775 = vmatpush2.msra.mxu0 0.0
    %3776 = vmatprep.subr.mxu0 0.0
    %3777 = vmatpush2.msra.mxu0 0.0
    %3778 = vmatprep.subr.mxu0 0.0
    %3779 = vmatpush2.msra.mxu0 0.0
    %3780 = vmatprep.mubr.f32.mxu0 0.0
    %3781 = vmatmul.mubr.f32.gmra.mxu0 %v128
    %v3782 = vpop.f32.mrf.mxu0
    %v3783 = vadd.f32 %v3713, %v3782
    %v3784 = vpop.f32.mrf.mxu0
    %3785 = vdwg.mxu0
    %v3786 = vlaneseq
    %v3787 = vshrl.u32 %v3786, 7
    %v3788 = vsub.s32 1, %v3787
    %v3789 = vrot.slane %v45, %v3788
    %v3790 = vadd.f32 %v3783, %v3789
    %v3791 = vmax.f32 %v3790, 0.0
    %v3792 = vlaneseq
    %v3793 = vshrl.u32 %v3792, 7
    %v3794 = vsub.s32 3, %v3793
    %v3795 = vrot.slane %v45, %v3794
    %v3796 = vmul.f32 %v3791, %v3795
    %3797 = vadd.xlane.f32.xlu0 %v3796
    %v3798 = vpop.xlane.xlu0 %3797
    %v3799 = vlaneseq
    %v3800 = vshrl.u32 %v3799, 7
    %v3801 = vsub.s32 4, %v3800
    %v3802 = vrot.slane %v45, %v3801
    %v3803 = vadd.f32 %v3798, %v3802
    %vm3804 = vcmask 7168
    %3805 = vst.msk [vmem:[%s4] sm:$0xff] %vm3804, %v3803
    // Predicated region
    $region26: #{forward.1} parent=1 // pred_check
      _
    $region27: #{forward.1} parent=1 // pred_check_branch
      %3807 = sbr.rel (0) target = $region29
    $region28: #{forward.1} parent=1 // pred_region
      _
    $region29: #{forward.1} parent=1 // pred_fallthru
      _
    // Predicated region
    $region30: #{forward.1} parent=1 // pred_check
      _
    $region31: #{forward.1} parent=1 // pred_check_branch
      %3809 = sbr.rel (0) target = $region33
    $region32: #{forward.1} parent=1 // pred_region
      _
    $region33: #{forward.1} parent=1 // pred_fallthru
      _
    %3810 = vsyncpa [#allocation5], 1
    %3811 = vsyncpa [#allocation7], 1

</llo_original>
